<compile_context>
chip_gen: v6e
topology: v6e:2x2x1
jax: 0.10.0
libtpu: 0.0.40
codegen_flags: <defaults>
</compile_context>

<pallas_src>
import math
import jax
import jax.numpy as jnp
from jax.experimental import pallas as pl
from jax.experimental.pallas import tpu as pltpu

DOT_DTYPE = jnp.bfloat16   # MXU operand dtype; accumulation is always f32
LN_EPS = 1e-5              # torch.nn.LayerNorm default


def _vmem_spec():
    # whole-array block resident in VMEM (all shapes here are small)
    return pl.BlockSpec(memory_space=pltpu.MemorySpace.VMEM)


# ---------------------------------------------------------------------------
# Fused Pallas kernel
# ---------------------------------------------------------------------------
def make_fused_kernel(num_steps, num_linear):
    """Fused Encode-Process-Decode forward.

    Ref order (all whole-array VMEM blocks):
      x[N,node_in], e[E,edge_in], recv_oh[E,N], send_oh[E,N], adj[N,E],
      encoder-node  (W,b)*num_linear, gamma, beta,
      encoder-edge  (W,b)*num_linear, gamma, beta,
      per processor step:
        W_i, W_j, W_e, b0, (W,b)*(num_linear-1), gamma, beta,      # edge MLP
        W_agg, W_x, b0, (W,b)*(num_linear-1), gamma, beta,         # node MLP
      decoder       (W,b)*num_linear,
      out[N,node_out]
    """
    def kernel(*refs):
        out_ref = refs[-1]
        vals = [r[...] for r in refs[:-1]]   # tiny arrays; load each ref once
        it = iter(vals)
        nxt = lambda: next(it)

        def linear(h, w, b):
            # bf16 operands, f32 accumulation, f32 bias add
            return jnp.dot(h.astype(w.dtype), w,
                           preferred_element_type=jnp.float32) + b

        def mlp(h, wbs):
            for i, (w, b) in enumerate(wbs):
                h = linear(h, w, b)
                if i < len(wbs) - 1:
                    h = jnp.maximum(h, 0.0)          # ReLU (f32), last = Identity
            return h

        def layer_norm(h, g, be):
            mu = jnp.mean(h, axis=-1, keepdims=True)
            var = jnp.mean(jnp.square(h - mu), axis=-1, keepdims=True)
            return (h - mu) * jax.lax.rsqrt(var + LN_EPS) * g + be

        def read_wb(n):
            return [(nxt(), nxt()) for _ in range(n)]

        # ---- unpack operands ----
        x_in, e_in = nxt(), nxt()
        recv_oh, send_oh, adj = nxt(), nxt(), nxt()
        dt = recv_oh.dtype

        enc_n_wb = read_wb(num_linear); enc_n_g, enc_n_b = nxt(), nxt()
        enc_e_wb = read_wb(num_linear); enc_e_g, enc_e_b = nxt(), nxt()
        steps = []
        for _ in range(num_steps):
            w_i, w_j, w_e, eb0 = nxt(), nxt(), nxt(), nxt()
            e_tail = read_wb(num_linear - 1); e_g, e_b = nxt(), nxt()
            w_agg, w_x, nb0 = nxt(), nxt(), nxt()
            n_tail = read_wb(num_linear - 1); n_g, n_b = nxt(), nxt()
            steps.append((w_i, w_j, w_e, eb0, e_tail, e_g, e_b,
                          w_agg, w_x, nb0, n_tail, n_g, n_b))
        dec_wb = read_wb(num_linear)

        # ---- Encoder ----
        x_lat = layer_norm(mlp(x_in, enc_n_wb), enc_n_g, enc_n_b)   # [N, L] f32
        e_lat = layer_norm(mlp(e_in, enc_e_wb), enc_e_g, enc_e_b)   # [E, L] f32

        # ---- Processor: InteractionNetworks with residuals (aggr='add') ----
        for (w_i, w_j, w_e, eb0, e_tail, e_g, e_b,
             w_agg, w_x, nb0, n_tail, n_g, n_b) in steps:
            # Edge MLP first layer without gather/concat:
            #   Lin0(cat[x_i, x_j, e]) == recv_oh @ (x_lat@W_i)
            #                           + send_oh @ (x_lat@W_j)
            #                           + e_lat@W_e + b0
            p_i = jnp.dot(x_lat.astype(dt), w_i, preferred_element_type=jnp.float32)
            p_j = jnp.dot(x_lat.astype(dt), w_j, preferred_element_type=jnp.float32)
            h = (jnp.dot(recv_oh, p_i.astype(dt), preferred_element_type=jnp.float32)
                 + jnp.dot(send_oh, p_j.astype(dt), preferred_element_type=jnp.float32)
                 + jnp.dot(e_lat.astype(dt), w_e, preferred_element_type=jnp.float32)
                 + eb0)                                             # [E, H]
            if e_tail:
                h = mlp(jnp.maximum(h, 0.0), e_tail)
            e_msg = layer_norm(h, e_g, e_b)                          # [E, L]

            # scatter_add over receivers as a dense one-hot matmul (MXU)
            agg = jnp.dot(adj, e_msg.astype(dt),
                          preferred_element_type=jnp.float32)        # [N, L]
            # Node MLP first layer without concat: Lin0(cat[agg, x]) split weights
            hn = (jnp.dot(agg.astype(dt), w_agg, preferred_element_type=jnp.float32)
                  + jnp.dot(x_lat.astype(dt), w_x, preferred_element_type=jnp.float32)
                  + nb0)                                             # [N, H]
            if n_tail:
                hn = mlp(jnp.maximum(hn, 0.0), n_tail)
            x_new = layer_norm(hn, n_g, n_b)                         # [N, L]

            # residual connections
            x_lat = x_new + x_lat
            # TODO(synk): a literal PyG MessagePassing.update() returns the
            # *original* e_features kwarg (so the residual would double it); we
            # keep the intended Encode-Process-Decode semantics and propagate
            # the updated per-edge messages through the residual stream.
            e_lat = e_msg + e_lat

        # ---- Decoder (no LayerNorm); only this crosses back to HBM ----
        out_ref[...] = mlp(x_lat, dec_wb).astype(out_ref.dtype)

    return kernel


# ---------------------------------------------------------------------------
# Deterministic parameter initialization (mirrors torch module __init__ shapes)
# ---------------------------------------------------------------------------
def init_linear(key, fan_in, fan_out):
    k1, k2 = jax.random.split(key)
    bound = 1.0 / math.sqrt(fan_in)
    w = jax.random.uniform(k1, (fan_in, fan_out), jnp.float32, -bound, bound)
    b = jax.random.uniform(k2, (1, fan_out), jnp.float32, -bound, bound)
    return w, b


def init_mlp(key, in_dim, hidden, num_layers, out_dim):
    sizes = [in_dim] + [hidden] * num_layers + [out_dim]
    params = []
    for i in range(len(sizes) - 1):
        key, sub = jax.random.split(key)
        w, b = init_linear(sub, sizes[i], sizes[i + 1])
        params += [w, b]
    return params


def init_layernorm(dim):
    return [jnp.ones((1, dim), jnp.float32), jnp.zeros((1, dim), jnp.float32)]


def init_model(key, node_in, node_out, edge_in, latent_dim,
               num_message_passing_steps, mlp_num_layers, mlp_hidden_dim):
    keys = jax.random.split(key, 3 + 2 * num_message_passing_steps)
    params = {
        "enc_node": init_mlp(keys[0], node_in, mlp_hidden_dim, mlp_num_layers, latent_dim),
        "enc_node_ln": init_layernorm(latent_dim),
        "enc_edge": init_mlp(keys[1], edge_in, mlp_hidden_dim, mlp_num_layers, latent_dim),
        "enc_edge_ln": init_layernorm(latent_dim),
        "dec_node": init_mlp(keys[2], latent_dim, mlp_hidden_dim, mlp_num_layers, node_out),
        "gnn": [],
    }
    for s in range(num_message_passing_steps):
        params["gnn"].append({
            "edge_mlp": init_mlp(keys[3 + 2 * s], 3 * latent_dim, mlp_hidden_dim,
                                 mlp_num_layers, latent_dim),
            "edge_ln": init_layernorm(latent_dim),
            "node_mlp": init_mlp(keys[4 + 2 * s], 2 * latent_dim, mlp_hidden_dim,
                                 mlp_num_layers, latent_dim),
            "node_ln": init_layernorm(latent_dim),
        })
    return params


# ---------------------------------------------------------------------------
# Wrapper: flatten params (cast matmul weights to bf16, pre-split first-layer
# processor weights so the kernel never gathers or concatenates) + pallas_call
# ---------------------------------------------------------------------------
def flatten_params(params, latent_dim, dot_dtype=DOT_DTYPE):
    args = []

    def add_mlp(lin):
        for i in range(0, len(lin), 2):
            args.append(lin[i].astype(dot_dtype))   # weight -> bf16
            args.append(lin[i + 1])                 # bias stays f32

    def add_tail(lin):  # layers 1.. of a processor MLP
        for i in range(2, len(lin), 2):
            args.append(lin[i].astype(dot_dtype))
            args.append(lin[i + 1])

    L = latent_dim
    add_mlp(params["enc_node"]); args.extend(params["enc_node_ln"])
    add_mlp(params["enc_edge"]); args.extend(params["enc_edge_ln"])
    for gnn in params["gnn"]:
        ew0 = gnn["edge_mlp"][0].astype(dot_dtype)            # [3L, H] = [W_i; W_j; W_e]
        args += [ew0[0:L], ew0[L:2 * L], ew0[2 * L:3 * L], gnn["edge_mlp"][1]]
        add_tail(gnn["edge_mlp"]); args.extend(gnn["edge_ln"])
        nw0 = gnn["node_mlp"][0].astype(dot_dtype)            # [2L, H] = [W_agg; W_x]
        args += [nw0[0:L], nw0[L:2 * L], gnn["node_mlp"][1]]
        add_tail(gnn["node_mlp"]); args.extend(gnn["node_ln"])
    add_mlp(params["dec_node"])
    return args


def encode_process_decode(params, x, edge_index, e_features):
    n = x.shape[0]
    latent_dim = params["enc_node_ln"][0].shape[1]
    node_out = params["dec_node"][-2].shape[1]
    num_linear = len(params["enc_node"]) // 2
    num_steps = len(params["gnn"])

    senders = edge_index[0]    # x_j (source nodes)
    receivers = edge_index[1]  # x_i (target nodes); PyG flow='source_to_target'
    node_ids = jnp.arange(n, dtype=edge_index.dtype)
    # dense one-hot gather / scatter operators (assumes indices in [0, n))
    recv_oh = (receivers[:, None] == node_ids[None, :]).astype(DOT_DTYPE)  # [E, N]
    send_oh = (senders[:, None] == node_ids[None, :]).astype(DOT_DTYPE)    # [E, N]
    adj = (node_ids[:, None] == receivers[None, :]).astype(DOT_DTYPE)      # [N, E]

    args = [x.astype(jnp.float32), e_features.astype(jnp.float32),
            recv_oh, send_oh, adj] + flatten_params(params, latent_dim)

    kernel = make_fused_kernel(num_steps, num_linear)
    # TODO(synk): at production graph sizes, row-tile N/E with a "parallel" grid
    # (engages v7x's 2nd TensorCore) and replace the dense [N,E] adjacency with
    # scalar-prefetched receiver indices to respect v7x's 64 MiB VMEM ceiling.
    return pl.pallas_call(
        kernel,
        out_shape=jax.ShapeDtypeStruct((n, node_out), jnp.float32),
        in_specs=[_vmem_spec() for _ in args],
        out_specs=_vmem_spec(),
    )(*args)


# ---------------------------------------------------------------------------
# Pure-JAX reference (spec formulation: gather / concat / scatter-add) using
# the same bf16 weights + f32 accumulation — validates the fused kernel.
# ---------------------------------------------------------------------------
def reference_forward(params, x, edge_index, e_features):
    dt = DOT_DTYPE

    def linear(h, w, b):
        return jnp.dot(h.astype(dt), w.astype(dt),
                       preferred_element_type=jnp.float32) + b

    def mlp(h, lin):
        n = len(lin) // 2
        for i in range(n):
            h = linear(h, lin[2 * i], lin[2 * i + 1])
            if i < n - 1:
                h = jnp.maximum(h, 0.0)
        return h

    def layer_norm(h, ln):
        mu = jnp.mean(h, -1, keepdims=True)
        var = jnp.mean(jnp.square(h - mu), -1, keepdims=True)
        return (h - mu) * jax.lax.rsqrt(var + LN_EPS) * ln[0] + ln[1]

    n = x.shape[0]
    senders, receivers = edge_index[0], edge_index[1]
    x_lat = layer_norm(mlp(x, params["enc_node"]), params["enc_node_ln"])
    e_lat = layer_norm(mlp(e_features, params["enc_edge"]), params["enc_edge_ln"])
    for gnn in params["gnn"]:
        x_i = jnp.take(x_lat, receivers, axis=0)
        x_j = jnp.take(x_lat, senders, axis=0)
        e_msg = layer_norm(mlp(jnp.concatenate([x_i, x_j, e_lat], -1),
                               gnn["edge_mlp"]), gnn["edge_ln"])
        agg = jnp.zeros((n, e_msg.shape[1]), e_msg.dtype).at[receivers].add(e_msg)
        x_new = layer_norm(mlp(jnp.concatenate([agg, x_lat], -1),
                               gnn["node_mlp"]), gnn["node_ln"])
        x_lat = x_new + x_lat
        e_lat = e_msg + e_lat
    return mlp(x_lat, params["dec_node"])


if __name__ == "__main__":
    # module hyper-parameters (small, consistent with RiceGrip sysid usage)
    node_in, node_out = 16, 6
    edge_in = 8
    latent_dim = 32
    num_message_passing_steps = 2
    mlp_num_layers = 2
    mlp_hidden_dim = 32

    N, E = 64, 128  # nodes, edges

    root = jax.random.PRNGKey(0)
    kp, kx, ke, kidx = jax.random.split(root, 4)

    params = init_model(kp, node_in, node_out, edge_in, latent_dim,
                        num_message_passing_steps, mlp_num_layers, mlp_hidden_dim)

    x = jax.random.normal(kx, (N, node_in), dtype=jnp.float32)
    e_features = jax.random.normal(ke, (E, edge_in), dtype=jnp.float32)
    edge_index = jax.random.randint(kidx, (2, E), 0, N, dtype=jnp.int32)

    out = jax.block_until_ready(
        jax.jit(encode_process_decode)(params, x, edge_index, e_features))

    assert out.shape == (N, node_out), out.shape
    assert bool(jnp.all(jnp.isfinite(out)))

    # loose tolerance absorbs the (mathematically equivalent) project-then-gather
    # reassociation and extra bf16 rounding of intermediates in the fused kernel,
    # while still catching any weight-ordering / lowering bug.
    ref = jax.jit(reference_forward)(params, x, edge_index, e_features)
    assert bool(jnp.allclose(out, ref, atol=1e-1, rtol=1e-1)), \
        float(jnp.max(jnp.abs(out - ref)))

    print("KERNEL_OK")
</pallas_src>

<mosaic_0001>
module attributes {stable_mosaic.version = 11 : i64} {
  func.func @kernel(%arg0: memref<64x16xf32, #tpu.memory_space<vmem>>, %arg1: memref<128x8xf32, #tpu.memory_space<vmem>>, %arg2: memref<128x64xbf16, #tpu.memory_space<vmem>>, %arg3: memref<128x64xbf16, #tpu.memory_space<vmem>>, %arg4: memref<64x128xbf16, #tpu.memory_space<vmem>>, %arg5: memref<16x32xbf16, #tpu.memory_space<vmem>>, %arg6: memref<1x32xf32, #tpu.memory_space<vmem>>, %arg7: memref<32x32xbf16, #tpu.memory_space<vmem>>, %arg8: memref<1x32xf32, #tpu.memory_space<vmem>>, %arg9: memref<32x32xbf16, #tpu.memory_space<vmem>>, %arg10: memref<1x32xf32, #tpu.memory_space<vmem>>, %arg11: memref<1x32xf32, #tpu.memory_space<vmem>>, %arg12: memref<1x32xf32, #tpu.memory_space<vmem>>, %arg13: memref<8x32xbf16, #tpu.memory_space<vmem>>, %arg14: memref<1x32xf32, #tpu.memory_space<vmem>>, %arg15: memref<32x32xbf16, #tpu.memory_space<vmem>>, %arg16: memref<1x32xf32, #tpu.memory_space<vmem>>, %arg17: memref<32x32xbf16, #tpu.memory_space<vmem>>, %arg18: memref<1x32xf32, #tpu.memory_space<vmem>>, %arg19: memref<1x32xf32, #tpu.memory_space<vmem>>, %arg20: memref<1x32xf32, #tpu.memory_space<vmem>>, %arg21: memref<32x32xbf16, #tpu.memory_space<vmem>>, %arg22: memref<32x32xbf16, #tpu.memory_space<vmem>>, %arg23: memref<32x32xbf16, #tpu.memory_space<vmem>>, %arg24: memref<1x32xf32, #tpu.memory_space<vmem>>, %arg25: memref<32x32xbf16, #tpu.memory_space<vmem>>, %arg26: memref<1x32xf32, #tpu.memory_space<vmem>>, %arg27: memref<32x32xbf16, #tpu.memory_space<vmem>>, %arg28: memref<1x32xf32, #tpu.memory_space<vmem>>, %arg29: memref<1x32xf32, #tpu.memory_space<vmem>>, %arg30: memref<1x32xf32, #tpu.memory_space<vmem>>, %arg31: memref<32x32xbf16, #tpu.memory_space<vmem>>, %arg32: memref<32x32xbf16, #tpu.memory_space<vmem>>, %arg33: memref<1x32xf32, #tpu.memory_space<vmem>>, %arg34: memref<32x32xbf16, #tpu.memory_space<vmem>>, %arg35: memref<1x32xf32, #tpu.memory_space<vmem>>, %arg36: memref<32x32xbf16, #tpu.memory_space<vmem>>, %arg37: memref<1x32xf32, #tpu.memory_space<vmem>>, %arg38: memref<1x32xf32, #tpu.memory_space<vmem>>, %arg39: memref<1x32xf32, #tpu.memory_space<vmem>>, %arg40: memref<32x32xbf16, #tpu.memory_space<vmem>>, %arg41: memref<32x32xbf16, #tpu.memory_space<vmem>>, %arg42: memref<32x32xbf16, #tpu.memory_space<vmem>>, %arg43: memref<1x32xf32, #tpu.memory_space<vmem>>, %arg44: memref<32x32xbf16, #tpu.memory_space<vmem>>, %arg45: memref<1x32xf32, #tpu.memory_space<vmem>>, %arg46: memref<32x32xbf16, #tpu.memory_space<vmem>>, %arg47: memref<1x32xf32, #tpu.memory_space<vmem>>, %arg48: memref<1x32xf32, #tpu.memory_space<vmem>>, %arg49: memref<1x32xf32, #tpu.memory_space<vmem>>, %arg50: memref<32x32xbf16, #tpu.memory_space<vmem>>, %arg51: memref<32x32xbf16, #tpu.memory_space<vmem>>, %arg52: memref<1x32xf32, #tpu.memory_space<vmem>>, %arg53: memref<32x32xbf16, #tpu.memory_space<vmem>>, %arg54: memref<1x32xf32, #tpu.memory_space<vmem>>, %arg55: memref<32x32xbf16, #tpu.memory_space<vmem>>, %arg56: memref<1x32xf32, #tpu.memory_space<vmem>>, %arg57: memref<1x32xf32, #tpu.memory_space<vmem>>, %arg58: memref<1x32xf32, #tpu.memory_space<vmem>>, %arg59: memref<32x32xbf16, #tpu.memory_space<vmem>>, %arg60: memref<1x32xf32, #tpu.memory_space<vmem>>, %arg61: memref<32x32xbf16, #tpu.memory_space<vmem>>, %arg62: memref<1x32xf32, #tpu.memory_space<vmem>>, %arg63: memref<32x6xbf16, #tpu.memory_space<vmem>>, %arg64: memref<1x6xf32, #tpu.memory_space<vmem>>, %arg65: memref<64x6xf32, #tpu.memory_space<vmem>>) attributes {dimension_semantics = [], scalar_prefetch = 0 : i64, scratch_operands = 0 : i64, tpu.core_type = #tpu.core_type<tc>} {
    %c0 = arith.constant 0 : index
    %c0_0 = arith.constant 0 : index
    %0 = vector.load %arg0[%c0, %c0_0] : memref<64x16xf32, #tpu.memory_space<vmem>>, vector<64x16xf32>
    %c0_1 = arith.constant 0 : index
    %c0_2 = arith.constant 0 : index
    %1 = vector.load %arg1[%c0_1, %c0_2] : memref<128x8xf32, #tpu.memory_space<vmem>>, vector<128x8xf32>
    %c0_3 = arith.constant 0 : index
    %c0_4 = arith.constant 0 : index
    %2 = vector.load %arg2[%c0_3, %c0_4] : memref<128x64xbf16, #tpu.memory_space<vmem>>, vector<128x64xbf16>
    %c0_5 = arith.constant 0 : index
    %c0_6 = arith.constant 0 : index
    %3 = vector.load %arg3[%c0_5, %c0_6] : memref<128x64xbf16, #tpu.memory_space<vmem>>, vector<128x64xbf16>
    %c0_7 = arith.constant 0 : index
    %c0_8 = arith.constant 0 : index
    %4 = vector.load %arg4[%c0_7, %c0_8] : memref<64x128xbf16, #tpu.memory_space<vmem>>, vector<64x128xbf16>
    %c0_9 = arith.constant 0 : index
    %c0_10 = arith.constant 0 : index
    %5 = vector.load %arg5[%c0_9, %c0_10] : memref<16x32xbf16, #tpu.memory_space<vmem>>, vector<16x32xbf16>
    %c0_11 = arith.constant 0 : index
    %c0_12 = arith.constant 0 : index
    %6 = vector.load %arg6[%c0_11, %c0_12] : memref<1x32xf32, #tpu.memory_space<vmem>>, vector<1x32xf32>
    %c0_13 = arith.constant 0 : index
    %c0_14 = arith.constant 0 : index
    %7 = vector.load %arg7[%c0_13, %c0_14] : memref<32x32xbf16, #tpu.memory_space<vmem>>, vector<32x32xbf16>
    %c0_15 = arith.constant 0 : index
    %c0_16 = arith.constant 0 : index
    %8 = vector.load %arg8[%c0_15, %c0_16] : memref<1x32xf32, #tpu.memory_space<vmem>>, vector<1x32xf32>
    %c0_17 = arith.constant 0 : index
    %c0_18 = arith.constant 0 : index
    %9 = vector.load %arg9[%c0_17, %c0_18] : memref<32x32xbf16, #tpu.memory_space<vmem>>, vector<32x32xbf16>
    %c0_19 = arith.constant 0 : index
    %c0_20 = arith.constant 0 : index
    %10 = vector.load %arg10[%c0_19, %c0_20] : memref<1x32xf32, #tpu.memory_space<vmem>>, vector<1x32xf32>
    %c0_21 = arith.constant 0 : index
    %c0_22 = arith.constant 0 : index
    %11 = vector.load %arg11[%c0_21, %c0_22] : memref<1x32xf32, #tpu.memory_space<vmem>>, vector<1x32xf32>
    %c0_23 = arith.constant 0 : index
    %c0_24 = arith.constant 0 : index
    %12 = vector.load %arg12[%c0_23, %c0_24] : memref<1x32xf32, #tpu.memory_space<vmem>>, vector<1x32xf32>
    %c0_25 = arith.constant 0 : index
    %c0_26 = arith.constant 0 : index
    %13 = vector.load %arg13[%c0_25, %c0_26] : memref<8x32xbf16, #tpu.memory_space<vmem>>, vector<8x32xbf16>
    %c0_27 = arith.constant 0 : index
    %c0_28 = arith.constant 0 : index
    %14 = vector.load %arg14[%c0_27, %c0_28] : memref<1x32xf32, #tpu.memory_space<vmem>>, vector<1x32xf32>
    %c0_29 = arith.constant 0 : index
    %c0_30 = arith.constant 0 : index
    %15 = vector.load %arg15[%c0_29, %c0_30] : memref<32x32xbf16, #tpu.memory_space<vmem>>, vector<32x32xbf16>
    %c0_31 = arith.constant 0 : index
    %c0_32 = arith.constant 0 : index
    %16 = vector.load %arg16[%c0_31, %c0_32] : memref<1x32xf32, #tpu.memory_space<vmem>>, vector<1x32xf32>
    %c0_33 = arith.constant 0 : index
    %c0_34 = arith.constant 0 : index
    %17 = vector.load %arg17[%c0_33, %c0_34] : memref<32x32xbf16, #tpu.memory_space<vmem>>, vector<32x32xbf16>
    %c0_35 = arith.constant 0 : index
    %c0_36 = arith.constant 0 : index
    %18 = vector.load %arg18[%c0_35, %c0_36] : memref<1x32xf32, #tpu.memory_space<vmem>>, vector<1x32xf32>
    %c0_37 = arith.constant 0 : index
    %c0_38 = arith.constant 0 : index
    %19 = vector.load %arg19[%c0_37, %c0_38] : memref<1x32xf32, #tpu.memory_space<vmem>>, vector<1x32xf32>
    %c0_39 = arith.constant 0 : index
    %c0_40 = arith.constant 0 : index
    %20 = vector.load %arg20[%c0_39, %c0_40] : memref<1x32xf32, #tpu.memory_space<vmem>>, vector<1x32xf32>
    %c0_41 = arith.constant 0 : index
    %c0_42 = arith.constant 0 : index
    %21 = vector.load %arg21[%c0_41, %c0_42] : memref<32x32xbf16, #tpu.memory_space<vmem>>, vector<32x32xbf16>
    %c0_43 = arith.constant 0 : index
    %c0_44 = arith.constant 0 : index
    %22 = vector.load %arg22[%c0_43, %c0_44] : memref<32x32xbf16, #tpu.memory_space<vmem>>, vector<32x32xbf16>
    %c0_45 = arith.constant 0 : index
    %c0_46 = arith.constant 0 : index
    %23 = vector.load %arg23[%c0_45, %c0_46] : memref<32x32xbf16, #tpu.memory_space<vmem>>, vector<32x32xbf16>
    %c0_47 = arith.constant 0 : index
    %c0_48 = arith.constant 0 : index
    %24 = vector.load %arg24[%c0_47, %c0_48] : memref<1x32xf32, #tpu.memory_space<vmem>>, vector<1x32xf32>
    %c0_49 = arith.constant 0 : index
    %c0_50 = arith.constant 0 : index
    %25 = vector.load %arg25[%c0_49, %c0_50] : memref<32x32xbf16, #tpu.memory_space<vmem>>, vector<32x32xbf16>
    %c0_51 = arith.constant 0 : index
    %c0_52 = arith.constant 0 : index
    %26 = vector.load %arg26[%c0_51, %c0_52] : memref<1x32xf32, #tpu.memory_space<vmem>>, vector<1x32xf32>
    %c0_53 = arith.constant 0 : index
    %c0_54 = arith.constant 0 : index
    %27 = vector.load %arg27[%c0_53, %c0_54] : memref<32x32xbf16, #tpu.memory_space<vmem>>, vector<32x32xbf16>
    %c0_55 = arith.constant 0 : index
    %c0_56 = arith.constant 0 : index
    %28 = vector.load %arg28[%c0_55, %c0_56] : memref<1x32xf32, #tpu.memory_space<vmem>>, vector<1x32xf32>
    %c0_57 = arith.constant 0 : index
    %c0_58 = arith.constant 0 : index
    %29 = vector.load %arg29[%c0_57, %c0_58] : memref<1x32xf32, #tpu.memory_space<vmem>>, vector<1x32xf32>
    %c0_59 = arith.constant 0 : index
    %c0_60 = arith.constant 0 : index
    %30 = vector.load %arg30[%c0_59, %c0_60] : memref<1x32xf32, #tpu.memory_space<vmem>>, vector<1x32xf32>
    %c0_61 = arith.constant 0 : index
    %c0_62 = arith.constant 0 : index
    %31 = vector.load %arg31[%c0_61, %c0_62] : memref<32x32xbf16, #tpu.memory_space<vmem>>, vector<32x32xbf16>
    %c0_63 = arith.constant 0 : index
    %c0_64 = arith.constant 0 : index
    %32 = vector.load %arg32[%c0_63, %c0_64] : memref<32x32xbf16, #tpu.memory_space<vmem>>, vector<32x32xbf16>
    %c0_65 = arith.constant 0 : index
    %c0_66 = arith.constant 0 : index
    %33 = vector.load %arg33[%c0_65, %c0_66] : memref<1x32xf32, #tpu.memory_space<vmem>>, vector<1x32xf32>
    %c0_67 = arith.constant 0 : index
    %c0_68 = arith.constant 0 : index
    %34 = vector.load %arg34[%c0_67, %c0_68] : memref<32x32xbf16, #tpu.memory_space<vmem>>, vector<32x32xbf16>
    %c0_69 = arith.constant 0 : index
    %c0_70 = arith.constant 0 : index
    %35 = vector.load %arg35[%c0_69, %c0_70] : memref<1x32xf32, #tpu.memory_space<vmem>>, vector<1x32xf32>
    %c0_71 = arith.constant 0 : index
    %c0_72 = arith.constant 0 : index
    %36 = vector.load %arg36[%c0_71, %c0_72] : memref<32x32xbf16, #tpu.memory_space<vmem>>, vector<32x32xbf16>
    %c0_73 = arith.constant 0 : index
    %c0_74 = arith.constant 0 : index
    %37 = vector.load %arg37[%c0_73, %c0_74] : memref<1x32xf32, #tpu.memory_space<vmem>>, vector<1x32xf32>
    %c0_75 = arith.constant 0 : index
    %c0_76 = arith.constant 0 : index
    %38 = vector.load %arg38[%c0_75, %c0_76] : memref<1x32xf32, #tpu.memory_space<vmem>>, vector<1x32xf32>
    %c0_77 = arith.constant 0 : index
    %c0_78 = arith.constant 0 : index
    %39 = vector.load %arg39[%c0_77, %c0_78] : memref<1x32xf32, #tpu.memory_space<vmem>>, vector<1x32xf32>
    %c0_79 = arith.constant 0 : index
    %c0_80 = arith.constant 0 : index
    %40 = vector.load %arg40[%c0_79, %c0_80] : memref<32x32xbf16, #tpu.memory_space<vmem>>, vector<32x32xbf16>
    %c0_81 = arith.constant 0 : index
    %c0_82 = arith.constant 0 : index
    %41 = vector.load %arg41[%c0_81, %c0_82] : memref<32x32xbf16, #tpu.memory_space<vmem>>, vector<32x32xbf16>
    %c0_83 = arith.constant 0 : index
    %c0_84 = arith.constant 0 : index
    %42 = vector.load %arg42[%c0_83, %c0_84] : memref<32x32xbf16, #tpu.memory_space<vmem>>, vector<32x32xbf16>
    %c0_85 = arith.constant 0 : index
    %c0_86 = arith.constant 0 : index
    %43 = vector.load %arg43[%c0_85, %c0_86] : memref<1x32xf32, #tpu.memory_space<vmem>>, vector<1x32xf32>
    %c0_87 = arith.constant 0 : index
    %c0_88 = arith.constant 0 : index
    %44 = vector.load %arg44[%c0_87, %c0_88] : memref<32x32xbf16, #tpu.memory_space<vmem>>, vector<32x32xbf16>
    %c0_89 = arith.constant 0 : index
    %c0_90 = arith.constant 0 : index
    %45 = vector.load %arg45[%c0_89, %c0_90] : memref<1x32xf32, #tpu.memory_space<vmem>>, vector<1x32xf32>
    %c0_91 = arith.constant 0 : index
    %c0_92 = arith.constant 0 : index
    %46 = vector.load %arg46[%c0_91, %c0_92] : memref<32x32xbf16, #tpu.memory_space<vmem>>, vector<32x32xbf16>
    %c0_93 = arith.constant 0 : index
    %c0_94 = arith.constant 0 : index
    %47 = vector.load %arg47[%c0_93, %c0_94] : memref<1x32xf32, #tpu.memory_space<vmem>>, vector<1x32xf32>
    %c0_95 = arith.constant 0 : index
    %c0_96 = arith.constant 0 : index
    %48 = vector.load %arg48[%c0_95, %c0_96] : memref<1x32xf32, #tpu.memory_space<vmem>>, vector<1x32xf32>
    %c0_97 = arith.constant 0 : index
    %c0_98 = arith.constant 0 : index
    %49 = vector.load %arg49[%c0_97, %c0_98] : memref<1x32xf32, #tpu.memory_space<vmem>>, vector<1x32xf32>
    %c0_99 = arith.constant 0 : index
    %c0_100 = arith.constant 0 : index
    %50 = vector.load %arg50[%c0_99, %c0_100] : memref<32x32xbf16, #tpu.memory_space<vmem>>, vector<32x32xbf16>
    %c0_101 = arith.constant 0 : index
    %c0_102 = arith.constant 0 : index
    %51 = vector.load %arg51[%c0_101, %c0_102] : memref<32x32xbf16, #tpu.memory_space<vmem>>, vector<32x32xbf16>
    %c0_103 = arith.constant 0 : index
    %c0_104 = arith.constant 0 : index
    %52 = vector.load %arg52[%c0_103, %c0_104] : memref<1x32xf32, #tpu.memory_space<vmem>>, vector<1x32xf32>
    %c0_105 = arith.constant 0 : index
    %c0_106 = arith.constant 0 : index
    %53 = vector.load %arg53[%c0_105, %c0_106] : memref<32x32xbf16, #tpu.memory_space<vmem>>, vector<32x32xbf16>
    %c0_107 = arith.constant 0 : index
    %c0_108 = arith.constant 0 : index
    %54 = vector.load %arg54[%c0_107, %c0_108] : memref<1x32xf32, #tpu.memory_space<vmem>>, vector<1x32xf32>
    %c0_109 = arith.constant 0 : index
    %c0_110 = arith.constant 0 : index
    %55 = vector.load %arg55[%c0_109, %c0_110] : memref<32x32xbf16, #tpu.memory_space<vmem>>, vector<32x32xbf16>
    %c0_111 = arith.constant 0 : index
    %c0_112 = arith.constant 0 : index
    %56 = vector.load %arg56[%c0_111, %c0_112] : memref<1x32xf32, #tpu.memory_space<vmem>>, vector<1x32xf32>
    %c0_113 = arith.constant 0 : index
    %c0_114 = arith.constant 0 : index
    %57 = vector.load %arg57[%c0_113, %c0_114] : memref<1x32xf32, #tpu.memory_space<vmem>>, vector<1x32xf32>
    %c0_115 = arith.constant 0 : index
    %c0_116 = arith.constant 0 : index
    %58 = vector.load %arg58[%c0_115, %c0_116] : memref<1x32xf32, #tpu.memory_space<vmem>>, vector<1x32xf32>
    %c0_117 = arith.constant 0 : index
    %c0_118 = arith.constant 0 : index
    %59 = vector.load %arg59[%c0_117, %c0_118] : memref<32x32xbf16, #tpu.memory_space<vmem>>, vector<32x32xbf16>
    %c0_119 = arith.constant 0 : index
    %c0_120 = arith.constant 0 : index
    %60 = vector.load %arg60[%c0_119, %c0_120] : memref<1x32xf32, #tpu.memory_space<vmem>>, vector<1x32xf32>
    %c0_121 = arith.constant 0 : index
    %c0_122 = arith.constant 0 : index
    %61 = vector.load %arg61[%c0_121, %c0_122] : memref<32x32xbf16, #tpu.memory_space<vmem>>, vector<32x32xbf16>
    %c0_123 = arith.constant 0 : index
    %c0_124 = arith.constant 0 : index
    %62 = vector.load %arg62[%c0_123, %c0_124] : memref<1x32xf32, #tpu.memory_space<vmem>>, vector<1x32xf32>
    %c0_125 = arith.constant 0 : index
    %c0_126 = arith.constant 0 : index
    %63 = vector.load %arg63[%c0_125, %c0_126] : memref<32x6xbf16, #tpu.memory_space<vmem>>, vector<32x6xbf16>
    %c0_127 = arith.constant 0 : index
    %c0_128 = arith.constant 0 : index
    %64 = vector.load %arg64[%c0_127, %c0_128] : memref<1x6xf32, #tpu.memory_space<vmem>>, vector<1x6xf32>
    %65 = arith.truncf %0 : vector<64x16xf32> to vector<64x16xbf16>
    %cst = arith.constant dense<0.000000e+00> : vector<64x32xf32>
    %66 = tpu.matmul %65, %5, %cst {dimension_numbers = #tpu.dot_dimension_numbers<[1], [0], [0], [1], [0, 0, 1, 1], [], []>} : vector<64x16xbf16>, vector<16x32xbf16>, vector<64x32xf32> -> vector<64x32xf32>
    %67 = vector.broadcast %6 : vector<1x32xf32> to vector<64x32xf32>
    %68 = arith.addf %66, %67 : vector<64x32xf32>
    %cst_129 = arith.constant 0.000000e+00 : f32
    %69 = vector.broadcast %cst_129 : f32 to vector<64x32xf32>
    %70 = arith.maximumf %68, %69 : vector<64x32xf32>
    %71 = arith.truncf %70 : vector<64x32xf32> to vector<64x32xbf16>
    %cst_130 = arith.constant dense<0.000000e+00> : vector<64x32xf32>
    %72 = tpu.matmul %71, %7, %cst_130 {dimension_numbers = #tpu.dot_dimension_numbers<[1], [0], [0], [1], [0, 0, 1, 1], [], []>} : vector<64x32xbf16>, vector<32x32xbf16>, vector<64x32xf32> -> vector<64x32xf32>
    %73 = vector.broadcast %8 : vector<1x32xf32> to vector<64x32xf32>
    %74 = arith.addf %72, %73 : vector<64x32xf32>
    %cst_131 = arith.constant 0.000000e+00 : f32
    %75 = vector.broadcast %cst_131 : f32 to vector<64x32xf32>
    %76 = arith.maximumf %74, %75 : vector<64x32xf32>
    %77 = arith.truncf %76 : vector<64x32xf32> to vector<64x32xbf16>
    %cst_132 = arith.constant dense<0.000000e+00> : vector<64x32xf32>
    %78 = tpu.matmul %77, %9, %cst_132 {dimension_numbers = #tpu.dot_dimension_numbers<[1], [0], [0], [1], [0, 0, 1, 1], [], []>} : vector<64x32xbf16>, vector<32x32xbf16>, vector<64x32xf32> -> vector<64x32xf32>
    %79 = vector.broadcast %10 : vector<1x32xf32> to vector<64x32xf32>
    %80 = arith.addf %78, %79 : vector<64x32xf32>
    %cst_133 = arith.constant dense<0.000000e+00> : vector<64xf32>
    %81 = vector.multi_reduction <add>, %80, %cst_133 [1] : vector<64x32xf32> to vector<64xf32>
    %82 = vector.shape_cast %81 : vector<64xf32> to vector<64x1xf32>
    %cst_134 = arith.constant 3.200000e+01 : f32
    %83 = vector.broadcast %cst_134 : f32 to vector<64x1xf32>
    %84 = arith.divf %82, %83 : vector<64x1xf32>
    %85 = vector.broadcast %84 : vector<64x1xf32> to vector<64x32xf32>
    %86 = arith.subf %80, %85 : vector<64x32xf32>
    %87 = arith.mulf %86, %86 : vector<64x32xf32>
    %cst_135 = arith.constant dense<0.000000e+00> : vector<64xf32>
    %88 = vector.multi_reduction <add>, %87, %cst_135 [1] : vector<64x32xf32> to vector<64xf32>
    %89 = vector.shape_cast %88 : vector<64xf32> to vector<64x1xf32>
    %cst_136 = arith.constant 3.200000e+01 : f32
    %90 = vector.broadcast %cst_136 : f32 to vector<64x1xf32>
    %91 = arith.divf %89, %90 : vector<64x1xf32>
    %92 = vector.broadcast %84 : vector<64x1xf32> to vector<64x32xf32>
    %93 = arith.subf %80, %92 : vector<64x32xf32>
    %cst_137 = arith.constant 9.99999974E-6 : f32
    %94 = vector.broadcast %cst_137 : f32 to vector<64x1xf32>
    %95 = arith.addf %91, %94 : vector<64x1xf32>
    %96 = math.rsqrt %95 : vector<64x1xf32>
    %97 = vector.broadcast %96 : vector<64x1xf32> to vector<64x32xf32>
    %98 = arith.mulf %93, %97 : vector<64x32xf32>
    %99 = vector.broadcast %11 : vector<1x32xf32> to vector<64x32xf32>
    %100 = arith.mulf %98, %99 : vector<64x32xf32>
    %101 = vector.broadcast %12 : vector<1x32xf32> to vector<64x32xf32>
    %102 = arith.addf %100, %101 : vector<64x32xf32>
    %103 = arith.truncf %1 : vector<128x8xf32> to vector<128x8xbf16>
    %cst_138 = arith.constant dense<0.000000e+00> : vector<128x32xf32>
    %104 = tpu.matmul %103, %13, %cst_138 {dimension_numbers = #tpu.dot_dimension_numbers<[1], [0], [0], [1], [0, 0, 1, 1], [], []>} : vector<128x8xbf16>, vector<8x32xbf16>, vector<128x32xf32> -> vector<128x32xf32>
    %105 = vector.broadcast %14 : vector<1x32xf32> to vector<128x32xf32>
    %106 = arith.addf %104, %105 : vector<128x32xf32>
    %cst_139 = arith.constant 0.000000e+00 : f32
    %107 = vector.broadcast %cst_139 : f32 to vector<128x32xf32>
    %108 = arith.maximumf %106, %107 : vector<128x32xf32>
    %109 = arith.truncf %108 : vector<128x32xf32> to vector<128x32xbf16>
    %cst_140 = arith.constant dense<0.000000e+00> : vector<128x32xf32>
    %110 = tpu.matmul %109, %15, %cst_140 {dimension_numbers = #tpu.dot_dimension_numbers<[1], [0], [0], [1], [0, 0, 1, 1], [], []>} : vector<128x32xbf16>, vector<32x32xbf16>, vector<128x32xf32> -> vector<128x32xf32>
    %111 = vector.broadcast %16 : vector<1x32xf32> to vector<128x32xf32>
    %112 = arith.addf %110, %111 : vector<128x32xf32>
    %cst_141 = arith.constant 0.000000e+00 : f32
    %113 = vector.broadcast %cst_141 : f32 to vector<128x32xf32>
    %114 = arith.maximumf %112, %113 : vector<128x32xf32>
    %115 = arith.truncf %114 : vector<128x32xf32> to vector<128x32xbf16>
    %cst_142 = arith.constant dense<0.000000e+00> : vector<128x32xf32>
    %116 = tpu.matmul %115, %17, %cst_142 {dimension_numbers = #tpu.dot_dimension_numbers<[1], [0], [0], [1], [0, 0, 1, 1], [], []>} : vector<128x32xbf16>, vector<32x32xbf16>, vector<128x32xf32> -> vector<128x32xf32>
    %117 = vector.broadcast %18 : vector<1x32xf32> to vector<128x32xf32>
    %118 = arith.addf %116, %117 : vector<128x32xf32>
    %cst_143 = arith.constant dense<0.000000e+00> : vector<128xf32>
    %119 = vector.multi_reduction <add>, %118, %cst_143 [1] : vector<128x32xf32> to vector<128xf32>
    %120 = vector.shape_cast %119 : vector<128xf32> to vector<128x1xf32>
    %cst_144 = arith.constant 3.200000e+01 : f32
    %121 = vector.broadcast %cst_144 : f32 to vector<128x1xf32>
    %122 = arith.divf %120, %121 : vector<128x1xf32>
    %123 = vector.broadcast %122 : vector<128x1xf32> to vector<128x32xf32>
    %124 = arith.subf %118, %123 : vector<128x32xf32>
    %125 = arith.mulf %124, %124 : vector<128x32xf32>
    %cst_145 = arith.constant dense<0.000000e+00> : vector<128xf32>
    %126 = vector.multi_reduction <add>, %125, %cst_145 [1] : vector<128x32xf32> to vector<128xf32>
    %127 = vector.shape_cast %126 : vector<128xf32> to vector<128x1xf32>
    %cst_146 = arith.constant 3.200000e+01 : f32
    %128 = vector.broadcast %cst_146 : f32 to vector<128x1xf32>
    %129 = arith.divf %127, %128 : vector<128x1xf32>
    %130 = vector.broadcast %122 : vector<128x1xf32> to vector<128x32xf32>
    %131 = arith.subf %118, %130 : vector<128x32xf32>
    %cst_147 = arith.constant 9.99999974E-6 : f32
    %132 = vector.broadcast %cst_147 : f32 to vector<128x1xf32>
    %133 = arith.addf %129, %132 : vector<128x1xf32>
    %134 = math.rsqrt %133 : vector<128x1xf32>
    %135 = vector.broadcast %134 : vector<128x1xf32> to vector<128x32xf32>
    %136 = arith.mulf %131, %135 : vector<128x32xf32>
    %137 = vector.broadcast %19 : vector<1x32xf32> to vector<128x32xf32>
    %138 = arith.mulf %136, %137 : vector<128x32xf32>
    %139 = vector.broadcast %20 : vector<1x32xf32> to vector<128x32xf32>
    %140 = arith.addf %138, %139 : vector<128x32xf32>
    %141 = arith.truncf %102 : vector<64x32xf32> to vector<64x32xbf16>
    %cst_148 = arith.constant dense<0.000000e+00> : vector<64x32xf32>
    %142 = tpu.matmul %141, %21, %cst_148 {dimension_numbers = #tpu.dot_dimension_numbers<[1], [0], [0], [1], [0, 0, 1, 1], [], []>} : vector<64x32xbf16>, vector<32x32xbf16>, vector<64x32xf32> -> vector<64x32xf32>
    %143 = arith.truncf %102 : vector<64x32xf32> to vector<64x32xbf16>
    %cst_149 = arith.constant dense<0.000000e+00> : vector<64x32xf32>
    %144 = tpu.matmul %143, %22, %cst_149 {dimension_numbers = #tpu.dot_dimension_numbers<[1], [0], [0], [1], [0, 0, 1, 1], [], []>} : vector<64x32xbf16>, vector<32x32xbf16>, vector<64x32xf32> -> vector<64x32xf32>
    %145 = arith.truncf %142 : vector<64x32xf32> to vector<64x32xbf16>
    %cst_150 = arith.constant dense<0.000000e+00> : vector<128x32xf32>
    %146 = tpu.matmul %2, %145, %cst_150 {dimension_numbers = #tpu.dot_dimension_numbers<[1], [0], [0], [1], [0, 0, 1, 1], [], []>} : vector<128x64xbf16>, vector<64x32xbf16>, vector<128x32xf32> -> vector<128x32xf32>
    %147 = arith.truncf %144 : vector<64x32xf32> to vector<64x32xbf16>
    %cst_151 = arith.constant dense<0.000000e+00> : vector<128x32xf32>
    %148 = tpu.matmul %3, %147, %cst_151 {dimension_numbers = #tpu.dot_dimension_numbers<[1], [0], [0], [1], [0, 0, 1, 1], [], []>} : vector<128x64xbf16>, vector<64x32xbf16>, vector<128x32xf32> -> vector<128x32xf32>
    %149 = arith.addf %146, %148 : vector<128x32xf32>
    %150 = arith.truncf %140 : vector<128x32xf32> to vector<128x32xbf16>
    %cst_152 = arith.constant dense<0.000000e+00> : vector<128x32xf32>
    %151 = tpu.matmul %150, %23, %cst_152 {dimension_numbers = #tpu.dot_dimension_numbers<[1], [0], [0], [1], [0, 0, 1, 1], [], []>} : vector<128x32xbf16>, vector<32x32xbf16>, vector<128x32xf32> -> vector<128x32xf32>
    %152 = arith.addf %149, %151 : vector<128x32xf32>
    %153 = vector.broadcast %24 : vector<1x32xf32> to vector<128x32xf32>
    %154 = arith.addf %152, %153 : vector<128x32xf32>
    %cst_153 = arith.constant 0.000000e+00 : f32
    %155 = vector.broadcast %cst_153 : f32 to vector<128x32xf32>
    %156 = arith.maximumf %154, %155 : vector<128x32xf32>
    %157 = arith.truncf %156 : vector<128x32xf32> to vector<128x32xbf16>
    %cst_154 = arith.constant dense<0.000000e+00> : vector<128x32xf32>
    %158 = tpu.matmul %157, %25, %cst_154 {dimension_numbers = #tpu.dot_dimension_numbers<[1], [0], [0], [1], [0, 0, 1, 1], [], []>} : vector<128x32xbf16>, vector<32x32xbf16>, vector<128x32xf32> -> vector<128x32xf32>
    %159 = vector.broadcast %26 : vector<1x32xf32> to vector<128x32xf32>
    %160 = arith.addf %158, %159 : vector<128x32xf32>
    %cst_155 = arith.constant 0.000000e+00 : f32
    %161 = vector.broadcast %cst_155 : f32 to vector<128x32xf32>
    %162 = arith.maximumf %160, %161 : vector<128x32xf32>
    %163 = arith.truncf %162 : vector<128x32xf32> to vector<128x32xbf16>
    %cst_156 = arith.constant dense<0.000000e+00> : vector<128x32xf32>
    %164 = tpu.matmul %163, %27, %cst_156 {dimension_numbers = #tpu.dot_dimension_numbers<[1], [0], [0], [1], [0, 0, 1, 1], [], []>} : vector<128x32xbf16>, vector<32x32xbf16>, vector<128x32xf32> -> vector<128x32xf32>
    %165 = vector.broadcast %28 : vector<1x32xf32> to vector<128x32xf32>
    %166 = arith.addf %164, %165 : vector<128x32xf32>
    %cst_157 = arith.constant dense<0.000000e+00> : vector<128xf32>
    %167 = vector.multi_reduction <add>, %166, %cst_157 [1] : vector<128x32xf32> to vector<128xf32>
    %168 = vector.shape_cast %167 : vector<128xf32> to vector<128x1xf32>
    %cst_158 = arith.constant 3.200000e+01 : f32
    %169 = vector.broadcast %cst_158 : f32 to vector<128x1xf32>
    %170 = arith.divf %168, %169 : vector<128x1xf32>
    %171 = vector.broadcast %170 : vector<128x1xf32> to vector<128x32xf32>
    %172 = arith.subf %166, %171 : vector<128x32xf32>
    %173 = arith.mulf %172, %172 : vector<128x32xf32>
    %cst_159 = arith.constant dense<0.000000e+00> : vector<128xf32>
    %174 = vector.multi_reduction <add>, %173, %cst_159 [1] : vector<128x32xf32> to vector<128xf32>
    %175 = vector.shape_cast %174 : vector<128xf32> to vector<128x1xf32>
    %cst_160 = arith.constant 3.200000e+01 : f32
    %176 = vector.broadcast %cst_160 : f32 to vector<128x1xf32>
    %177 = arith.divf %175, %176 : vector<128x1xf32>
    %178 = vector.broadcast %170 : vector<128x1xf32> to vector<128x32xf32>
    %179 = arith.subf %166, %178 : vector<128x32xf32>
    %cst_161 = arith.constant 9.99999974E-6 : f32
    %180 = vector.broadcast %cst_161 : f32 to vector<128x1xf32>
    %181 = arith.addf %177, %180 : vector<128x1xf32>
    %182 = math.rsqrt %181 : vector<128x1xf32>
    %183 = vector.broadcast %182 : vector<128x1xf32> to vector<128x32xf32>
    %184 = arith.mulf %179, %183 : vector<128x32xf32>
    %185 = vector.broadcast %29 : vector<1x32xf32> to vector<128x32xf32>
    %186 = arith.mulf %184, %185 : vector<128x32xf32>
    %187 = vector.broadcast %30 : vector<1x32xf32> to vector<128x32xf32>
    %188 = arith.addf %186, %187 : vector<128x32xf32>
    %189 = arith.truncf %188 : vector<128x32xf32> to vector<128x32xbf16>
    %cst_162 = arith.constant dense<0.000000e+00> : vector<64x32xf32>
    %190 = tpu.matmul %4, %189, %cst_162 {dimension_numbers = #tpu.dot_dimension_numbers<[1], [0], [0], [1], [0, 0, 1, 1], [], []>} : vector<64x128xbf16>, vector<128x32xbf16>, vector<64x32xf32> -> vector<64x32xf32>
    %191 = arith.truncf %190 : vector<64x32xf32> to vector<64x32xbf16>
    %cst_163 = arith.constant dense<0.000000e+00> : vector<64x32xf32>
    %192 = tpu.matmul %191, %31, %cst_163 {dimension_numbers = #tpu.dot_dimension_numbers<[1], [0], [0], [1], [0, 0, 1, 1], [], []>} : vector<64x32xbf16>, vector<32x32xbf16>, vector<64x32xf32> -> vector<64x32xf32>
    %193 = arith.truncf %102 : vector<64x32xf32> to vector<64x32xbf16>
    %cst_164 = arith.constant dense<0.000000e+00> : vector<64x32xf32>
    %194 = tpu.matmul %193, %32, %cst_164 {dimension_numbers = #tpu.dot_dimension_numbers<[1], [0], [0], [1], [0, 0, 1, 1], [], []>} : vector<64x32xbf16>, vector<32x32xbf16>, vector<64x32xf32> -> vector<64x32xf32>
    %195 = arith.addf %192, %194 : vector<64x32xf32>
    %196 = vector.broadcast %33 : vector<1x32xf32> to vector<64x32xf32>
    %197 = arith.addf %195, %196 : vector<64x32xf32>
    %cst_165 = arith.constant 0.000000e+00 : f32
    %198 = vector.broadcast %cst_165 : f32 to vector<64x32xf32>
    %199 = arith.maximumf %197, %198 : vector<64x32xf32>
    %200 = arith.truncf %199 : vector<64x32xf32> to vector<64x32xbf16>
    %cst_166 = arith.constant dense<0.000000e+00> : vector<64x32xf32>
    %201 = tpu.matmul %200, %34, %cst_166 {dimension_numbers = #tpu.dot_dimension_numbers<[1], [0], [0], [1], [0, 0, 1, 1], [], []>} : vector<64x32xbf16>, vector<32x32xbf16>, vector<64x32xf32> -> vector<64x32xf32>
    %202 = vector.broadcast %35 : vector<1x32xf32> to vector<64x32xf32>
    %203 = arith.addf %201, %202 : vector<64x32xf32>
    %cst_167 = arith.constant 0.000000e+00 : f32
    %204 = vector.broadcast %cst_167 : f32 to vector<64x32xf32>
    %205 = arith.maximumf %203, %204 : vector<64x32xf32>
    %206 = arith.truncf %205 : vector<64x32xf32> to vector<64x32xbf16>
    %cst_168 = arith.constant dense<0.000000e+00> : vector<64x32xf32>
    %207 = tpu.matmul %206, %36, %cst_168 {dimension_numbers = #tpu.dot_dimension_numbers<[1], [0], [0], [1], [0, 0, 1, 1], [], []>} : vector<64x32xbf16>, vector<32x32xbf16>, vector<64x32xf32> -> vector<64x32xf32>
    %208 = vector.broadcast %37 : vector<1x32xf32> to vector<64x32xf32>
    %209 = arith.addf %207, %208 : vector<64x32xf32>
    %cst_169 = arith.constant dense<0.000000e+00> : vector<64xf32>
    %210 = vector.multi_reduction <add>, %209, %cst_169 [1] : vector<64x32xf32> to vector<64xf32>
    %211 = vector.shape_cast %210 : vector<64xf32> to vector<64x1xf32>
    %cst_170 = arith.constant 3.200000e+01 : f32
    %212 = vector.broadcast %cst_170 : f32 to vector<64x1xf32>
    %213 = arith.divf %211, %212 : vector<64x1xf32>
    %214 = vector.broadcast %213 : vector<64x1xf32> to vector<64x32xf32>
    %215 = arith.subf %209, %214 : vector<64x32xf32>
    %216 = arith.mulf %215, %215 : vector<64x32xf32>
    %cst_171 = arith.constant dense<0.000000e+00> : vector<64xf32>
    %217 = vector.multi_reduction <add>, %216, %cst_171 [1] : vector<64x32xf32> to vector<64xf32>
    %218 = vector.shape_cast %217 : vector<64xf32> to vector<64x1xf32>
    %cst_172 = arith.constant 3.200000e+01 : f32
    %219 = vector.broadcast %cst_172 : f32 to vector<64x1xf32>
    %220 = arith.divf %218, %219 : vector<64x1xf32>
    %221 = vector.broadcast %213 : vector<64x1xf32> to vector<64x32xf32>
    %222 = arith.subf %209, %221 : vector<64x32xf32>
    %cst_173 = arith.constant 9.99999974E-6 : f32
    %223 = vector.broadcast %cst_173 : f32 to vector<64x1xf32>
    %224 = arith.addf %220, %223 : vector<64x1xf32>
    %225 = math.rsqrt %224 : vector<64x1xf32>
    %226 = vector.broadcast %225 : vector<64x1xf32> to vector<64x32xf32>
    %227 = arith.mulf %222, %226 : vector<64x32xf32>
    %228 = vector.broadcast %38 : vector<1x32xf32> to vector<64x32xf32>
    %229 = arith.mulf %227, %228 : vector<64x32xf32>
    %230 = vector.broadcast %39 : vector<1x32xf32> to vector<64x32xf32>
    %231 = arith.addf %229, %230 : vector<64x32xf32>
    %232 = arith.addf %231, %102 : vector<64x32xf32>
    %233 = arith.addf %188, %140 : vector<128x32xf32>
    %234 = arith.truncf %232 : vector<64x32xf32> to vector<64x32xbf16>
    %cst_174 = arith.constant dense<0.000000e+00> : vector<64x32xf32>
    %235 = tpu.matmul %234, %40, %cst_174 {dimension_numbers = #tpu.dot_dimension_numbers<[1], [0], [0], [1], [0, 0, 1, 1], [], []>} : vector<64x32xbf16>, vector<32x32xbf16>, vector<64x32xf32> -> vector<64x32xf32>
    %236 = arith.truncf %232 : vector<64x32xf32> to vector<64x32xbf16>
    %cst_175 = arith.constant dense<0.000000e+00> : vector<64x32xf32>
    %237 = tpu.matmul %236, %41, %cst_175 {dimension_numbers = #tpu.dot_dimension_numbers<[1], [0], [0], [1], [0, 0, 1, 1], [], []>} : vector<64x32xbf16>, vector<32x32xbf16>, vector<64x32xf32> -> vector<64x32xf32>
    %238 = arith.truncf %235 : vector<64x32xf32> to vector<64x32xbf16>
    %cst_176 = arith.constant dense<0.000000e+00> : vector<128x32xf32>
    %239 = tpu.matmul %2, %238, %cst_176 {dimension_numbers = #tpu.dot_dimension_numbers<[1], [0], [0], [1], [0, 0, 1, 1], [], []>} : vector<128x64xbf16>, vector<64x32xbf16>, vector<128x32xf32> -> vector<128x32xf32>
    %240 = arith.truncf %237 : vector<64x32xf32> to vector<64x32xbf16>
    %cst_177 = arith.constant dense<0.000000e+00> : vector<128x32xf32>
    %241 = tpu.matmul %3, %240, %cst_177 {dimension_numbers = #tpu.dot_dimension_numbers<[1], [0], [0], [1], [0, 0, 1, 1], [], []>} : vector<128x64xbf16>, vector<64x32xbf16>, vector<128x32xf32> -> vector<128x32xf32>
    %242 = arith.addf %239, %241 : vector<128x32xf32>
    %243 = arith.truncf %233 : vector<128x32xf32> to vector<128x32xbf16>
    %cst_178 = arith.constant dense<0.000000e+00> : vector<128x32xf32>
    %244 = tpu.matmul %243, %42, %cst_178 {dimension_numbers = #tpu.dot_dimension_numbers<[1], [0], [0], [1], [0, 0, 1, 1], [], []>} : vector<128x32xbf16>, vector<32x32xbf16>, vector<128x32xf32> -> vector<128x32xf32>
    %245 = arith.addf %242, %244 : vector<128x32xf32>
    %246 = vector.broadcast %43 : vector<1x32xf32> to vector<128x32xf32>
    %247 = arith.addf %245, %246 : vector<128x32xf32>
    %cst_179 = arith.constant 0.000000e+00 : f32
    %248 = vector.broadcast %cst_179 : f32 to vector<128x32xf32>
    %249 = arith.maximumf %247, %248 : vector<128x32xf32>
    %250 = arith.truncf %249 : vector<128x32xf32> to vector<128x32xbf16>
    %cst_180 = arith.constant dense<0.000000e+00> : vector<128x32xf32>
    %251 = tpu.matmul %250, %44, %cst_180 {dimension_numbers = #tpu.dot_dimension_numbers<[1], [0], [0], [1], [0, 0, 1, 1], [], []>} : vector<128x32xbf16>, vector<32x32xbf16>, vector<128x32xf32> -> vector<128x32xf32>
    %252 = vector.broadcast %45 : vector<1x32xf32> to vector<128x32xf32>
    %253 = arith.addf %251, %252 : vector<128x32xf32>
    %cst_181 = arith.constant 0.000000e+00 : f32
    %254 = vector.broadcast %cst_181 : f32 to vector<128x32xf32>
    %255 = arith.maximumf %253, %254 : vector<128x32xf32>
    %256 = arith.truncf %255 : vector<128x32xf32> to vector<128x32xbf16>
    %cst_182 = arith.constant dense<0.000000e+00> : vector<128x32xf32>
    %257 = tpu.matmul %256, %46, %cst_182 {dimension_numbers = #tpu.dot_dimension_numbers<[1], [0], [0], [1], [0, 0, 1, 1], [], []>} : vector<128x32xbf16>, vector<32x32xbf16>, vector<128x32xf32> -> vector<128x32xf32>
    %258 = vector.broadcast %47 : vector<1x32xf32> to vector<128x32xf32>
    %259 = arith.addf %257, %258 : vector<128x32xf32>
    %cst_183 = arith.constant dense<0.000000e+00> : vector<128xf32>
    %260 = vector.multi_reduction <add>, %259, %cst_183 [1] : vector<128x32xf32> to vector<128xf32>
    %261 = vector.shape_cast %260 : vector<128xf32> to vector<128x1xf32>
    %cst_184 = arith.constant 3.200000e+01 : f32
    %262 = vector.broadcast %cst_184 : f32 to vector<128x1xf32>
    %263 = arith.divf %261, %262 : vector<128x1xf32>
    %264 = vector.broadcast %263 : vector<128x1xf32> to vector<128x32xf32>
    %265 = arith.subf %259, %264 : vector<128x32xf32>
    %266 = arith.mulf %265, %265 : vector<128x32xf32>
    %cst_185 = arith.constant dense<0.000000e+00> : vector<128xf32>
    %267 = vector.multi_reduction <add>, %266, %cst_185 [1] : vector<128x32xf32> to vector<128xf32>
    %268 = vector.shape_cast %267 : vector<128xf32> to vector<128x1xf32>
    %cst_186 = arith.constant 3.200000e+01 : f32
    %269 = vector.broadcast %cst_186 : f32 to vector<128x1xf32>
    %270 = arith.divf %268, %269 : vector<128x1xf32>
    %271 = vector.broadcast %263 : vector<128x1xf32> to vector<128x32xf32>
    %272 = arith.subf %259, %271 : vector<128x32xf32>
    %cst_187 = arith.constant 9.99999974E-6 : f32
    %273 = vector.broadcast %cst_187 : f32 to vector<128x1xf32>
    %274 = arith.addf %270, %273 : vector<128x1xf32>
    %275 = math.rsqrt %274 : vector<128x1xf32>
    %276 = vector.broadcast %275 : vector<128x1xf32> to vector<128x32xf32>
    %277 = arith.mulf %272, %276 : vector<128x32xf32>
    %278 = vector.broadcast %48 : vector<1x32xf32> to vector<128x32xf32>
    %279 = arith.mulf %277, %278 : vector<128x32xf32>
    %280 = vector.broadcast %49 : vector<1x32xf32> to vector<128x32xf32>
    %281 = arith.addf %279, %280 : vector<128x32xf32>
    %282 = arith.truncf %281 : vector<128x32xf32> to vector<128x32xbf16>
    %cst_188 = arith.constant dense<0.000000e+00> : vector<64x32xf32>
    %283 = tpu.matmul %4, %282, %cst_188 {dimension_numbers = #tpu.dot_dimension_numbers<[1], [0], [0], [1], [0, 0, 1, 1], [], []>} : vector<64x128xbf16>, vector<128x32xbf16>, vector<64x32xf32> -> vector<64x32xf32>
    %284 = arith.truncf %283 : vector<64x32xf32> to vector<64x32xbf16>
    %cst_189 = arith.constant dense<0.000000e+00> : vector<64x32xf32>
    %285 = tpu.matmul %284, %50, %cst_189 {dimension_numbers = #tpu.dot_dimension_numbers<[1], [0], [0], [1], [0, 0, 1, 1], [], []>} : vector<64x32xbf16>, vector<32x32xbf16>, vector<64x32xf32> -> vector<64x32xf32>
    %286 = arith.truncf %232 : vector<64x32xf32> to vector<64x32xbf16>
    %cst_190 = arith.constant dense<0.000000e+00> : vector<64x32xf32>
    %287 = tpu.matmul %286, %51, %cst_190 {dimension_numbers = #tpu.dot_dimension_numbers<[1], [0], [0], [1], [0, 0, 1, 1], [], []>} : vector<64x32xbf16>, vector<32x32xbf16>, vector<64x32xf32> -> vector<64x32xf32>
    %288 = arith.addf %285, %287 : vector<64x32xf32>
    %289 = vector.broadcast %52 : vector<1x32xf32> to vector<64x32xf32>
    %290 = arith.addf %288, %289 : vector<64x32xf32>
    %cst_191 = arith.constant 0.000000e+00 : f32
    %291 = vector.broadcast %cst_191 : f32 to vector<64x32xf32>
    %292 = arith.maximumf %290, %291 : vector<64x32xf32>
    %293 = arith.truncf %292 : vector<64x32xf32> to vector<64x32xbf16>
    %cst_192 = arith.constant dense<0.000000e+00> : vector<64x32xf32>
    %294 = tpu.matmul %293, %53, %cst_192 {dimension_numbers = #tpu.dot_dimension_numbers<[1], [0], [0], [1], [0, 0, 1, 1], [], []>} : vector<64x32xbf16>, vector<32x32xbf16>, vector<64x32xf32> -> vector<64x32xf32>
    %295 = vector.broadcast %54 : vector<1x32xf32> to vector<64x32xf32>
    %296 = arith.addf %294, %295 : vector<64x32xf32>
    %cst_193 = arith.constant 0.000000e+00 : f32
    %297 = vector.broadcast %cst_193 : f32 to vector<64x32xf32>
    %298 = arith.maximumf %296, %297 : vector<64x32xf32>
    %299 = arith.truncf %298 : vector<64x32xf32> to vector<64x32xbf16>
    %cst_194 = arith.constant dense<0.000000e+00> : vector<64x32xf32>
    %300 = tpu.matmul %299, %55, %cst_194 {dimension_numbers = #tpu.dot_dimension_numbers<[1], [0], [0], [1], [0, 0, 1, 1], [], []>} : vector<64x32xbf16>, vector<32x32xbf16>, vector<64x32xf32> -> vector<64x32xf32>
    %301 = vector.broadcast %56 : vector<1x32xf32> to vector<64x32xf32>
    %302 = arith.addf %300, %301 : vector<64x32xf32>
    %cst_195 = arith.constant dense<0.000000e+00> : vector<64xf32>
    %303 = vector.multi_reduction <add>, %302, %cst_195 [1] : vector<64x32xf32> to vector<64xf32>
    %304 = vector.shape_cast %303 : vector<64xf32> to vector<64x1xf32>
    %cst_196 = arith.constant 3.200000e+01 : f32
    %305 = vector.broadcast %cst_196 : f32 to vector<64x1xf32>
    %306 = arith.divf %304, %305 : vector<64x1xf32>
    %307 = vector.broadcast %306 : vector<64x1xf32> to vector<64x32xf32>
    %308 = arith.subf %302, %307 : vector<64x32xf32>
    %309 = arith.mulf %308, %308 : vector<64x32xf32>
    %cst_197 = arith.constant dense<0.000000e+00> : vector<64xf32>
    %310 = vector.multi_reduction <add>, %309, %cst_197 [1] : vector<64x32xf32> to vector<64xf32>
    %311 = vector.shape_cast %310 : vector<64xf32> to vector<64x1xf32>
    %cst_198 = arith.constant 3.200000e+01 : f32
    %312 = vector.broadcast %cst_198 : f32 to vector<64x1xf32>
    %313 = arith.divf %311, %312 : vector<64x1xf32>
    %314 = vector.broadcast %306 : vector<64x1xf32> to vector<64x32xf32>
    %315 = arith.subf %302, %314 : vector<64x32xf32>
    %cst_199 = arith.constant 9.99999974E-6 : f32
    %316 = vector.broadcast %cst_199 : f32 to vector<64x1xf32>
    %317 = arith.addf %313, %316 : vector<64x1xf32>
    %318 = math.rsqrt %317 : vector<64x1xf32>
    %319 = vector.broadcast %318 : vector<64x1xf32> to vector<64x32xf32>
    %320 = arith.mulf %315, %319 : vector<64x32xf32>
    %321 = vector.broadcast %57 : vector<1x32xf32> to vector<64x32xf32>
    %322 = arith.mulf %320, %321 : vector<64x32xf32>
    %323 = vector.broadcast %58 : vector<1x32xf32> to vector<64x32xf32>
    %324 = arith.addf %322, %323 : vector<64x32xf32>
    %325 = arith.addf %324, %232 : vector<64x32xf32>
    %326 = arith.truncf %325 : vector<64x32xf32> to vector<64x32xbf16>
    %cst_200 = arith.constant dense<0.000000e+00> : vector<64x32xf32>
    %327 = tpu.matmul %326, %59, %cst_200 {dimension_numbers = #tpu.dot_dimension_numbers<[1], [0], [0], [1], [0, 0, 1, 1], [], []>} : vector<64x32xbf16>, vector<32x32xbf16>, vector<64x32xf32> -> vector<64x32xf32>
    %328 = vector.broadcast %60 : vector<1x32xf32> to vector<64x32xf32>
    %329 = arith.addf %327, %328 : vector<64x32xf32>
    %cst_201 = arith.constant 0.000000e+00 : f32
    %330 = vector.broadcast %cst_201 : f32 to vector<64x32xf32>
    %331 = arith.maximumf %329, %330 : vector<64x32xf32>
    %332 = arith.truncf %331 : vector<64x32xf32> to vector<64x32xbf16>
    %cst_202 = arith.constant dense<0.000000e+00> : vector<64x32xf32>
    %333 = tpu.matmul %332, %61, %cst_202 {dimension_numbers = #tpu.dot_dimension_numbers<[1], [0], [0], [1], [0, 0, 1, 1], [], []>} : vector<64x32xbf16>, vector<32x32xbf16>, vector<64x32xf32> -> vector<64x32xf32>
    %334 = vector.broadcast %62 : vector<1x32xf32> to vector<64x32xf32>
    %335 = arith.addf %333, %334 : vector<64x32xf32>
    %cst_203 = arith.constant 0.000000e+00 : f32
    %336 = vector.broadcast %cst_203 : f32 to vector<64x32xf32>
    %337 = arith.maximumf %335, %336 : vector<64x32xf32>
    %338 = arith.truncf %337 : vector<64x32xf32> to vector<64x32xbf16>
    %cst_204 = arith.constant dense<0.000000e+00> : vector<64x6xf32>
    %339 = tpu.matmul %338, %63, %cst_204 {dimension_numbers = #tpu.dot_dimension_numbers<[1], [0], [0], [1], [0, 0, 1, 1], [], []>} : vector<64x32xbf16>, vector<32x6xbf16>, vector<64x6xf32> -> vector<64x6xf32>
    %340 = vector.broadcast %64 : vector<1x6xf32> to vector<64x6xf32>
    %341 = arith.addf %339, %340 : vector<64x6xf32>
    %c0_205 = arith.constant 0 : index
    %c0_206 = arith.constant 0 : index
    %342 = vector.load %arg65[%c0_205, %c0_206] : memref<64x6xf32, #tpu.memory_space<vmem>>, vector<64x6xf32>
    tpu.vector_store %arg65[%c0_205, %c0_206], %341 {strides = array<i32>} : memref<64x6xf32, #tpu.memory_space<vmem>>, vector<64x6xf32>,
    return
  }
}

</mosaic_0001>

<llo_original>
// kernel: encode_process_decode.1
$region0: #{encode_process_decode.1}
  #allocation0 [shape = 'u32[]', space=smem, size = 0x4, offset = 0x4, fixed_abs, tag = 'smem constant byte address 0x4 - core index']
  #allocation1 [shape = 'u32[144,128]{1,0:T(1,128)}', space=vmem, size = 0x12000, scoped, tag = 'internal scratch']
  %s0 = inlined_call_operand.smem [shape: u32[66], index: -1, kind: input, shape index: {}]
  %s1 = sld [smem:[%s0]]
  %s2 = scalar_lea.smem %s0, 1
  %s3 = sld [smem:[%s2]]
  %s4 = scalar_lea.smem %s0, 2
  %s5 = sld [smem:[%s4]]
  %s6 = scalar_lea.smem %s0, 3
  %s7 = sld [smem:[%s6]]
  %s8 = scalar_lea.smem %s0, 4
  %s9 = sld [smem:[%s8]]
  %s10 = scalar_lea.smem %s0, 5
  %s11 = sld [smem:[%s10]]
  %s12 = scalar_lea.smem %s0, 6
  %s13 = sld [smem:[%s12]]
  %s14 = scalar_lea.smem %s0, 7
  %s15 = sld [smem:[%s14]]
  %s16 = scalar_lea.smem %s0, 8
  %s17 = sld [smem:[%s16]]
  %s18 = scalar_lea.smem %s0, 9
  %s19 = sld [smem:[%s18]]
  %s20 = scalar_lea.smem %s0, 10
  %s21 = sld [smem:[%s20]]
  %s22 = scalar_lea.smem %s0, 11
  %s23 = sld [smem:[%s22]]
  %s24 = scalar_lea.smem %s0, 12
  %s25 = sld [smem:[%s24]]
  %s26 = scalar_lea.smem %s0, 13
  %s27 = sld [smem:[%s26]]
  %s28 = scalar_lea.smem %s0, 14
  %s29 = sld [smem:[%s28]]
  %s30 = scalar_lea.smem %s0, 15
  %s31 = sld [smem:[%s30]]
  %s32 = scalar_lea.smem %s0, 16
  %s33 = sld [smem:[%s32]]
  %s34 = scalar_lea.smem %s0, 17
  %s35 = sld [smem:[%s34]]
  %s36 = scalar_lea.smem %s0, 18
  %s37 = sld [smem:[%s36]]
  %s38 = scalar_lea.smem %s0, 19
  %s39 = sld [smem:[%s38]]
  %s40 = scalar_lea.smem %s0, 20
  %s41 = sld [smem:[%s40]]
  %s42 = scalar_lea.smem %s0, 21
  %s43 = sld [smem:[%s42]]
  %s44 = scalar_lea.smem %s0, 22
  %s45 = sld [smem:[%s44]]
  %s46 = scalar_lea.smem %s0, 23
  %s47 = sld [smem:[%s46]]
  %s48 = scalar_lea.smem %s0, 24
  %s49 = sld [smem:[%s48]]
  %s50 = scalar_lea.smem %s0, 25
  %s51 = sld [smem:[%s50]]
  %s52 = scalar_lea.smem %s0, 26
  %s53 = sld [smem:[%s52]]
  %s54 = scalar_lea.smem %s0, 27
  %s55 = sld [smem:[%s54]]
  %s56 = scalar_lea.smem %s0, 28
  %s57 = sld [smem:[%s56]]
  %s58 = scalar_lea.smem %s0, 29
  %s59 = sld [smem:[%s58]]
  %s60 = scalar_lea.smem %s0, 30
  %s61 = sld [smem:[%s60]]
  %s62 = scalar_lea.smem %s0, 31
  %s63 = sld [smem:[%s62]]
  %s64 = scalar_lea.smem %s0, 32
  %s65 = sld [smem:[%s64]]
  %s66 = scalar_lea.smem %s0, 33
  %s67 = sld [smem:[%s66]]
  %s68 = scalar_lea.smem %s0, 34
  %s69 = sld [smem:[%s68]]
  %s70 = scalar_lea.smem %s0, 35
  %s71 = sld [smem:[%s70]]
  %s72 = scalar_lea.smem %s0, 36
  %s73 = sld [smem:[%s72]]
  %s74 = scalar_lea.smem %s0, 37
  %s75 = sld [smem:[%s74]]
  %s76 = scalar_lea.smem %s0, 38
  %s77 = sld [smem:[%s76]]
  %s78 = scalar_lea.smem %s0, 39
  %s79 = sld [smem:[%s78]]
  %s80 = scalar_lea.smem %s0, 40
  %s81 = sld [smem:[%s80]]
  %s82 = scalar_lea.smem %s0, 41
  %s83 = sld [smem:[%s82]]
  %s84 = scalar_lea.smem %s0, 42
  %s85 = sld [smem:[%s84]]
  %s86 = scalar_lea.smem %s0, 43
  %s87 = sld [smem:[%s86]]
  %s88 = scalar_lea.smem %s0, 44
  %s89 = sld [smem:[%s88]]
  %s90 = scalar_lea.smem %s0, 45
  %s91 = sld [smem:[%s90]]
  %s92 = scalar_lea.smem %s0, 46
  %s93 = sld [smem:[%s92]]
  %s94 = scalar_lea.smem %s0, 47
  %s95 = sld [smem:[%s94]]
  %s96 = scalar_lea.smem %s0, 48
  %s97 = sld [smem:[%s96]]
  %s98 = scalar_lea.smem %s0, 49
  %s99 = sld [smem:[%s98]]
  %s100 = scalar_lea.smem %s0, 50
  %s101 = sld [smem:[%s100]]
  %s102 = scalar_lea.smem %s0, 51
  %s103 = sld [smem:[%s102]]
  %s104 = scalar_lea.smem %s0, 52
  %s105 = sld [smem:[%s104]]
  %s106 = scalar_lea.smem %s0, 53
  %s107 = sld [smem:[%s106]]
  %s108 = scalar_lea.smem %s0, 54
  %s109 = sld [smem:[%s108]]
  %s110 = scalar_lea.smem %s0, 55
  %s111 = sld [smem:[%s110]]
  %s112 = scalar_lea.smem %s0, 56
  %s113 = sld [smem:[%s112]]
  %s114 = scalar_lea.smem %s0, 57
  %s115 = sld [smem:[%s114]]
  %s116 = scalar_lea.smem %s0, 58
  %s117 = sld [smem:[%s116]]
  %s118 = scalar_lea.smem %s0, 59
  %s119 = sld [smem:[%s118]]
  %s120 = scalar_lea.smem %s0, 60
  %s121 = sld [smem:[%s120]]
  %s122 = scalar_lea.smem %s0, 61
  %s123 = sld [smem:[%s122]]
  %s124 = scalar_lea.smem %s0, 62
  %s125 = sld [smem:[%s124]]
  %s126 = scalar_lea.smem %s0, 63
  %s127 = sld [smem:[%s126]]
  %s128 = scalar_lea.smem %s0, 64
  %s129 = sld [smem:[%s128]]
  %s130 = scalar_lea.smem %s0, 65
  %s131 = sld [smem:[%s130]]
  %s132 = sld [smem:[#allocation0]]
  $region270: #{encode_process_decode.1} parent=0
    _
  %s134 = ssub.s32 1, %s132
  %s135 = scalar_select 0, %s134, %s132
  // Predicated region
  $region2: #{encode_process_decode.1} parent=0 // pred_check
    _
  $region3: #{encode_process_decode.1} parent=0 // pred_check_branch
    %137 = sbr.rel (0) target = $region5
  $region4: #{encode_process_decode.1} parent=0 // pred_region
    _
  $region5: #{encode_process_decode.1} parent=0 // pred_fallthru
    _
  // Predicated region
  $region6: #{encode_process_decode.1} parent=0 // pred_check
    _
  $region7: #{encode_process_decode.1} parent=0 // pred_check_branch
    %139 = sbr.rel (0) target = $region9
  $region8: #{encode_process_decode.1} parent=0 // pred_region
    _
  $region9: #{encode_process_decode.1} parent=0 // pred_fallthru
    _
  // Predicated region
  $region10: #{encode_process_decode.1} parent=0 // pred_check
    _
  $region11: #{encode_process_decode.1} parent=0 // pred_check_branch
    %141 = sbr.rel (0) target = $region13
  $region12: #{encode_process_decode.1} parent=0 // pred_region
    _
  $region13: #{encode_process_decode.1} parent=0 // pred_fallthru
    _
  // Predicated region
  $region14: #{encode_process_decode.1} parent=0 // pred_check
    _
  $region15: #{encode_process_decode.1} parent=0 // pred_check_branch
    %143 = sbr.rel (0) target = $region17
  $region16: #{encode_process_decode.1} parent=0 // pred_region
    _
  $region17: #{encode_process_decode.1} parent=0 // pred_fallthru
    _
  // Predicated region
  $region18: #{encode_process_decode.1} parent=0 // pred_check
    _
  $region19: #{encode_process_decode.1} parent=0 // pred_check_branch
    %145 = sbr.rel (0) target = $region21
  $region20: #{encode_process_decode.1} parent=0 // pred_region
    _
  $region21: #{encode_process_decode.1} parent=0 // pred_fallthru
    _
  // Predicated region
  $region22: #{encode_process_decode.1} parent=0 // pred_check
    _
  $region23: #{encode_process_decode.1} parent=0 // pred_check_branch
    %147 = sbr.rel (0) target = $region25
  $region24: #{encode_process_decode.1} parent=0 // pred_region
    _
  $region25: #{encode_process_decode.1} parent=0 // pred_fallthru
    _
  // Predicated region
  $region26: #{encode_process_decode.1} parent=0 // pred_check
    _
  $region27: #{encode_process_decode.1} parent=0 // pred_check_branch
    %149 = sbr.rel (0) target = $region29
  $region28: #{encode_process_decode.1} parent=0 // pred_region
    _
  $region29: #{encode_process_decode.1} parent=0 // pred_fallthru
    _
  // Predicated region
  $region30: #{encode_process_decode.1} parent=0 // pred_check
    _
  $region31: #{encode_process_decode.1} parent=0 // pred_check_branch
    %151 = sbr.rel (0) target = $region33
  $region32: #{encode_process_decode.1} parent=0 // pred_region
    _
  $region33: #{encode_process_decode.1} parent=0 // pred_fallthru
    _
  // Predicated region
  $region34: #{encode_process_decode.1} parent=0 // pred_check
    _
  $region35: #{encode_process_decode.1} parent=0 // pred_check_branch
    %153 = sbr.rel (0) target = $region37
  $region36: #{encode_process_decode.1} parent=0 // pred_region
    _
  $region37: #{encode_process_decode.1} parent=0 // pred_fallthru
    _
  // Predicated region
  $region38: #{encode_process_decode.1} parent=0 // pred_check
    _
  $region39: #{encode_process_decode.1} parent=0 // pred_check_branch
    %155 = sbr.rel (0) target = $region41
  $region40: #{encode_process_decode.1} parent=0 // pred_region
    _
  $region41: #{encode_process_decode.1} parent=0 // pred_fallthru
    _
  // Predicated region
  $region42: #{encode_process_decode.1} parent=0 // pred_check
    _
  $region43: #{encode_process_decode.1} parent=0 // pred_check_branch
    %157 = sbr.rel (0) target = $region45
  $region44: #{encode_process_decode.1} parent=0 // pred_region
    _
  $region45: #{encode_process_decode.1} parent=0 // pred_fallthru
    _
  // Predicated region
  $region46: #{encode_process_decode.1} parent=0 // pred_check
    _
  $region47: #{encode_process_decode.1} parent=0 // pred_check_branch
    %159 = sbr.rel (0) target = $region49
  $region48: #{encode_process_decode.1} parent=0 // pred_region
    _
  $region49: #{encode_process_decode.1} parent=0 // pred_fallthru
    _
  // Predicated region
  $region50: #{encode_process_decode.1} parent=0 // pred_check
    _
  $region51: #{encode_process_decode.1} parent=0 // pred_check_branch
    %161 = sbr.rel (0) target = $region53
  $region52: #{encode_process_decode.1} parent=0 // pred_region
    _
  $region53: #{encode_process_decode.1} parent=0 // pred_fallthru
    _
  // Predicated region
  $region54: #{encode_process_decode.1} parent=0 // pred_check
    _
  $region55: #{encode_process_decode.1} parent=0 // pred_check_branch
    %163 = sbr.rel (0) target = $region57
  $region56: #{encode_process_decode.1} parent=0 // pred_region
    _
  $region57: #{encode_process_decode.1} parent=0 // pred_fallthru
    _
  // Predicated region
  $region58: #{encode_process_decode.1} parent=0 // pred_check
    _
  $region59: #{encode_process_decode.1} parent=0 // pred_check_branch
    %165 = sbr.rel (0) target = $region61
  $region60: #{encode_process_decode.1} parent=0 // pred_region
    _
  $region61: #{encode_process_decode.1} parent=0 // pred_fallthru
    _
  // Predicated region
  $region62: #{encode_process_decode.1} parent=0 // pred_check
    _
  $region63: #{encode_process_decode.1} parent=0 // pred_check_branch
    %167 = sbr.rel (0) target = $region65
  $region64: #{encode_process_decode.1} parent=0 // pred_region
    _
  $region65: #{encode_process_decode.1} parent=0 // pred_fallthru
    _
  // Predicated region
  $region66: #{encode_process_decode.1} parent=0 // pred_check
    _
  $region67: #{encode_process_decode.1} parent=0 // pred_check_branch
    %169 = sbr.rel (0) target = $region69
  $region68: #{encode_process_decode.1} parent=0 // pred_region
    _
  $region69: #{encode_process_decode.1} parent=0 // pred_fallthru
    _
  // Predicated region
  $region70: #{encode_process_decode.1} parent=0 // pred_check
    _
  $region71: #{encode_process_decode.1} parent=0 // pred_check_branch
    %171 = sbr.rel (0) target = $region73
  $region72: #{encode_process_decode.1} parent=0 // pred_region
    _
  $region73: #{encode_process_decode.1} parent=0 // pred_fallthru
    _
  // Predicated region
  $region74: #{encode_process_decode.1} parent=0 // pred_check
    _
  $region75: #{encode_process_decode.1} parent=0 // pred_check_branch
    %173 = sbr.rel (0) target = $region77
  $region76: #{encode_process_decode.1} parent=0 // pred_region
    _
  $region77: #{encode_process_decode.1} parent=0 // pred_fallthru
    _
  // Predicated region
  $region78: #{encode_process_decode.1} parent=0 // pred_check
    _
  $region79: #{encode_process_decode.1} parent=0 // pred_check_branch
    %175 = sbr.rel (0) target = $region81
  $region80: #{encode_process_decode.1} parent=0 // pred_region
    _
  $region81: #{encode_process_decode.1} parent=0 // pred_fallthru
    _
  // Predicated region
  $region82: #{encode_process_decode.1} parent=0 // pred_check
    _
  $region83: #{encode_process_decode.1} parent=0 // pred_check_branch
    %177 = sbr.rel (0) target = $region85
  $region84: #{encode_process_decode.1} parent=0 // pred_region
    _
  $region85: #{encode_process_decode.1} parent=0 // pred_fallthru
    _
  // Predicated region
  $region86: #{encode_process_decode.1} parent=0 // pred_check
    _
  $region87: #{encode_process_decode.1} parent=0 // pred_check_branch
    %179 = sbr.rel (0) target = $region89
  $region88: #{encode_process_decode.1} parent=0 // pred_region
    _
  $region89: #{encode_process_decode.1} parent=0 // pred_fallthru
    _
  // Predicated region
  $region90: #{encode_process_decode.1} parent=0 // pred_check
    _
  $region91: #{encode_process_decode.1} parent=0 // pred_check_branch
    %181 = sbr.rel (0) target = $region93
  $region92: #{encode_process_decode.1} parent=0 // pred_region
    _
  $region93: #{encode_process_decode.1} parent=0 // pred_fallthru
    _
  // Predicated region
  $region94: #{encode_process_decode.1} parent=0 // pred_check
    _
  $region95: #{encode_process_decode.1} parent=0 // pred_check_branch
    %183 = sbr.rel (0) target = $region97
  $region96: #{encode_process_decode.1} parent=0 // pred_region
    _
  $region97: #{encode_process_decode.1} parent=0 // pred_fallthru
    _
  // Predicated region
  $region98: #{encode_process_decode.1} parent=0 // pred_check
    _
  $region99: #{encode_process_decode.1} parent=0 // pred_check_branch
    %185 = sbr.rel (0) target = $region101
  $region100: #{encode_process_decode.1} parent=0 // pred_region
    _
  $region101: #{encode_process_decode.1} parent=0 // pred_fallthru
    _
  // Predicated region
  $region102: #{encode_process_decode.1} parent=0 // pred_check
    _
  $region103: #{encode_process_decode.1} parent=0 // pred_check_branch
    %187 = sbr.rel (0) target = $region105
  $region104: #{encode_process_decode.1} parent=0 // pred_region
    _
  $region105: #{encode_process_decode.1} parent=0 // pred_fallthru
    _
  // Predicated region
  $region106: #{encode_process_decode.1} parent=0 // pred_check
    _
  $region107: #{encode_process_decode.1} parent=0 // pred_check_branch
    %189 = sbr.rel (0) target = $region109
  $region108: #{encode_process_decode.1} parent=0 // pred_region
    _
  $region109: #{encode_process_decode.1} parent=0 // pred_fallthru
    _
  // Predicated region
  $region110: #{encode_process_decode.1} parent=0 // pred_check
    _
  $region111: #{encode_process_decode.1} parent=0 // pred_check_branch
    %191 = sbr.rel (0) target = $region113
  $region112: #{encode_process_decode.1} parent=0 // pred_region
    _
  $region113: #{encode_process_decode.1} parent=0 // pred_fallthru
    _
  // Predicated region
  $region114: #{encode_process_decode.1} parent=0 // pred_check
    _
  $region115: #{encode_process_decode.1} parent=0 // pred_check_branch
    %193 = sbr.rel (0) target = $region117
  $region116: #{encode_process_decode.1} parent=0 // pred_region
    _
  $region117: #{encode_process_decode.1} parent=0 // pred_fallthru
    _
  // Predicated region
  $region118: #{encode_process_decode.1} parent=0 // pred_check
    _
  $region119: #{encode_process_decode.1} parent=0 // pred_check_branch
    %195 = sbr.rel (0) target = $region121
  $region120: #{encode_process_decode.1} parent=0 // pred_region
    _
  $region121: #{encode_process_decode.1} parent=0 // pred_fallthru
    _
  // Predicated region
  $region122: #{encode_process_decode.1} parent=0 // pred_check
    _
  $region123: #{encode_process_decode.1} parent=0 // pred_check_branch
    %197 = sbr.rel (0) target = $region125
  $region124: #{encode_process_decode.1} parent=0 // pred_region
    _
  $region125: #{encode_process_decode.1} parent=0 // pred_fallthru
    _
  // Predicated region
  $region126: #{encode_process_decode.1} parent=0 // pred_check
    _
  $region127: #{encode_process_decode.1} parent=0 // pred_check_branch
    %199 = sbr.rel (0) target = $region129
  $region128: #{encode_process_decode.1} parent=0 // pred_region
    _
  $region129: #{encode_process_decode.1} parent=0 // pred_fallthru
    _
  // Predicated region
  $region130: #{encode_process_decode.1} parent=0 // pred_check
    _
  $region131: #{encode_process_decode.1} parent=0 // pred_check_branch
    %201 = sbr.rel (0) target = $region133
  $region132: #{encode_process_decode.1} parent=0 // pred_region
    _
  $region133: #{encode_process_decode.1} parent=0 // pred_fallthru
    _
  // Predicated region
  $region134: #{encode_process_decode.1} parent=0 // pred_check
    _
  $region135: #{encode_process_decode.1} parent=0 // pred_check_branch
    %203 = sbr.rel (0) target = $region137
  $region136: #{encode_process_decode.1} parent=0 // pred_region
    _
  $region137: #{encode_process_decode.1} parent=0 // pred_fallthru
    _
  // Predicated region
  $region138: #{encode_process_decode.1} parent=0 // pred_check
    _
  $region139: #{encode_process_decode.1} parent=0 // pred_check_branch
    %205 = sbr.rel (0) target = $region141
  $region140: #{encode_process_decode.1} parent=0 // pred_region
    _
  $region141: #{encode_process_decode.1} parent=0 // pred_fallthru
    _
  // Predicated region
  $region142: #{encode_process_decode.1} parent=0 // pred_check
    _
  $region143: #{encode_process_decode.1} parent=0 // pred_check_branch
    %207 = sbr.rel (0) target = $region145
  $region144: #{encode_process_decode.1} parent=0 // pred_region
    _
  $region145: #{encode_process_decode.1} parent=0 // pred_fallthru
    _
  // Predicated region
  $region146: #{encode_process_decode.1} parent=0 // pred_check
    _
  $region147: #{encode_process_decode.1} parent=0 // pred_check_branch
    %209 = sbr.rel (0) target = $region149
  $region148: #{encode_process_decode.1} parent=0 // pred_region
    _
  $region149: #{encode_process_decode.1} parent=0 // pred_fallthru
    _
  // Predicated region
  $region150: #{encode_process_decode.1} parent=0 // pred_check
    _
  $region151: #{encode_process_decode.1} parent=0 // pred_check_branch
    %211 = sbr.rel (0) target = $region153
  $region152: #{encode_process_decode.1} parent=0 // pred_region
    _
  $region153: #{encode_process_decode.1} parent=0 // pred_fallthru
    _
  // Predicated region
  $region154: #{encode_process_decode.1} parent=0 // pred_check
    _
  $region155: #{encode_process_decode.1} parent=0 // pred_check_branch
    %213 = sbr.rel (0) target = $region157
  $region156: #{encode_process_decode.1} parent=0 // pred_region
    _
  $region157: #{encode_process_decode.1} parent=0 // pred_fallthru
    _
  // Predicated region
  $region158: #{encode_process_decode.1} parent=0 // pred_check
    _
  $region159: #{encode_process_decode.1} parent=0 // pred_check_branch
    %215 = sbr.rel (0) target = $region161
  $region160: #{encode_process_decode.1} parent=0 // pred_region
    _
  $region161: #{encode_process_decode.1} parent=0 // pred_fallthru
    _
  // Predicated region
  $region162: #{encode_process_decode.1} parent=0 // pred_check
    _
  $region163: #{encode_process_decode.1} parent=0 // pred_check_branch
    %217 = sbr.rel (0) target = $region165
  $region164: #{encode_process_decode.1} parent=0 // pred_region
    _
  $region165: #{encode_process_decode.1} parent=0 // pred_fallthru
    _
  // Predicated region
  $region166: #{encode_process_decode.1} parent=0 // pred_check
    _
  $region167: #{encode_process_decode.1} parent=0 // pred_check_branch
    %219 = sbr.rel (0) target = $region169
  $region168: #{encode_process_decode.1} parent=0 // pred_region
    _
  $region169: #{encode_process_decode.1} parent=0 // pred_fallthru
    _
  // Predicated region
  $region170: #{encode_process_decode.1} parent=0 // pred_check
    _
  $region171: #{encode_process_decode.1} parent=0 // pred_check_branch
    %221 = sbr.rel (0) target = $region173
  $region172: #{encode_process_decode.1} parent=0 // pred_region
    _
  $region173: #{encode_process_decode.1} parent=0 // pred_fallthru
    _
  // Predicated region
  $region174: #{encode_process_decode.1} parent=0 // pred_check
    _
  $region175: #{encode_process_decode.1} parent=0 // pred_check_branch
    %223 = sbr.rel (0) target = $region177
  $region176: #{encode_process_decode.1} parent=0 // pred_region
    _
  $region177: #{encode_process_decode.1} parent=0 // pred_fallthru
    _
  // Predicated region
  $region178: #{encode_process_decode.1} parent=0 // pred_check
    _
  $region179: #{encode_process_decode.1} parent=0 // pred_check_branch
    %225 = sbr.rel (0) target = $region181
  $region180: #{encode_process_decode.1} parent=0 // pred_region
    _
  $region181: #{encode_process_decode.1} parent=0 // pred_fallthru
    _
  // Predicated region
  $region182: #{encode_process_decode.1} parent=0 // pred_check
    _
  $region183: #{encode_process_decode.1} parent=0 // pred_check_branch
    %227 = sbr.rel (0) target = $region185
  $region184: #{encode_process_decode.1} parent=0 // pred_region
    _
  $region185: #{encode_process_decode.1} parent=0 // pred_fallthru
    _
  // Predicated region
  $region186: #{encode_process_decode.1} parent=0 // pred_check
    _
  $region187: #{encode_process_decode.1} parent=0 // pred_check_branch
    %229 = sbr.rel (0) target = $region189
  $region188: #{encode_process_decode.1} parent=0 // pred_region
    _
  $region189: #{encode_process_decode.1} parent=0 // pred_fallthru
    _
  // Predicated region
  $region190: #{encode_process_decode.1} parent=0 // pred_check
    _
  $region191: #{encode_process_decode.1} parent=0 // pred_check_branch
    %231 = sbr.rel (0) target = $region193
  $region192: #{encode_process_decode.1} parent=0 // pred_region
    _
  $region193: #{encode_process_decode.1} parent=0 // pred_fallthru
    _
  // Predicated region
  $region194: #{encode_process_decode.1} parent=0 // pred_check
    _
  $region195: #{encode_process_decode.1} parent=0 // pred_check_branch
    %233 = sbr.rel (0) target = $region197
  $region196: #{encode_process_decode.1} parent=0 // pred_region
    _
  $region197: #{encode_process_decode.1} parent=0 // pred_fallthru
    _
  // Predicated region
  $region198: #{encode_process_decode.1} parent=0 // pred_check
    _
  $region199: #{encode_process_decode.1} parent=0 // pred_check_branch
    %235 = sbr.rel (0) target = $region201
  $region200: #{encode_process_decode.1} parent=0 // pred_region
    _
  $region201: #{encode_process_decode.1} parent=0 // pred_fallthru
    _
  // Predicated region
  $region202: #{encode_process_decode.1} parent=0 // pred_check
    _
  $region203: #{encode_process_decode.1} parent=0 // pred_check_branch
    %237 = sbr.rel (0) target = $region205
  $region204: #{encode_process_decode.1} parent=0 // pred_region
    _
  $region205: #{encode_process_decode.1} parent=0 // pred_fallthru
    _
  // Predicated region
  $region206: #{encode_process_decode.1} parent=0 // pred_check
    _
  $region207: #{encode_process_decode.1} parent=0 // pred_check_branch
    %239 = sbr.rel (0) target = $region209
  $region208: #{encode_process_decode.1} parent=0 // pred_region
    _
  $region209: #{encode_process_decode.1} parent=0 // pred_fallthru
    _
  // Predicated region
  $region210: #{encode_process_decode.1} parent=0 // pred_check
    _
  $region211: #{encode_process_decode.1} parent=0 // pred_check_branch
    %241 = sbr.rel (0) target = $region213
  $region212: #{encode_process_decode.1} parent=0 // pred_region
    _
  $region213: #{encode_process_decode.1} parent=0 // pred_fallthru
    _
  // Predicated region
  $region214: #{encode_process_decode.1} parent=0 // pred_check
    _
  $region215: #{encode_process_decode.1} parent=0 // pred_check_branch
    %243 = sbr.rel (0) target = $region217
  $region216: #{encode_process_decode.1} parent=0 // pred_region
    _
  $region217: #{encode_process_decode.1} parent=0 // pred_fallthru
    _
  // Predicated region
  $region218: #{encode_process_decode.1} parent=0 // pred_check
    _
  $region219: #{encode_process_decode.1} parent=0 // pred_check_branch
    %245 = sbr.rel (0) target = $region221
  $region220: #{encode_process_decode.1} parent=0 // pred_region
    _
  $region221: #{encode_process_decode.1} parent=0 // pred_fallthru
    _
  // Predicated region
  $region222: #{encode_process_decode.1} parent=0 // pred_check
    _
  $region223: #{encode_process_decode.1} parent=0 // pred_check_branch
    %247 = sbr.rel (0) target = $region225
  $region224: #{encode_process_decode.1} parent=0 // pred_region
    _
  $region225: #{encode_process_decode.1} parent=0 // pred_fallthru
    _
  // Predicated region
  $region226: #{encode_process_decode.1} parent=0 // pred_check
    _
  $region227: #{encode_process_decode.1} parent=0 // pred_check_branch
    %249 = sbr.rel (0) target = $region229
  $region228: #{encode_process_decode.1} parent=0 // pred_region
    _
  $region229: #{encode_process_decode.1} parent=0 // pred_fallthru
    _
  // Predicated region
  $region230: #{encode_process_decode.1} parent=0 // pred_check
    _
  $region231: #{encode_process_decode.1} parent=0 // pred_check_branch
    %251 = sbr.rel (0) target = $region233
  $region232: #{encode_process_decode.1} parent=0 // pred_region
    _
  $region233: #{encode_process_decode.1} parent=0 // pred_fallthru
    _
  // Predicated region
  $region234: #{encode_process_decode.1} parent=0 // pred_check
    _
  $region235: #{encode_process_decode.1} parent=0 // pred_check_branch
    %253 = sbr.rel (0) target = $region237
  $region236: #{encode_process_decode.1} parent=0 // pred_region
    _
  $region237: #{encode_process_decode.1} parent=0 // pred_fallthru
    _
  // Predicated region
  $region238: #{encode_process_decode.1} parent=0 // pred_check
    _
  $region239: #{encode_process_decode.1} parent=0 // pred_check_branch
    %255 = sbr.rel (0) target = $region241
  $region240: #{encode_process_decode.1} parent=0 // pred_region
    _
  $region241: #{encode_process_decode.1} parent=0 // pred_fallthru
    _
  // Predicated region
  $region242: #{encode_process_decode.1} parent=0 // pred_check
    _
  $region243: #{encode_process_decode.1} parent=0 // pred_check_branch
    %257 = sbr.rel (0) target = $region245
  $region244: #{encode_process_decode.1} parent=0 // pred_region
    _
  $region245: #{encode_process_decode.1} parent=0 // pred_fallthru
    _
  // Predicated region
  $region246: #{encode_process_decode.1} parent=0 // pred_check
    _
  $region247: #{encode_process_decode.1} parent=0 // pred_check_branch
    %259 = sbr.rel (0) target = $region249
  $region248: #{encode_process_decode.1} parent=0 // pred_region
    _
  $region249: #{encode_process_decode.1} parent=0 // pred_fallthru
    _
  // Predicated region
  $region250: #{encode_process_decode.1} parent=0 // pred_check
    _
  $region251: #{encode_process_decode.1} parent=0 // pred_check_branch
    %261 = sbr.rel (0) target = $region253
  $region252: #{encode_process_decode.1} parent=0 // pred_region
    _
  $region253: #{encode_process_decode.1} parent=0 // pred_fallthru
    _
  // Predicated region
  $region254: #{encode_process_decode.1} parent=0 // pred_check
    _
  $region255: #{encode_process_decode.1} parent=0 // pred_check_branch
    %263 = sbr.rel (0) target = $region257
  $region256: #{encode_process_decode.1} parent=0 // pred_region
    _
  $region257: #{encode_process_decode.1} parent=0 // pred_fallthru
    _
  // Predicated region
  $region258: #{encode_process_decode.1} parent=0 // pred_check
    _
  $region259: #{encode_process_decode.1} parent=0 // pred_check_branch
    %265 = sbr.rel (0) target = $region261
  $region260: #{encode_process_decode.1} parent=0 // pred_region
    _
  $region261: #{encode_process_decode.1} parent=0 // pred_fallthru
    _
  %v267 = vld [vmem:[%s1] sm:$0xff]
  %v268 = vld [vmem:[%s1 + $0x8] sm:$0xff]
  %v269 = vld [vmem:[%s1 + $0x10] sm:$0xff]
  %v270 = vld [vmem:[%s1 + $0x18] sm:$0xff]
  %v271 = vld [vmem:[%s1 + $0x20] sm:$0xff]
  %v272 = vld [vmem:[%s1 + $0x28] sm:$0xff]
  %v273 = vld [vmem:[%s1 + $0x30] sm:$0xff]
  %v274 = vld [vmem:[%s1 + $0x38] sm:$0xff]
  %v275 = vld [vmem:[%s3] sm:$0xff]
  %v276 = vld [vmem:[%s3 + $0x8] sm:$0xff]
  %v277 = vld [vmem:[%s3 + $0x10] sm:$0xff]
  %v278 = vld [vmem:[%s3 + $0x18] sm:$0xff]
  %v279 = vld [vmem:[%s3 + $0x20] sm:$0xff]
  %v280 = vld [vmem:[%s3 + $0x28] sm:$0xff]
  %v281 = vld [vmem:[%s3 + $0x30] sm:$0xff]
  %v282 = vld [vmem:[%s3 + $0x38] sm:$0xff]
  %v283 = vld [vmem:[%s3 + $0x40] sm:$0xff]
  %v284 = vld [vmem:[%s3 + $0x48] sm:$0xff]
  %v285 = vld [vmem:[%s3 + $0x50] sm:$0xff]
  %v286 = vld [vmem:[%s3 + $0x58] sm:$0xff]
  %v287 = vld [vmem:[%s3 + $0x60] sm:$0xff]
  %v288 = vld [vmem:[%s3 + $0x68] sm:$0xff]
  %v289 = vld [vmem:[%s3 + $0x70] sm:$0xff]
  %v290 = vld [vmem:[%s3 + $0x78] sm:$0xff]
  %v291 = vld [vmem:[%s5] sm:$0xf]
  %v292 = vld [vmem:[%s5 + $0x4] sm:$0xf]
  %v293 = vld [vmem:[%s5 + $0x8] sm:$0xf]
  %v294 = vld [vmem:[%s5 + $0xc] sm:$0xf]
  %v295 = vld [vmem:[%s5 + $0x10] sm:$0xf]
  %v296 = vld [vmem:[%s5 + $0x14] sm:$0xf]
  %v297 = vld [vmem:[%s5 + $0x18] sm:$0xf]
  %v298 = vld [vmem:[%s5 + $0x1c] sm:$0xf]
  %v299 = vld [vmem:[%s5 + $0x20] sm:$0xf]
  %v300 = vld [vmem:[%s5 + $0x24] sm:$0xf]
  %v301 = vld [vmem:[%s5 + $0x28] sm:$0xf]
  %v302 = vld [vmem:[%s5 + $0x2c] sm:$0xf]
  %v303 = vld [vmem:[%s5 + $0x30] sm:$0xf]
  %v304 = vld [vmem:[%s5 + $0x34] sm:$0xf]
  %v305 = vld [vmem:[%s5 + $0x38] sm:$0xf]
  %v306 = vld [vmem:[%s5 + $0x3c] sm:$0xf]
  %v307 = vld [vmem:[%s7] sm:$0xf]
  %v308 = vld [vmem:[%s7 + $0x4] sm:$0xf]
  %v309 = vld [vmem:[%s7 + $0x8] sm:$0xf]
  %v310 = vld [vmem:[%s7 + $0xc] sm:$0xf]
  %v311 = vld [vmem:[%s7 + $0x10] sm:$0xf]
  %v312 = vld [vmem:[%s7 + $0x14] sm:$0xf]
  %v313 = vld [vmem:[%s7 + $0x18] sm:$0xf]
  %v314 = vld [vmem:[%s7 + $0x1c] sm:$0xf]
  %v315 = vld [vmem:[%s7 + $0x20] sm:$0xf]
  %v316 = vld [vmem:[%s7 + $0x24] sm:$0xf]
  %v317 = vld [vmem:[%s7 + $0x28] sm:$0xf]
  %v318 = vld [vmem:[%s7 + $0x2c] sm:$0xf]
  %v319 = vld [vmem:[%s7 + $0x30] sm:$0xf]
  %v320 = vld [vmem:[%s7 + $0x34] sm:$0xf]
  %v321 = vld [vmem:[%s7 + $0x38] sm:$0xf]
  %v322 = vld [vmem:[%s7 + $0x3c] sm:$0xf]
  %v323 = vld [vmem:[%s9] sm:$0xf]
  %v324 = vld [vmem:[%s9 + $0x4] sm:$0xf]
  %v325 = vld [vmem:[%s9 + $0x8] sm:$0xf]
  %v326 = vld [vmem:[%s9 + $0xc] sm:$0xf]
  %v327 = vld [vmem:[%s9 + $0x10] sm:$0xf]
  %v328 = vld [vmem:[%s9 + $0x14] sm:$0xf]
  %v329 = vld [vmem:[%s9 + $0x18] sm:$0xf]
  %v330 = vld [vmem:[%s9 + $0x1c] sm:$0xf]
  %v331 = vld [vmem:[%s11] sm:$0xf]
  %v332 = vld [vmem:[%s11 + $0x4] sm:$0xf]
  %v333 = vld [vmem:[%s13] sm:$0x1]
  %v334 = vld [vmem:[%s15] sm:$0xf]
  %v335 = vld [vmem:[%s15 + $0x4] sm:$0xf]
  %v336 = vld [vmem:[%s15 + $0x8] sm:$0xf]
  %v337 = vld [vmem:[%s15 + $0xc] sm:$0xf]
  %v338 = vld [vmem:[%s17] sm:$0x1]
  %v339 = vld [vmem:[%s19] sm:$0xf]
  %v340 = vld [vmem:[%s19 + $0x4] sm:$0xf]
  %v341 = vld [vmem:[%s19 + $0x8] sm:$0xf]
  %v342 = vld [vmem:[%s19 + $0xc] sm:$0xf]
  %v343 = vld [vmem:[%s21] sm:$0x1]
  %v344 = vld [vmem:[%s23] sm:$0x1]
  %v345 = vld [vmem:[%s25] sm:$0x1]
  %v346 = vld [vmem:[%s27] sm:$0xf]
  %v347 = vld [vmem:[%s29] sm:$0x1]
  %v348 = vld [vmem:[%s31] sm:$0xf]
  %v349 = vld [vmem:[%s31 + $0x4] sm:$0xf]
  %v350 = vld [vmem:[%s31 + $0x8] sm:$0xf]
  %v351 = vld [vmem:[%s31 + $0xc] sm:$0xf]
  %v352 = vld [vmem:[%s33] sm:$0x1]
  %v353 = vld [vmem:[%s35] sm:$0xf]
  %v354 = vld [vmem:[%s35 + $0x4] sm:$0xf]
  %v355 = vld [vmem:[%s35 + $0x8] sm:$0xf]
  %v356 = vld [vmem:[%s35 + $0xc] sm:$0xf]
  %v357 = vld [vmem:[%s37] sm:$0x1]
  %v358 = vld [vmem:[%s39] sm:$0x1]
  %v359 = vld [vmem:[%s41] sm:$0x1]
  %v360 = vld [vmem:[%s43] sm:$0xf]
  %v361 = vld [vmem:[%s43 + $0x4] sm:$0xf]
  %v362 = vld [vmem:[%s43 + $0x8] sm:$0xf]
  %v363 = vld [vmem:[%s43 + $0xc] sm:$0xf]
  %v364 = vld [vmem:[%s45] sm:$0xf]
  %v365 = vld [vmem:[%s45 + $0x4] sm:$0xf]
  %v366 = vld [vmem:[%s45 + $0x8] sm:$0xf]
  %v367 = vld [vmem:[%s45 + $0xc] sm:$0xf]
  %v368 = vld [vmem:[%s47] sm:$0xf]
  %v369 = vld [vmem:[%s47 + $0x4] sm:$0xf]
  %v370 = vld [vmem:[%s47 + $0x8] sm:$0xf]
  %v371 = vld [vmem:[%s47 + $0xc] sm:$0xf]
  %v372 = vld [vmem:[%s49] sm:$0x1]
  %v373 = vld [vmem:[%s51] sm:$0xf]
  %v374 = vld [vmem:[%s51 + $0x4] sm:$0xf]
  %v375 = vld [vmem:[%s51 + $0x8] sm:$0xf]
  %v376 = vld [vmem:[%s51 + $0xc] sm:$0xf]
  %v377 = vld [vmem:[%s53] sm:$0x1]
  %v378 = vld [vmem:[%s55] sm:$0xf]
  %v379 = vld [vmem:[%s55 + $0x4] sm:$0xf]
  %v380 = vld [vmem:[%s55 + $0x8] sm:$0xf]
  %v381 = vld [vmem:[%s55 + $0xc] sm:$0xf]
  %v382 = vld [vmem:[%s57] sm:$0x1]
  %v383 = vld [vmem:[%s59] sm:$0x1]
  %v384 = vld [vmem:[%s61] sm:$0x1]
  %v385 = vld [vmem:[%s63] sm:$0xf]
  %v386 = vld [vmem:[%s63 + $0x4] sm:$0xf]
  %v387 = vld [vmem:[%s63 + $0x8] sm:$0xf]
  %v388 = vld [vmem:[%s63 + $0xc] sm:$0xf]
  %v389 = vld [vmem:[%s65] sm:$0xf]
  %v390 = vld [vmem:[%s65 + $0x4] sm:$0xf]
  %v391 = vld [vmem:[%s65 + $0x8] sm:$0xf]
  %v392 = vld [vmem:[%s65 + $0xc] sm:$0xf]
  %v393 = vld [vmem:[%s67] sm:$0x1]
  %v394 = vld [vmem:[%s69] sm:$0xf]
  %v395 = vld [vmem:[%s69 + $0x4] sm:$0xf]
  %v396 = vld [vmem:[%s69 + $0x8] sm:$0xf]
  %v397 = vld [vmem:[%s69 + $0xc] sm:$0xf]
  %v398 = vld [vmem:[%s71] sm:$0x1]
  %v399 = vld [vmem:[%s73] sm:$0xf]
  %v400 = vld [vmem:[%s73 + $0x4] sm:$0xf]
  %v401 = vld [vmem:[%s73 + $0x8] sm:$0xf]
  %v402 = vld [vmem:[%s73 + $0xc] sm:$0xf]
  %v403 = vld [vmem:[%s75] sm:$0x1]
  %v404 = vld [vmem:[%s77] sm:$0x1]
  %v405 = vld [vmem:[%s79] sm:$0x1]
  %v406 = vld [vmem:[%s81] sm:$0xf]
  %v407 = vld [vmem:[%s81 + $0x4] sm:$0xf]
  %v408 = vld [vmem:[%s81 + $0x8] sm:$0xf]
  %v409 = vld [vmem:[%s81 + $0xc] sm:$0xf]
  %v410 = vld [vmem:[%s83] sm:$0xf]
  %v411 = vld [vmem:[%s83 + $0x4] sm:$0xf]
  %v412 = vld [vmem:[%s83 + $0x8] sm:$0xf]
  %v413 = vld [vmem:[%s83 + $0xc] sm:$0xf]
  %v414 = vld [vmem:[%s85] sm:$0xf]
  %v415 = vld [vmem:[%s85 + $0x4] sm:$0xf]
  %v416 = vld [vmem:[%s85 + $0x8] sm:$0xf]
  %v417 = vld [vmem:[%s85 + $0xc] sm:$0xf]
  %v418 = vld [vmem:[%s87] sm:$0x1]
  %v419 = vld [vmem:[%s89] sm:$0xf]
  %v420 = vld [vmem:[%s89 + $0x4] sm:$0xf]
  %v421 = vld [vmem:[%s89 + $0x8] sm:$0xf]
  %v422 = vld [vmem:[%s89 + $0xc] sm:$0xf]
  %v423 = vld [vmem:[%s91] sm:$0x1]
  %v424 = vld [vmem:[%s93] sm:$0xf]
  %v425 = vld [vmem:[%s93 + $0x4] sm:$0xf]
  %v426 = vld [vmem:[%s93 + $0x8] sm:$0xf]
  %v427 = vld [vmem:[%s93 + $0xc] sm:$0xf]
  %v428 = vld [vmem:[%s95] sm:$0x1]
  %v429 = vld [vmem:[%s97] sm:$0x1]
  %v430 = vld [vmem:[%s99] sm:$0x1]
  %v431 = vld [vmem:[%s101] sm:$0xf]
  %v432 = vld [vmem:[%s101 + $0x4] sm:$0xf]
  %v433 = vld [vmem:[%s101 + $0x8] sm:$0xf]
  %v434 = vld [vmem:[%s101 + $0xc] sm:$0xf]
  %v435 = vld [vmem:[%s103] sm:$0xf]
  %v436 = vld [vmem:[%s103 + $0x4] sm:$0xf]
  %v437 = vld [vmem:[%s103 + $0x8] sm:$0xf]
  %v438 = vld [vmem:[%s103 + $0xc] sm:$0xf]
  %v439 = vld [vmem:[%s105] sm:$0x1]
  %v440 = vld [vmem:[%s107] sm:$0xf]
  %v441 = vld [vmem:[%s107 + $0x4] sm:$0xf]
  %v442 = vld [vmem:[%s107 + $0x8] sm:$0xf]
  %v443 = vld [vmem:[%s107 + $0xc] sm:$0xf]
  %v444 = vld [vmem:[%s109] sm:$0x1]
  %v445 = vld [vmem:[%s111] sm:$0xf]
  %v446 = vld [vmem:[%s111 + $0x4] sm:$0xf]
  %v447 = vld [vmem:[%s111 + $0x8] sm:$0xf]
  %v448 = vld [vmem:[%s111 + $0xc] sm:$0xf]
  %v449 = vld [vmem:[%s113] sm:$0x1]
  %v450 = vld [vmem:[%s115] sm:$0x1]
  %v451 = vld [vmem:[%s117] sm:$0x1]
  %v452 = vld [vmem:[%s119] sm:$0xf]
  %v453 = vld [vmem:[%s119 + $0x4] sm:$0xf]
  %v454 = vld [vmem:[%s119 + $0x8] sm:$0xf]
  %v455 = vld [vmem:[%s119 + $0xc] sm:$0xf]
  %v456 = vld [vmem:[%s121] sm:$0x1]
  %v457 = vld [vmem:[%s123] sm:$0xf]
  %v458 = vld [vmem:[%s123 + $0x4] sm:$0xf]
  %v459 = vld [vmem:[%s123 + $0x8] sm:$0xf]
  %v460 = vld [vmem:[%s123 + $0xc] sm:$0xf]
  %v461 = vld [vmem:[%s125] sm:$0x1]
  %v462 = vld [vmem:[%s127] sm:$0xf]
  %v463 = vld [vmem:[%s127 + $0x4] sm:$0xf]
  %v464 = vld [vmem:[%s127 + $0x8] sm:$0xf]
  %v465 = vld [vmem:[%s127 + $0xc] sm:$0xf]
  %v466 = vld [vmem:[%s129] sm:$0x1]
  %v467 = vpack.c.bf16 %v268, %v267
  %v468 = vpack.c.bf16 %v270, %v269
  %v469 = vpack.c.bf16 %v272, %v271
  %v470 = vpack.c.bf16 %v274, %v273
  %v472 = vlaneseq
  %v473 = vshrl.u32 %v472, 7
  %v474 = vsub.s32 0, %v473
  %v475 = vrot.slane %v333, %v474
  %v479 = vunpack.c.l.b16 %v331
  %v480 = vunpack.c.l.b16 %v332
  %v481 = vpack.c.b16 %v480, %v479
  %vm483 = vcmask 130048
  %v485 = vsel %vm483, %v467, 0
  %v488 = vsel %vm483, %v468, 0
  %v491 = vsel %vm483, %v469, 0
  %v494 = vsel %vm483, %v470, 0
  %496 = vmatprep.subr.bf16.mxu0 0
  %497 = vmatpush1.bf16.msra.mxu0 0
  %498 = vmatprep.subr.bf16.mxu0 0
  %499 = vmatpush1.bf16.msra.mxu0 0
  %500 = vmatprep.subr.bf16.mxu0 0
  %501 = vmatpush1.bf16.msra.mxu0 0
  %502 = vmatprep.subr.bf16.mxu0 0
  %503 = vmatpush1.bf16.msra.mxu0 0
  %504 = vmatprep.subr.bf16.mxu0 0
  %505 = vmatpush1.bf16.msra.mxu0 0
  %506 = vmatprep.subr.bf16.mxu0 0
  %507 = vmatpush1.bf16.msra.mxu0 0
  %508 = vmatprep.subr.bf16.mxu0 0
  %509 = vmatpush1.bf16.msra.mxu0 0
  %510 = vmatprep.subr.bf16.mxu0 0
  %511 = vmatpush1.bf16.msra.mxu0 %v481
  %512 = vmatprep.subr.bf16.mxu0 0
  %513 = vmatpush2.bf16.msra.mxu0 0
  %514 = vmatprep.subr.bf16.mxu0 0
  %515 = vmatpush2.bf16.msra.mxu0 0
  %516 = vmatprep.subr.bf16.mxu0 0
  %517 = vmatpush2.bf16.msra.mxu0 0
  %518 = vmatprep.subr.bf16.mxu0 0
  %519 = vmatpush2.bf16.msra.mxu0 0
  %520 = vmatprep.subr.bf16.mxu0 0
  %521 = vmatpush2.bf16.msra.mxu0 0
  %522 = vmatprep.subr.bf16.mxu0 0
  %523 = vmatpush2.bf16.msra.mxu0 0
  %524 = vmatprep.subr.bf16.mxu0 0
  %525 = vmatpush2.bf16.msra.mxu0 0
  %526 = vmatprep.subr.bf16.mxu0 0
  %527 = vmatpush2.bf16.msra.mxu0 0
  %528 = vmatprep.mubr.bf16.mxu0 0
  %529 = vmatmul.mubr.bf16.gmra.mxu0 %v485
  %v530 = vpop.f32.mrf.mxu0
  %v531 = vadd.f32 %v475, %v530
  %v532 = vpop.f32.mrf.mxu0
  %v533 = vpop.f32.mrf.mxu0
  %v534 = vadd.f32 %v475, %v533
  %v535 = vpop.f32.mrf.mxu0
  %536 = vmatprep.mubr.bf16.mxu0 0
  %537 = vmatmul.mubr.bf16.gmra.mxu0 %v488
  %v538 = vpop.f32.mrf.mxu0
  %v539 = vadd.f32 %v475, %v538
  %v540 = vpop.f32.mrf.mxu0
  %v541 = vpop.f32.mrf.mxu0
  %v542 = vadd.f32 %v475, %v541
  %v543 = vpop.f32.mrf.mxu0
  %544 = vmatprep.mubr.bf16.mxu0 0
  %545 = vmatmul.mubr.bf16.gmra.mxu0 %v491
  %v546 = vpop.f32.mrf.mxu0
  %v547 = vadd.f32 %v475, %v546
  %v548 = vpop.f32.mrf.mxu0
  %v549 = vpop.f32.mrf.mxu0
  %v550 = vadd.f32 %v475, %v549
  %v551 = vpop.f32.mrf.mxu0
  %552 = vmatprep.mubr.bf16.mxu0 0
  %553 = vmatmul.mubr.bf16.gmra.mxu0 %v494
  %v554 = vpop.f32.mrf.mxu0
  %v555 = vadd.f32 %v475, %v554
  %v556 = vpop.f32.mrf.mxu0
  %v557 = vpop.f32.mrf.mxu0
  %v558 = vadd.f32 %v475, %v557
  %v559 = vpop.f32.mrf.mxu0
  %560 = vdwg.mxu0
  %v561 = vmax.f32 %v531, 0.0
  %v562 = vmax.f32 %v534, 0.0
  %v563 = vmax.f32 %v539, 0.0
  %v564 = vmax.f32 %v542, 0.0
  %v565 = vmax.f32 %v547, 0.0
  %v566 = vmax.f32 %v550, 0.0
  %v567 = vmax.f32 %v555, 0.0
  %v568 = vmax.f32 %v558, 0.0
  %v569 = vpack.c.bf16 %v562, %v561
  %v570 = vpack.c.bf16 %v564, %v563
  %v571 = vpack.c.bf16 %v566, %v565
  %v572 = vpack.c.bf16 %v568, %v567
  %v574 = vlaneseq
  %v575 = vshrl.u32 %v574, 7
  %v576 = vsub.s32 0, %v575
  %v577 = vrot.slane %v338, %v576
  %v583 = vunpack.c.l.b16 %v334
  %v584 = vunpack.c.l.b16 %v335
  %v585 = vunpack.c.l.b16 %v336
  %v586 = vunpack.c.l.b16 %v337
  %v587 = vpack.c.b16 %v584, %v583
  %v588 = vpack.c.b16 %v586, %v585
  %vm591 = vcmask 261120
  %v593 = vsel %vm591, %v569, 0
  %v596 = vsel %vm591, %v570, 0
  %v599 = vsel %vm591, %v571, 0
  %v602 = vsel %vm591, %v572, 0
  %604 = vmatprep.subr.bf16.mxu0 0
  %605 = vmatpush1.bf16.msra.mxu0 0
  %606 = vmatprep.subr.bf16.mxu0 0
  %607 = vmatpush1.bf16.msra.mxu0 0
  %608 = vmatprep.subr.bf16.mxu0 0
  %609 = vmatpush1.bf16.msra.mxu0 0
  %610 = vmatprep.subr.bf16.mxu0 0
  %611 = vmatpush1.bf16.msra.mxu0 0
  %612 = vmatprep.subr.bf16.mxu0 0
  %613 = vmatpush1.bf16.msra.mxu0 0
  %614 = vmatprep.subr.bf16.mxu0 0
  %615 = vmatpush1.bf16.msra.mxu0 0
  %616 = vmatprep.subr.bf16.mxu0 0
  %617 = vmatpush1.bf16.msra.mxu0 %v588
  %618 = vmatprep.subr.bf16.mxu0 0
  %619 = vmatpush1.bf16.msra.mxu0 %v587
  %620 = vmatprep.subr.bf16.mxu0 0
  %621 = vmatpush2.bf16.msra.mxu0 0
  %622 = vmatprep.subr.bf16.mxu0 0
  %623 = vmatpush2.bf16.msra.mxu0 0
  %624 = vmatprep.subr.bf16.mxu0 0
  %625 = vmatpush2.bf16.msra.mxu0 0
  %626 = vmatprep.subr.bf16.mxu0 0
  %627 = vmatpush2.bf16.msra.mxu0 0
  %628 = vmatprep.subr.bf16.mxu0 0
  %629 = vmatpush2.bf16.msra.mxu0 0
  %630 = vmatprep.subr.bf16.mxu0 0
  %631 = vmatpush2.bf16.msra.mxu0 0
  %632 = vmatprep.subr.bf16.mxu0 0
  %633 = vmatpush2.bf16.msra.mxu0 0
  %634 = vmatprep.subr.bf16.mxu0 0
  %635 = vmatpush2.bf16.msra.mxu0 0
  %636 = vmatprep.mubr.bf16.mxu0 0
  %637 = vmatmul.mubr.bf16.gmra.mxu0 %v593
  %v638 = vpop.f32.mrf.mxu0
  %v639 = vadd.f32 %v577, %v638
  %v640 = vpop.f32.mrf.mxu0
  %v641 = vpop.f32.mrf.mxu0
  %v642 = vadd.f32 %v577, %v641
  %v643 = vpop.f32.mrf.mxu0
  %644 = vmatprep.mubr.bf16.mxu0 0
  %645 = vmatmul.mubr.bf16.gmra.mxu0 %v596
  %v646 = vpop.f32.mrf.mxu0
  %v647 = vadd.f32 %v577, %v646
  %v648 = vpop.f32.mrf.mxu0
  %v649 = vpop.f32.mrf.mxu0
  %v650 = vadd.f32 %v577, %v649
  %v651 = vpop.f32.mrf.mxu0
  %652 = vmatprep.mubr.bf16.mxu0 0
  %653 = vmatmul.mubr.bf16.gmra.mxu0 %v599
  %v654 = vpop.f32.mrf.mxu0
  %v655 = vadd.f32 %v577, %v654
  %v656 = vpop.f32.mrf.mxu0
  %v657 = vpop.f32.mrf.mxu0
  %v658 = vadd.f32 %v577, %v657
  %v659 = vpop.f32.mrf.mxu0
  %660 = vmatprep.mubr.bf16.mxu0 0
  %661 = vmatmul.mubr.bf16.gmra.mxu0 %v602
  %v662 = vpop.f32.mrf.mxu0
  %v663 = vadd.f32 %v577, %v662
  %v664 = vpop.f32.mrf.mxu0
  %v665 = vpop.f32.mrf.mxu0
  %v666 = vadd.f32 %v577, %v665
  %v667 = vpop.f32.mrf.mxu0
  %668 = vdwg.mxu0
  %v669 = vmax.f32 %v639, 0.0
  %v670 = vmax.f32 %v642, 0.0
  %v671 = vmax.f32 %v647, 0.0
  %v672 = vmax.f32 %v650, 0.0
  %v673 = vmax.f32 %v655, 0.0
  %v674 = vmax.f32 %v658, 0.0
  %v675 = vmax.f32 %v663, 0.0
  %v676 = vmax.f32 %v666, 0.0
  %v677 = vpack.c.bf16 %v670, %v669
  %v678 = vpack.c.bf16 %v672, %v671
  %v679 = vpack.c.bf16 %v674, %v673
  %v680 = vpack.c.bf16 %v676, %v675
  %v682 = vlaneseq
  %v683 = vshrl.u32 %v682, 7
  %v684 = vsub.s32 0, %v683
  %v685 = vrot.slane %v343, %v684
  %v691 = vunpack.c.l.b16 %v339
  %v692 = vunpack.c.l.b16 %v340
  %v693 = vunpack.c.l.b16 %v341
  %v694 = vunpack.c.l.b16 %v342
  %v695 = vpack.c.b16 %v692, %v691
  %v696 = vpack.c.b16 %v694, %v693
  %v700 = vsel %vm591, %v677, 0
  %v703 = vsel %vm591, %v678, 0
  %v706 = vsel %vm591, %v679, 0
  %v709 = vsel %vm591, %v680, 0
  %711 = vmatprep.subr.bf16.mxu0 0
  %712 = vmatpush1.bf16.msra.mxu0 0
  %713 = vmatprep.subr.bf16.mxu0 0
  %714 = vmatpush1.bf16.msra.mxu0 0
  %715 = vmatprep.subr.bf16.mxu0 0
  %716 = vmatpush1.bf16.msra.mxu0 0
  %717 = vmatprep.subr.bf16.mxu0 0
  %718 = vmatpush1.bf16.msra.mxu0 0
  %719 = vmatprep.subr.bf16.mxu0 0
  %720 = vmatpush1.bf16.msra.mxu0 0
  %721 = vmatprep.subr.bf16.mxu0 0
  %722 = vmatpush1.bf16.msra.mxu0 0
  %723 = vmatprep.subr.bf16.mxu0 0
  %724 = vmatpush1.bf16.msra.mxu0 %v696
  %725 = vmatprep.subr.bf16.mxu0 0
  %726 = vmatpush1.bf16.msra.mxu0 %v695
  %727 = vmatprep.subr.bf16.mxu0 0
  %728 = vmatpush2.bf16.msra.mxu0 0
  %729 = vmatprep.subr.bf16.mxu0 0
  %730 = vmatpush2.bf16.msra.mxu0 0
  %731 = vmatprep.subr.bf16.mxu0 0
  %732 = vmatpush2.bf16.msra.mxu0 0
  %733 = vmatprep.subr.bf16.mxu0 0
  %734 = vmatpush2.bf16.msra.mxu0 0
  %735 = vmatprep.subr.bf16.mxu0 0
  %736 = vmatpush2.bf16.msra.mxu0 0
  %737 = vmatprep.subr.bf16.mxu0 0
  %738 = vmatpush2.bf16.msra.mxu0 0
  %739 = vmatprep.subr.bf16.mxu0 0
  %740 = vmatpush2.bf16.msra.mxu0 0
  %741 = vmatprep.subr.bf16.mxu0 0
  %742 = vmatpush2.bf16.msra.mxu0 0
  %743 = vmatprep.mubr.bf16.mxu0 0
  %744 = vmatmul.mubr.bf16.gmra.mxu0 %v700
  %v745 = vpop.f32.mrf.mxu0
  %v746 = vadd.f32 %v685, %v745
  %v747 = vpop.f32.mrf.mxu0
  %v748 = vpop.f32.mrf.mxu0
  %v749 = vadd.f32 %v685, %v748
  %v750 = vpop.f32.mrf.mxu0
  %751 = vmatprep.mubr.bf16.mxu0 0
  %752 = vmatmul.mubr.bf16.gmra.mxu0 %v703
  %v753 = vpop.f32.mrf.mxu0
  %v754 = vadd.f32 %v685, %v753
  %v755 = vpop.f32.mrf.mxu0
  %v756 = vpop.f32.mrf.mxu0
  %v757 = vadd.f32 %v685, %v756
  %v758 = vpop.f32.mrf.mxu0
  %759 = vmatprep.mubr.bf16.mxu0 0
  %760 = vmatmul.mubr.bf16.gmra.mxu0 %v706
  %v761 = vpop.f32.mrf.mxu0
  %v762 = vadd.f32 %v685, %v761
  %v763 = vpop.f32.mrf.mxu0
  %v764 = vpop.f32.mrf.mxu0
  %v765 = vadd.f32 %v685, %v764
  %v766 = vpop.f32.mrf.mxu0
  %767 = vmatprep.mubr.bf16.mxu0 0
  %768 = vmatmul.mubr.bf16.gmra.mxu0 %v709
  %v769 = vpop.f32.mrf.mxu0
  %v770 = vadd.f32 %v685, %v769
  %v771 = vpop.f32.mrf.mxu0
  %v772 = vpop.f32.mrf.mxu0
  %v773 = vadd.f32 %v685, %v772
  %v774 = vpop.f32.mrf.mxu0
  %775 = vdwg.mxu0
  %v776 = vsel %vm591, %v746, 0.0
  %777 = vadd.xlane.f32.xlu0 %v776
  %v778 = vpop.xlane.xlu0 %777
  %v779 = vsel %vm591, %v749, 0.0
  %780 = vadd.xlane.f32.xlu0 %v779
  %v781 = vpop.xlane.xlu0 %780
  %v782 = vsel %vm591, %v754, 0.0
  %783 = vadd.xlane.f32.xlu0 %v782
  %v784 = vpop.xlane.xlu0 %783
  %v785 = vsel %vm591, %v757, 0.0
  %786 = vadd.xlane.f32.xlu0 %v785
  %v787 = vpop.xlane.xlu0 %786
  %v788 = vsel %vm591, %v762, 0.0
  %789 = vadd.xlane.f32.xlu0 %v788
  %v790 = vpop.xlane.xlu0 %789
  %v791 = vsel %vm591, %v765, 0.0
  %792 = vadd.xlane.f32.xlu0 %v791
  %v793 = vpop.xlane.xlu0 %792
  %v794 = vsel %vm591, %v770, 0.0
  %795 = vadd.xlane.f32.xlu0 %v794
  %v796 = vpop.xlane.xlu0 %795
  %v797 = vsel %vm591, %v773, 0.0
  %798 = vadd.xlane.f32.xlu0 %v797
  %v799 = vpop.xlane.xlu0 %798
  %v800 = vrcp.pop 32.0
  %v801 = vmul.f32 %v778, %v800
  %v802 = vmul.f32 %v781, %v800
  %v803 = vmul.f32 %v784, %v800
  %v804 = vmul.f32 %v787, %v800
  %v805 = vmul.f32 %v790, %v800
  %v806 = vmul.f32 %v793, %v800
  %v807 = vmul.f32 %v796, %v800
  %v808 = vmul.f32 %v799, %v800
  %v809 = vsub.f32 %v746, %v801
  %v810 = vsub.f32 %v749, %v802
  %v811 = vsub.f32 %v754, %v803
  %v812 = vsub.f32 %v757, %v804
  %v813 = vsub.f32 %v762, %v805
  %v814 = vsub.f32 %v765, %v806
  %v815 = vsub.f32 %v770, %v807
  %v816 = vsub.f32 %v773, %v808
  %v817 = vmul.f32 %v809, %v809
  %v818 = vmul.f32 %v810, %v810
  %v819 = vmul.f32 %v811, %v811
  %v820 = vmul.f32 %v812, %v812
  %v821 = vmul.f32 %v813, %v813
  %v822 = vmul.f32 %v814, %v814
  %v823 = vmul.f32 %v815, %v815
  %v824 = vmul.f32 %v816, %v816
  %v825 = vsel %vm591, %v817, 0.0
  %826 = vadd.xlane.f32.xlu0 %v825
  %v827 = vpop.xlane.xlu0 %826
  %v828 = vsel %vm591, %v818, 0.0
  %829 = vadd.xlane.f32.xlu0 %v828
  %v830 = vpop.xlane.xlu0 %829
  %v831 = vsel %vm591, %v819, 0.0
  %832 = vadd.xlane.f32.xlu0 %v831
  %v833 = vpop.xlane.xlu0 %832
  %v834 = vsel %vm591, %v820, 0.0
  %835 = vadd.xlane.f32.xlu0 %v834
  %v836 = vpop.xlane.xlu0 %835
  %v837 = vsel %vm591, %v821, 0.0
  %838 = vadd.xlane.f32.xlu0 %v837
  %v839 = vpop.xlane.xlu0 %838
  %v840 = vsel %vm591, %v822, 0.0
  %841 = vadd.xlane.f32.xlu0 %v840
  %v842 = vpop.xlane.xlu0 %841
  %v843 = vsel %vm591, %v823, 0.0
  %844 = vadd.xlane.f32.xlu0 %v843
  %v845 = vpop.xlane.xlu0 %844
  %v846 = vsel %vm591, %v824, 0.0
  %847 = vadd.xlane.f32.xlu0 %v846
  %v848 = vpop.xlane.xlu0 %847
  %v849 = vmul.f32 %v827, %v800
  %v850 = vmul.f32 %v830, %v800
  %v851 = vmul.f32 %v833, %v800
  %v852 = vmul.f32 %v836, %v800
  %v853 = vmul.f32 %v839, %v800
  %v854 = vmul.f32 %v842, %v800
  %v855 = vmul.f32 %v845, %v800
  %v856 = vmul.f32 %v848, %v800
  %v857 = vadd.f32 %v849, 1e-05
  %v858 = vadd.f32 %v850, 1e-05
  %v859 = vadd.f32 %v851, 1e-05
  %v860 = vadd.f32 %v852, 1e-05
  %v861 = vadd.f32 %v853, 1e-05
  %v862 = vadd.f32 %v854, 1e-05
  %v863 = vadd.f32 %v855, 1e-05
  %v864 = vadd.f32 %v856, 1e-05
  %v865 = vrsqrt.pop %v857
  %v866 = vrsqrt.pop %v858
  %v867 = vrsqrt.pop %v859
  %v868 = vrsqrt.pop %v860
  %v869 = vrsqrt.pop %v861
  %v870 = vrsqrt.pop %v862
  %v871 = vrsqrt.pop %v863
  %v872 = vrsqrt.pop %v864
  %v873 = vmul.f32 %v809, %v865
  %v874 = vmul.f32 %v810, %v866
  %v875 = vmul.f32 %v811, %v867
  %v876 = vmul.f32 %v812, %v868
  %v877 = vmul.f32 %v813, %v869
  %v878 = vmul.f32 %v814, %v870
  %v879 = vmul.f32 %v815, %v871
  %v880 = vmul.f32 %v816, %v872
  %v882 = vlaneseq
  %v883 = vshrl.u32 %v882, 7
  %v884 = vsub.s32 0, %v883
  %v885 = vrot.slane %v344, %v884
  %v887 = vmul.f32 %v873, %v885
  %v888 = vmul.f32 %v874, %v885
  %v889 = vmul.f32 %v875, %v885
  %v890 = vmul.f32 %v876, %v885
  %v891 = vmul.f32 %v877, %v885
  %v892 = vmul.f32 %v878, %v885
  %v893 = vmul.f32 %v879, %v885
  %v894 = vmul.f32 %v880, %v885
  %v896 = vlaneseq
  %v897 = vshrl.u32 %v896, 7
  %v898 = vsub.s32 0, %v897
  %v899 = vrot.slane %v345, %v898
  %v901 = vadd.f32 %v887, %v899
  %v902 = vadd.f32 %v888, %v899
  %v903 = vadd.f32 %v889, %v899
  %v904 = vadd.f32 %v890, %v899
  %v905 = vadd.f32 %v891, %v899
  %v906 = vadd.f32 %v892, %v899
  %v907 = vadd.f32 %v893, %v899
  %v908 = vadd.f32 %v894, %v899
  %v909 = vpack.c.bf16 %v276, %v275
  %v910 = vpack.c.bf16 %v278, %v277
  %v911 = vpack.c.bf16 %v280, %v279
  %v912 = vpack.c.bf16 %v282, %v281
  %v913 = vpack.c.bf16 %v284, %v283
  %v914 = vpack.c.bf16 %v286, %v285
  %v915 = vpack.c.bf16 %v288, %v287
  %v916 = vpack.c.bf16 %v290, %v289
  %v918 = vlaneseq
  %v919 = vshrl.u32 %v918, 7
  %v920 = vsub.s32 0, %v919
  %v921 = vrot.slane %v347, %v920
  %vm923 = vcmask 64512
  %v925 = vsel %vm923, %v909, 0
  %v928 = vsel %vm923, %v910, 0
  %v931 = vsel %vm923, %v911, 0
  %v934 = vsel %vm923, %v912, 0
  %v937 = vsel %vm923, %v913, 0
  %v940 = vsel %vm923, %v914, 0
  %v943 = vsel %vm923, %v915, 0
  %v946 = vsel %vm923, %v916, 0
  %vm948 = vcmask 1043456
  %v950 = vsel %vm948, %v346, 0
  %952 = vmatprep.subr.bf16.mxu0 0
  %953 = vmatpush1.bf16.msra.mxu0 0
  %954 = vmatprep.subr.bf16.mxu0 0
  %955 = vmatpush1.bf16.msra.mxu0 0
  %956 = vmatprep.subr.bf16.mxu0 0
  %957 = vmatpush1.bf16.msra.mxu0 0
  %958 = vmatprep.subr.bf16.mxu0 0
  %959 = vmatpush1.bf16.msra.mxu0 0
  %960 = vmatprep.subr.bf16.mxu0 0
  %961 = vmatpush1.bf16.msra.mxu0 0
  %962 = vmatprep.subr.bf16.mxu0 0
  %963 = vmatpush1.bf16.msra.mxu0 0
  %964 = vmatprep.subr.bf16.mxu0 0
  %965 = vmatpush1.bf16.msra.mxu0 0
  %966 = vmatprep.subr.bf16.mxu0 0
  %967 = vmatpush1.bf16.msra.mxu0 %v950
  %968 = vmatprep.subr.bf16.mxu0 0
  %969 = vmatpush2.bf16.msra.mxu0 0
  %970 = vmatprep.subr.bf16.mxu0 0
  %971 = vmatpush2.bf16.msra.mxu0 0
  %972 = vmatprep.subr.bf16.mxu0 0
  %973 = vmatpush2.bf16.msra.mxu0 0
  %974 = vmatprep.subr.bf16.mxu0 0
  %975 = vmatpush2.bf16.msra.mxu0 0
  %976 = vmatprep.subr.bf16.mxu0 0
  %977 = vmatpush2.bf16.msra.mxu0 0
  %978 = vmatprep.subr.bf16.mxu0 0
  %979 = vmatpush2.bf16.msra.mxu0 0
  %980 = vmatprep.subr.bf16.mxu0 0
  %981 = vmatpush2.bf16.msra.mxu0 0
  %982 = vmatprep.subr.bf16.mxu0 0
  %983 = vmatpush2.bf16.msra.mxu0 0
  %984 = vmatprep.mubr.bf16.mxu0 0
  %985 = vmatmul.mubr.bf16.gmra.mxu0 %v925
  %v986 = vpop.f32.mrf.mxu0
  %v987 = vadd.f32 %v921, %v986
  %v988 = vpop.f32.mrf.mxu0
  %v989 = vpop.f32.mrf.mxu0
  %v990 = vadd.f32 %v921, %v989
  %v991 = vpop.f32.mrf.mxu0
  %992 = vmatprep.mubr.bf16.mxu0 0
  %993 = vmatmul.mubr.bf16.gmra.mxu0 %v928
  %v994 = vpop.f32.mrf.mxu0
  %v995 = vadd.f32 %v921, %v994
  %v996 = vpop.f32.mrf.mxu0
  %v997 = vpop.f32.mrf.mxu0
  %v998 = vadd.f32 %v921, %v997
  %v999 = vpop.f32.mrf.mxu0
  %1000 = vmatprep.mubr.bf16.mxu0 0
  %1001 = vmatmul.mubr.bf16.gmra.mxu0 %v931
  %v1002 = vpop.f32.mrf.mxu0
  %v1003 = vadd.f32 %v921, %v1002
  %v1004 = vpop.f32.mrf.mxu0
  %v1005 = vpop.f32.mrf.mxu0
  %v1006 = vadd.f32 %v921, %v1005
  %v1007 = vpop.f32.mrf.mxu0
  %1008 = vmatprep.mubr.bf16.mxu0 0
  %1009 = vmatmul.mubr.bf16.gmra.mxu0 %v934
  %v1010 = vpop.f32.mrf.mxu0
  %v1011 = vadd.f32 %v921, %v1010
  %v1012 = vpop.f32.mrf.mxu0
  %v1013 = vpop.f32.mrf.mxu0
  %v1014 = vadd.f32 %v921, %v1013
  %v1015 = vpop.f32.mrf.mxu0
  %1016 = vmatprep.mubr.bf16.mxu0 0
  %1017 = vmatmul.mubr.bf16.gmra.mxu0 %v937
  %v1018 = vpop.f32.mrf.mxu0
  %v1019 = vadd.f32 %v921, %v1018
  %v1020 = vpop.f32.mrf.mxu0
  %v1021 = vpop.f32.mrf.mxu0
  %v1022 = vadd.f32 %v921, %v1021
  %v1023 = vpop.f32.mrf.mxu0
  %1024 = vmatprep.mubr.bf16.mxu0 0
  %1025 = vmatmul.mubr.bf16.gmra.mxu0 %v940
  %v1026 = vpop.f32.mrf.mxu0
  %v1027 = vadd.f32 %v921, %v1026
  %v1028 = vpop.f32.mrf.mxu0
  %v1029 = vpop.f32.mrf.mxu0
  %v1030 = vadd.f32 %v921, %v1029
  %v1031 = vpop.f32.mrf.mxu0
  %1032 = vmatprep.mubr.bf16.mxu0 0
  %1033 = vmatmul.mubr.bf16.gmra.mxu0 %v943
  %v1034 = vpop.f32.mrf.mxu0
  %v1035 = vadd.f32 %v921, %v1034
  %v1036 = vpop.f32.mrf.mxu0
  %v1037 = vpop.f32.mrf.mxu0
  %v1038 = vadd.f32 %v921, %v1037
  %v1039 = vpop.f32.mrf.mxu0
  %1040 = vmatprep.mubr.bf16.mxu0 0
  %1041 = vmatmul.mubr.bf16.gmra.mxu0 %v946
  %v1042 = vpop.f32.mrf.mxu0
  %v1043 = vadd.f32 %v921, %v1042
  %v1044 = vpop.f32.mrf.mxu0
  %v1045 = vpop.f32.mrf.mxu0
  %v1046 = vadd.f32 %v921, %v1045
  %v1047 = vpop.f32.mrf.mxu0
  %1048 = vdwg.mxu0
  %v1049 = vmax.f32 %v987, 0.0
  %v1050 = vmax.f32 %v990, 0.0
  %v1051 = vmax.f32 %v995, 0.0
  %v1052 = vmax.f32 %v998, 0.0
  %v1053 = vmax.f32 %v1003, 0.0
  %v1054 = vmax.f32 %v1006, 0.0
  %v1055 = vmax.f32 %v1011, 0.0
  %v1056 = vmax.f32 %v1014, 0.0
  %v1057 = vmax.f32 %v1019, 0.0
  %v1058 = vmax.f32 %v1022, 0.0
  %v1059 = vmax.f32 %v1027, 0.0
  %v1060 = vmax.f32 %v1030, 0.0
  %v1061 = vmax.f32 %v1035, 0.0
  %v1062 = vmax.f32 %v1038, 0.0
  %v1063 = vmax.f32 %v1043, 0.0
  %v1064 = vmax.f32 %v1046, 0.0
  %v1065 = vpack.c.bf16 %v1050, %v1049
  %v1066 = vpack.c.bf16 %v1052, %v1051
  %v1067 = vpack.c.bf16 %v1054, %v1053
  %v1068 = vpack.c.bf16 %v1056, %v1055
  %v1069 = vpack.c.bf16 %v1058, %v1057
  %v1070 = vpack.c.bf16 %v1060, %v1059
  %v1071 = vpack.c.bf16 %v1062, %v1061
  %v1072 = vpack.c.bf16 %v1064, %v1063
  %v1074 = vlaneseq
  %v1075 = vshrl.u32 %v1074, 7
  %v1076 = vsub.s32 0, %v1075
  %v1077 = vrot.slane %v352, %v1076
  %v1083 = vunpack.c.l.b16 %v348
  %v1084 = vunpack.c.l.b16 %v349
  %v1085 = vunpack.c.l.b16 %v350
  %v1086 = vunpack.c.l.b16 %v351
  %v1087 = vpack.c.b16 %v1084, %v1083
  %v1088 = vpack.c.b16 %v1086, %v1085
  %v1092 = vsel %vm591, %v1065, 0
  %v1095 = vsel %vm591, %v1066, 0
  %v1098 = vsel %vm591, %v1067, 0
  %v1101 = vsel %vm591, %v1068, 0
  %v1104 = vsel %vm591, %v1069, 0
  %v1107 = vsel %vm591, %v1070, 0
  %v1110 = vsel %vm591, %v1071, 0
  %v1113 = vsel %vm591, %v1072, 0
  %1115 = vmatprep.subr.bf16.mxu0 0
  %1116 = vmatpush1.bf16.msra.mxu0 0
  %1117 = vmatprep.subr.bf16.mxu0 0
  %1118 = vmatpush1.bf16.msra.mxu0 0
  %1119 = vmatprep.subr.bf16.mxu0 0
  %1120 = vmatpush1.bf16.msra.mxu0 0
  %1121 = vmatprep.subr.bf16.mxu0 0
  %1122 = vmatpush1.bf16.msra.mxu0 0
  %1123 = vmatprep.subr.bf16.mxu0 0
  %1124 = vmatpush1.bf16.msra.mxu0 0
  %1125 = vmatprep.subr.bf16.mxu0 0
  %1126 = vmatpush1.bf16.msra.mxu0 0
  %1127 = vmatprep.subr.bf16.mxu0 0
  %1128 = vmatpush1.bf16.msra.mxu0 %v1088
  %1129 = vmatprep.subr.bf16.mxu0 0
  %1130 = vmatpush1.bf16.msra.mxu0 %v1087
  %1131 = vmatprep.subr.bf16.mxu0 0
  %1132 = vmatpush2.bf16.msra.mxu0 0
  %1133 = vmatprep.subr.bf16.mxu0 0
  %1134 = vmatpush2.bf16.msra.mxu0 0
  %1135 = vmatprep.subr.bf16.mxu0 0
  %1136 = vmatpush2.bf16.msra.mxu0 0
  %1137 = vmatprep.subr.bf16.mxu0 0
  %1138 = vmatpush2.bf16.msra.mxu0 0
  %1139 = vmatprep.subr.bf16.mxu0 0
  %1140 = vmatpush2.bf16.msra.mxu0 0
  %1141 = vmatprep.subr.bf16.mxu0 0
  %1142 = vmatpush2.bf16.msra.mxu0 0
  %1143 = vmatprep.subr.bf16.mxu0 0
  %1144 = vmatpush2.bf16.msra.mxu0 0
  %1145 = vmatprep.subr.bf16.mxu0 0
  %1146 = vmatpush2.bf16.msra.mxu0 0
  %1147 = vmatprep.mubr.bf16.mxu0 0
  %1148 = vmatmul.mubr.bf16.gmra.mxu0 %v1092
  %v1149 = vpop.f32.mrf.mxu0
  %v1150 = vadd.f32 %v1077, %v1149
  %v1151 = vpop.f32.mrf.mxu0
  %v1152 = vpop.f32.mrf.mxu0
  %v1153 = vadd.f32 %v1077, %v1152
  %v1154 = vpop.f32.mrf.mxu0
  %1155 = vmatprep.mubr.bf16.mxu0 0
  %1156 = vmatmul.mubr.bf16.gmra.mxu0 %v1095
  %v1157 = vpop.f32.mrf.mxu0
  %v1158 = vadd.f32 %v1077, %v1157
  %v1159 = vpop.f32.mrf.mxu0
  %v1160 = vpop.f32.mrf.mxu0
  %v1161 = vadd.f32 %v1077, %v1160
  %v1162 = vpop.f32.mrf.mxu0
  %1163 = vmatprep.mubr.bf16.mxu0 0
  %1164 = vmatmul.mubr.bf16.gmra.mxu0 %v1098
  %v1165 = vpop.f32.mrf.mxu0
  %v1166 = vadd.f32 %v1077, %v1165
  %v1167 = vpop.f32.mrf.mxu0
  %v1168 = vpop.f32.mrf.mxu0
  %v1169 = vadd.f32 %v1077, %v1168
  %v1170 = vpop.f32.mrf.mxu0
  %1171 = vmatprep.mubr.bf16.mxu0 0
  %1172 = vmatmul.mubr.bf16.gmra.mxu0 %v1101
  %v1173 = vpop.f32.mrf.mxu0
  %v1174 = vadd.f32 %v1077, %v1173
  %v1175 = vpop.f32.mrf.mxu0
  %v1176 = vpop.f32.mrf.mxu0
  %v1177 = vadd.f32 %v1077, %v1176
  %v1178 = vpop.f32.mrf.mxu0
  %1179 = vmatprep.mubr.bf16.mxu0 0
  %1180 = vmatmul.mubr.bf16.gmra.mxu0 %v1104
  %v1181 = vpop.f32.mrf.mxu0
  %v1182 = vadd.f32 %v1077, %v1181
  %v1183 = vpop.f32.mrf.mxu0
  %v1184 = vpop.f32.mrf.mxu0
  %v1185 = vadd.f32 %v1077, %v1184
  %v1186 = vpop.f32.mrf.mxu0
  %1187 = vmatprep.mubr.bf16.mxu0 0
  %1188 = vmatmul.mubr.bf16.gmra.mxu0 %v1107
  %v1189 = vpop.f32.mrf.mxu0
  %v1190 = vadd.f32 %v1077, %v1189
  %v1191 = vpop.f32.mrf.mxu0
  %v1192 = vpop.f32.mrf.mxu0
  %v1193 = vadd.f32 %v1077, %v1192
  %v1194 = vpop.f32.mrf.mxu0
  %1195 = vmatprep.mubr.bf16.mxu0 0
  %1196 = vmatmul.mubr.bf16.gmra.mxu0 %v1110
  %v1197 = vpop.f32.mrf.mxu0
  %v1198 = vadd.f32 %v1077, %v1197
  %v1199 = vpop.f32.mrf.mxu0
  %v1200 = vpop.f32.mrf.mxu0
  %v1201 = vadd.f32 %v1077, %v1200
  %v1202 = vpop.f32.mrf.mxu0
  %1203 = vmatprep.mubr.bf16.mxu0 0
  %1204 = vmatmul.mubr.bf16.gmra.mxu0 %v1113
  %v1205 = vpop.f32.mrf.mxu0
  %v1206 = vadd.f32 %v1077, %v1205
  %v1207 = vpop.f32.mrf.mxu0
  %v1208 = vpop.f32.mrf.mxu0
  %v1209 = vadd.f32 %v1077, %v1208
  %v1210 = vpop.f32.mrf.mxu0
  %1211 = vdwg.mxu0
  %v1212 = vmax.f32 %v1150, 0.0
  %v1213 = vmax.f32 %v1153, 0.0
  %v1214 = vmax.f32 %v1158, 0.0
  %v1215 = vmax.f32 %v1161, 0.0
  %v1216 = vmax.f32 %v1166, 0.0
  %v1217 = vmax.f32 %v1169, 0.0
  %v1218 = vmax.f32 %v1174, 0.0
  %v1219 = vmax.f32 %v1177, 0.0
  %v1220 = vmax.f32 %v1182, 0.0
  %v1221 = vmax.f32 %v1185, 0.0
  %v1222 = vmax.f32 %v1190, 0.0
  %v1223 = vmax.f32 %v1193, 0.0
  %v1224 = vmax.f32 %v1198, 0.0
  %v1225 = vmax.f32 %v1201, 0.0
  %v1226 = vmax.f32 %v1206, 0.0
  %v1227 = vmax.f32 %v1209, 0.0
  %v1228 = vpack.c.bf16 %v1213, %v1212
  %v1229 = vpack.c.bf16 %v1215, %v1214
  %v1230 = vpack.c.bf16 %v1217, %v1216
  %v1231 = vpack.c.bf16 %v1219, %v1218
  %v1232 = vpack.c.bf16 %v1221, %v1220
  %v1233 = vpack.c.bf16 %v1223, %v1222
  %v1234 = vpack.c.bf16 %v1225, %v1224
  %v1235 = vpack.c.bf16 %v1227, %v1226
  %v1237 = vlaneseq
  %v1238 = vshrl.u32 %v1237, 7
  %v1239 = vsub.s32 0, %v1238
  %v1240 = vrot.slane %v357, %v1239
  %v1246 = vunpack.c.l.b16 %v353
  %v1247 = vunpack.c.l.b16 %v354
  %v1248 = vunpack.c.l.b16 %v355
  %v1249 = vunpack.c.l.b16 %v356
  %v1250 = vpack.c.b16 %v1247, %v1246
  %v1251 = vpack.c.b16 %v1249, %v1248
  %v1255 = vsel %vm591, %v1228, 0
  %v1258 = vsel %vm591, %v1229, 0
  %v1261 = vsel %vm591, %v1230, 0
  %v1264 = vsel %vm591, %v1231, 0
  %v1267 = vsel %vm591, %v1232, 0
  %v1270 = vsel %vm591, %v1233, 0
  %v1273 = vsel %vm591, %v1234, 0
  %v1276 = vsel %vm591, %v1235, 0
  %1278 = vmatprep.subr.bf16.mxu0 0
  %1279 = vmatpush1.bf16.msra.mxu0 0
  %1280 = vmatprep.subr.bf16.mxu0 0
  %1281 = vmatpush1.bf16.msra.mxu0 0
  %1282 = vmatprep.subr.bf16.mxu0 0
  %1283 = vmatpush1.bf16.msra.mxu0 0
  %1284 = vmatprep.subr.bf16.mxu0 0
  %1285 = vmatpush1.bf16.msra.mxu0 0
  %1286 = vmatprep.subr.bf16.mxu0 0
  %1287 = vmatpush1.bf16.msra.mxu0 0
  %1288 = vmatprep.subr.bf16.mxu0 0
  %1289 = vmatpush1.bf16.msra.mxu0 0
  %1290 = vmatprep.subr.bf16.mxu0 0
  %1291 = vmatpush1.bf16.msra.mxu0 %v1251
  %1292 = vmatprep.subr.bf16.mxu0 0
  %1293 = vmatpush1.bf16.msra.mxu0 %v1250
  %1294 = vmatprep.subr.bf16.mxu0 0
  %1295 = vmatpush2.bf16.msra.mxu0 0
  %1296 = vmatprep.subr.bf16.mxu0 0
  %1297 = vmatpush2.bf16.msra.mxu0 0
  %1298 = vmatprep.subr.bf16.mxu0 0
  %1299 = vmatpush2.bf16.msra.mxu0 0
  %1300 = vmatprep.subr.bf16.mxu0 0
  %1301 = vmatpush2.bf16.msra.mxu0 0
  %1302 = vmatprep.subr.bf16.mxu0 0
  %1303 = vmatpush2.bf16.msra.mxu0 0
  %1304 = vmatprep.subr.bf16.mxu0 0
  %1305 = vmatpush2.bf16.msra.mxu0 0
  %1306 = vmatprep.subr.bf16.mxu0 0
  %1307 = vmatpush2.bf16.msra.mxu0 0
  %1308 = vmatprep.subr.bf16.mxu0 0
  %1309 = vmatpush2.bf16.msra.mxu0 0
  %1310 = vmatprep.mubr.bf16.mxu0 0
  %1311 = vmatmul.mubr.bf16.gmra.mxu0 %v1255
  %v1312 = vpop.f32.mrf.mxu0
  %v1313 = vadd.f32 %v1240, %v1312
  %v1314 = vpop.f32.mrf.mxu0
  %v1315 = vpop.f32.mrf.mxu0
  %v1316 = vadd.f32 %v1240, %v1315
  %v1317 = vpop.f32.mrf.mxu0
  %1318 = vmatprep.mubr.bf16.mxu0 0
  %1319 = vmatmul.mubr.bf16.gmra.mxu0 %v1258
  %v1320 = vpop.f32.mrf.mxu0
  %v1321 = vadd.f32 %v1240, %v1320
  %v1322 = vpop.f32.mrf.mxu0
  %v1323 = vpop.f32.mrf.mxu0
  %v1324 = vadd.f32 %v1240, %v1323
  %v1325 = vpop.f32.mrf.mxu0
  %1326 = vmatprep.mubr.bf16.mxu0 0
  %1327 = vmatmul.mubr.bf16.gmra.mxu0 %v1261
  %v1328 = vpop.f32.mrf.mxu0
  %v1329 = vadd.f32 %v1240, %v1328
  %v1330 = vpop.f32.mrf.mxu0
  %v1331 = vpop.f32.mrf.mxu0
  %v1332 = vadd.f32 %v1240, %v1331
  %v1333 = vpop.f32.mrf.mxu0
  %1334 = vmatprep.mubr.bf16.mxu0 0
  %1335 = vmatmul.mubr.bf16.gmra.mxu0 %v1264
  %v1336 = vpop.f32.mrf.mxu0
  %v1337 = vadd.f32 %v1240, %v1336
  %v1338 = vpop.f32.mrf.mxu0
  %v1339 = vpop.f32.mrf.mxu0
  %v1340 = vadd.f32 %v1240, %v1339
  %v1341 = vpop.f32.mrf.mxu0
  %1342 = vmatprep.mubr.bf16.mxu0 0
  %1343 = vmatmul.mubr.bf16.gmra.mxu0 %v1267
  %v1344 = vpop.f32.mrf.mxu0
  %v1345 = vadd.f32 %v1240, %v1344
  %v1346 = vpop.f32.mrf.mxu0
  %v1347 = vpop.f32.mrf.mxu0
  %v1348 = vadd.f32 %v1240, %v1347
  %v1349 = vpop.f32.mrf.mxu0
  %1350 = vmatprep.mubr.bf16.mxu0 0
  %1351 = vmatmul.mubr.bf16.gmra.mxu0 %v1270
  %v1352 = vpop.f32.mrf.mxu0
  %v1353 = vadd.f32 %v1240, %v1352
  %v1354 = vpop.f32.mrf.mxu0
  %v1355 = vpop.f32.mrf.mxu0
  %v1356 = vadd.f32 %v1240, %v1355
  %v1357 = vpop.f32.mrf.mxu0
  %1358 = vmatprep.mubr.bf16.mxu0 0
  %1359 = vmatmul.mubr.bf16.gmra.mxu0 %v1273
  %v1360 = vpop.f32.mrf.mxu0
  %v1361 = vadd.f32 %v1240, %v1360
  %v1362 = vpop.f32.mrf.mxu0
  %v1363 = vpop.f32.mrf.mxu0
  %v1364 = vadd.f32 %v1240, %v1363
  %v1365 = vpop.f32.mrf.mxu0
  %1366 = vmatprep.mubr.bf16.mxu0 0
  %1367 = vmatmul.mubr.bf16.gmra.mxu0 %v1276
  %v1368 = vpop.f32.mrf.mxu0
  %v1369 = vadd.f32 %v1240, %v1368
  %v1370 = vpop.f32.mrf.mxu0
  %v1371 = vpop.f32.mrf.mxu0
  %v1372 = vadd.f32 %v1240, %v1371
  %v1373 = vpop.f32.mrf.mxu0
  %1374 = vdwg.mxu0
  %v1375 = vsel %vm591, %v1313, 0.0
  %1376 = vadd.xlane.f32.xlu0 %v1375
  %v1377 = vpop.xlane.xlu0 %1376
  %v1378 = vsel %vm591, %v1316, 0.0
  %1379 = vadd.xlane.f32.xlu0 %v1378
  %v1380 = vpop.xlane.xlu0 %1379
  %v1381 = vsel %vm591, %v1321, 0.0
  %1382 = vadd.xlane.f32.xlu0 %v1381
  %v1383 = vpop.xlane.xlu0 %1382
  %v1384 = vsel %vm591, %v1324, 0.0
  %1385 = vadd.xlane.f32.xlu0 %v1384
  %v1386 = vpop.xlane.xlu0 %1385
  %v1387 = vsel %vm591, %v1329, 0.0
  %1388 = vadd.xlane.f32.xlu0 %v1387
  %v1389 = vpop.xlane.xlu0 %1388
  %v1390 = vsel %vm591, %v1332, 0.0
  %1391 = vadd.xlane.f32.xlu0 %v1390
  %v1392 = vpop.xlane.xlu0 %1391
  %v1393 = vsel %vm591, %v1337, 0.0
  %1394 = vadd.xlane.f32.xlu0 %v1393
  %v1395 = vpop.xlane.xlu0 %1394
  %v1396 = vsel %vm591, %v1340, 0.0
  %1397 = vadd.xlane.f32.xlu0 %v1396
  %v1398 = vpop.xlane.xlu0 %1397
  %v1399 = vsel %vm591, %v1345, 0.0
  %1400 = vadd.xlane.f32.xlu0 %v1399
  %v1401 = vpop.xlane.xlu0 %1400
  %v1402 = vsel %vm591, %v1348, 0.0
  %1403 = vadd.xlane.f32.xlu0 %v1402
  %v1404 = vpop.xlane.xlu0 %1403
  %v1405 = vsel %vm591, %v1353, 0.0
  %1406 = vadd.xlane.f32.xlu0 %v1405
  %v1407 = vpop.xlane.xlu0 %1406
  %v1408 = vsel %vm591, %v1356, 0.0
  %1409 = vadd.xlane.f32.xlu0 %v1408
  %v1410 = vpop.xlane.xlu0 %1409
  %v1411 = vsel %vm591, %v1361, 0.0
  %1412 = vadd.xlane.f32.xlu0 %v1411
  %v1413 = vpop.xlane.xlu0 %1412
  %v1414 = vsel %vm591, %v1364, 0.0
  %1415 = vadd.xlane.f32.xlu0 %v1414
  %v1416 = vpop.xlane.xlu0 %1415
  %v1417 = vsel %vm591, %v1369, 0.0
  %1418 = vadd.xlane.f32.xlu0 %v1417
  %v1419 = vpop.xlane.xlu0 %1418
  %v1420 = vsel %vm591, %v1372, 0.0
  %1421 = vadd.xlane.f32.xlu0 %v1420
  %v1422 = vpop.xlane.xlu0 %1421
  %v1423 = vmul.f32 %v1377, %v800
  %v1424 = vmul.f32 %v1380, %v800
  %v1425 = vmul.f32 %v1383, %v800
  %v1426 = vmul.f32 %v1386, %v800
  %v1427 = vmul.f32 %v1389, %v800
  %v1428 = vmul.f32 %v1392, %v800
  %v1429 = vmul.f32 %v1395, %v800
  %v1430 = vmul.f32 %v1398, %v800
  %v1431 = vmul.f32 %v1401, %v800
  %v1432 = vmul.f32 %v1404, %v800
  %v1433 = vmul.f32 %v1407, %v800
  %v1434 = vmul.f32 %v1410, %v800
  %v1435 = vmul.f32 %v1413, %v800
  %v1436 = vmul.f32 %v1416, %v800
  %v1437 = vmul.f32 %v1419, %v800
  %v1438 = vmul.f32 %v1422, %v800
  %v1439 = vsub.f32 %v1313, %v1423
  %v1440 = vsub.f32 %v1316, %v1424
  %v1441 = vsub.f32 %v1321, %v1425
  %v1442 = vsub.f32 %v1324, %v1426
  %v1443 = vsub.f32 %v1329, %v1427
  %v1444 = vsub.f32 %v1332, %v1428
  %v1445 = vsub.f32 %v1337, %v1429
  %v1446 = vsub.f32 %v1340, %v1430
  %v1447 = vsub.f32 %v1345, %v1431
  %v1448 = vsub.f32 %v1348, %v1432
  %v1449 = vsub.f32 %v1353, %v1433
  %v1450 = vsub.f32 %v1356, %v1434
  %v1451 = vsub.f32 %v1361, %v1435
  %v1452 = vsub.f32 %v1364, %v1436
  %v1453 = vsub.f32 %v1369, %v1437
  %v1454 = vsub.f32 %v1372, %v1438
  %v1455 = vmul.f32 %v1439, %v1439
  %v1456 = vmul.f32 %v1440, %v1440
  %v1457 = vmul.f32 %v1441, %v1441
  %v1458 = vmul.f32 %v1442, %v1442
  %v1459 = vmul.f32 %v1443, %v1443
  %v1460 = vmul.f32 %v1444, %v1444
  %v1461 = vmul.f32 %v1445, %v1445
  %v1462 = vmul.f32 %v1446, %v1446
  %v1463 = vmul.f32 %v1447, %v1447
  %v1464 = vmul.f32 %v1448, %v1448
  %v1465 = vmul.f32 %v1449, %v1449
  %v1466 = vmul.f32 %v1450, %v1450
  %v1467 = vmul.f32 %v1451, %v1451
  %v1468 = vmul.f32 %v1452, %v1452
  %v1469 = vmul.f32 %v1453, %v1453
  %v1470 = vmul.f32 %v1454, %v1454
  %v1471 = vsel %vm591, %v1455, 0.0
  %1472 = vadd.xlane.f32.xlu0 %v1471
  %v1473 = vpop.xlane.xlu0 %1472
  %v1474 = vsel %vm591, %v1456, 0.0
  %1475 = vadd.xlane.f32.xlu0 %v1474
  %v1476 = vpop.xlane.xlu0 %1475
  %v1477 = vsel %vm591, %v1457, 0.0
  %1478 = vadd.xlane.f32.xlu0 %v1477
  %v1479 = vpop.xlane.xlu0 %1478
  %v1480 = vsel %vm591, %v1458, 0.0
  %1481 = vadd.xlane.f32.xlu0 %v1480
  %v1482 = vpop.xlane.xlu0 %1481
  %v1483 = vsel %vm591, %v1459, 0.0
  %1484 = vadd.xlane.f32.xlu0 %v1483
  %v1485 = vpop.xlane.xlu0 %1484
  %v1486 = vsel %vm591, %v1460, 0.0
  %1487 = vadd.xlane.f32.xlu0 %v1486
  %v1488 = vpop.xlane.xlu0 %1487
  %v1489 = vsel %vm591, %v1461, 0.0
  %1490 = vadd.xlane.f32.xlu0 %v1489
  %v1491 = vpop.xlane.xlu0 %1490
  %v1492 = vsel %vm591, %v1462, 0.0
  %1493 = vadd.xlane.f32.xlu0 %v1492
  %v1494 = vpop.xlane.xlu0 %1493
  %v1495 = vsel %vm591, %v1463, 0.0
  %1496 = vadd.xlane.f32.xlu0 %v1495
  %v1497 = vpop.xlane.xlu0 %1496
  %v1498 = vsel %vm591, %v1464, 0.0
  %1499 = vadd.xlane.f32.xlu0 %v1498
  %v1500 = vpop.xlane.xlu0 %1499
  %v1501 = vsel %vm591, %v1465, 0.0
  %1502 = vadd.xlane.f32.xlu0 %v1501
  %v1503 = vpop.xlane.xlu0 %1502
  %v1504 = vsel %vm591, %v1466, 0.0
  %1505 = vadd.xlane.f32.xlu0 %v1504
  %v1506 = vpop.xlane.xlu0 %1505
  %v1507 = vsel %vm591, %v1467, 0.0
  %1508 = vadd.xlane.f32.xlu0 %v1507
  %v1509 = vpop.xlane.xlu0 %1508
  %v1510 = vsel %vm591, %v1468, 0.0
  %1511 = vadd.xlane.f32.xlu0 %v1510
  %v1512 = vpop.xlane.xlu0 %1511
  %v1513 = vsel %vm591, %v1469, 0.0
  %1514 = vadd.xlane.f32.xlu0 %v1513
  %v1515 = vpop.xlane.xlu0 %1514
  %v1516 = vsel %vm591, %v1470, 0.0
  %1517 = vadd.xlane.f32.xlu0 %v1516
  %v1518 = vpop.xlane.xlu0 %1517
  %v1519 = vmul.f32 %v1473, %v800
  %v1520 = vmul.f32 %v1476, %v800
  %v1521 = vmul.f32 %v1479, %v800
  %v1522 = vmul.f32 %v1482, %v800
  %v1523 = vmul.f32 %v1485, %v800
  %v1524 = vmul.f32 %v1488, %v800
  %v1525 = vmul.f32 %v1491, %v800
  %v1526 = vmul.f32 %v1494, %v800
  %v1527 = vmul.f32 %v1497, %v800
  %v1528 = vmul.f32 %v1500, %v800
  %v1529 = vmul.f32 %v1503, %v800
  %v1530 = vmul.f32 %v1506, %v800
  %v1531 = vmul.f32 %v1509, %v800
  %v1532 = vmul.f32 %v1512, %v800
  %v1533 = vmul.f32 %v1515, %v800
  %v1534 = vmul.f32 %v1518, %v800
  %v1535 = vadd.f32 %v1519, 1e-05
  %v1536 = vadd.f32 %v1520, 1e-05
  %v1537 = vadd.f32 %v1521, 1e-05
  %v1538 = vadd.f32 %v1522, 1e-05
  %v1539 = vadd.f32 %v1523, 1e-05
  %v1540 = vadd.f32 %v1524, 1e-05
  %v1541 = vadd.f32 %v1525, 1e-05
  %v1542 = vadd.f32 %v1526, 1e-05
  %v1543 = vadd.f32 %v1527, 1e-05
  %v1544 = vadd.f32 %v1528, 1e-05
  %v1545 = vadd.f32 %v1529, 1e-05
  %v1546 = vadd.f32 %v1530, 1e-05
  %v1547 = vadd.f32 %v1531, 1e-05
  %v1548 = vadd.f32 %v1532, 1e-05
  %v1549 = vadd.f32 %v1533, 1e-05
  %v1550 = vadd.f32 %v1534, 1e-05
  %v1551 = vrsqrt.pop %v1535
  %v1552 = vrsqrt.pop %v1536
  %v1553 = vrsqrt.pop %v1537
  %v1554 = vrsqrt.pop %v1538
  %v1555 = vrsqrt.pop %v1539
  %v1556 = vrsqrt.pop %v1540
  %v1557 = vrsqrt.pop %v1541
  %v1558 = vrsqrt.pop %v1542
  %v1559 = vrsqrt.pop %v1543
  %v1560 = vrsqrt.pop %v1544
  %v1561 = vrsqrt.pop %v1545
  %v1562 = vrsqrt.pop %v1546
  %v1563 = vrsqrt.pop %v1547
  %v1564 = vrsqrt.pop %v1548
  %v1565 = vrsqrt.pop %v1549
  %v1566 = vrsqrt.pop %v1550
  %v1567 = vmul.f32 %v1439, %v1551
  %v1568 = vmul.f32 %v1440, %v1552
  %v1569 = vmul.f32 %v1441, %v1553
  %v1570 = vmul.f32 %v1442, %v1554
  %v1571 = vmul.f32 %v1443, %v1555
  %v1572 = vmul.f32 %v1444, %v1556
  %v1573 = vmul.f32 %v1445, %v1557
  %v1574 = vmul.f32 %v1446, %v1558
  %v1575 = vmul.f32 %v1447, %v1559
  %v1576 = vmul.f32 %v1448, %v1560
  %v1577 = vmul.f32 %v1449, %v1561
  %v1578 = vmul.f32 %v1450, %v1562
  %v1579 = vmul.f32 %v1451, %v1563
  %v1580 = vmul.f32 %v1452, %v1564
  %v1581 = vmul.f32 %v1453, %v1565
  %v1582 = vmul.f32 %v1454, %v1566
  %v1584 = vlaneseq
  %v1585 = vshrl.u32 %v1584, 7
  %v1586 = vsub.s32 0, %v1585
  %v1587 = vrot.slane %v358, %v1586
  %v1589 = vmul.f32 %v1567, %v1587
  %v1590 = vmul.f32 %v1568, %v1587
  %v1591 = vmul.f32 %v1569, %v1587
  %v1592 = vmul.f32 %v1570, %v1587
  %v1593 = vmul.f32 %v1571, %v1587
  %v1594 = vmul.f32 %v1572, %v1587
  %v1595 = vmul.f32 %v1573, %v1587
  %v1596 = vmul.f32 %v1574, %v1587
  %v1597 = vmul.f32 %v1575, %v1587
  %v1598 = vmul.f32 %v1576, %v1587
  %v1599 = vmul.f32 %v1577, %v1587
  %v1600 = vmul.f32 %v1578, %v1587
  %v1601 = vmul.f32 %v1579, %v1587
  %v1602 = vmul.f32 %v1580, %v1587
  %v1603 = vmul.f32 %v1581, %v1587
  %v1604 = vmul.f32 %v1582, %v1587
  %v1606 = vlaneseq
  %v1607 = vshrl.u32 %v1606, 7
  %v1608 = vsub.s32 0, %v1607
  %v1609 = vrot.slane %v359, %v1608
  %v1611 = vadd.f32 %v1589, %v1609
  %v1612 = vadd.f32 %v1590, %v1609
  %v1613 = vadd.f32 %v1591, %v1609
  %v1614 = vadd.f32 %v1592, %v1609
  %v1615 = vadd.f32 %v1593, %v1609
  %v1616 = vadd.f32 %v1594, %v1609
  %v1617 = vadd.f32 %v1595, %v1609
  %v1618 = vadd.f32 %v1596, %v1609
  %v1619 = vadd.f32 %v1597, %v1609
  %v1620 = vadd.f32 %v1598, %v1609
  %v1621 = vadd.f32 %v1599, %v1609
  %v1622 = vadd.f32 %v1600, %v1609
  %v1623 = vadd.f32 %v1601, %v1609
  %v1624 = vadd.f32 %v1602, %v1609
  %v1625 = vadd.f32 %v1603, %v1609
  %v1626 = vadd.f32 %v1604, %v1609
  %v1627 = vpack.c.bf16 %v902, %v901
  %v1628 = vpack.c.bf16 %v904, %v903
  %v1629 = vpack.c.bf16 %v906, %v905
  %v1630 = vpack.c.bf16 %v908, %v907
  %v1635 = vunpack.c.l.b16 %v360
  %v1636 = vunpack.c.l.b16 %v361
  %v1637 = vunpack.c.l.b16 %v362
  %v1638 = vunpack.c.l.b16 %v363
  %v1639 = vpack.c.b16 %v1636, %v1635
  %v1640 = vpack.c.b16 %v1638, %v1637
  %v1644 = vsel %vm591, %v1627, 0
  %v1647 = vsel %vm591, %v1628, 0
  %v1650 = vsel %vm591, %v1629, 0
  %v1653 = vsel %vm591, %v1630, 0
  %1655 = vmatprep.subr.bf16.mxu0 0
  %1656 = vmatpush1.bf16.msra.mxu0 0
  %1657 = vmatprep.subr.bf16.mxu0 0
  %1658 = vmatpush1.bf16.msra.mxu0 0
  %1659 = vmatprep.subr.bf16.mxu0 0
  %1660 = vmatpush1.bf16.msra.mxu0 0
  %1661 = vmatprep.subr.bf16.mxu0 0
  %1662 = vmatpush1.bf16.msra.mxu0 0
  %1663 = vmatprep.subr.bf16.mxu0 0
  %1664 = vmatpush1.bf16.msra.mxu0 0
  %1665 = vmatprep.subr.bf16.mxu0 0
  %1666 = vmatpush1.bf16.msra.mxu0 0
  %1667 = vmatprep.subr.bf16.mxu0 0
  %1668 = vmatpush1.bf16.msra.mxu0 %v1640
  %1669 = vmatprep.subr.bf16.mxu0 0
  %1670 = vmatpush1.bf16.msra.mxu0 %v1639
  %1671 = vmatprep.subr.bf16.mxu0 0
  %1672 = vmatpush2.bf16.msra.mxu0 0
  %1673 = vmatprep.subr.bf16.mxu0 0
  %1674 = vmatpush2.bf16.msra.mxu0 0
  %1675 = vmatprep.subr.bf16.mxu0 0
  %1676 = vmatpush2.bf16.msra.mxu0 0
  %1677 = vmatprep.subr.bf16.mxu0 0
  %1678 = vmatpush2.bf16.msra.mxu0 0
  %1679 = vmatprep.subr.bf16.mxu0 0
  %1680 = vmatpush2.bf16.msra.mxu0 0
  %1681 = vmatprep.subr.bf16.mxu0 0
  %1682 = vmatpush2.bf16.msra.mxu0 0
  %1683 = vmatprep.subr.bf16.mxu0 0
  %1684 = vmatpush2.bf16.msra.mxu0 0
  %1685 = vmatprep.subr.bf16.mxu0 0
  %1686 = vmatpush2.bf16.msra.mxu0 0
  %1687 = vmatprep.mubr.bf16.mxu0 0
  %1688 = vmatmul.mubr.bf16.gmra.mxu0 %v1644
  %v1689 = vpop.f32.mrf.mxu0
  %v1690 = vadd.f32 0.0, %v1689
  %v1691 = vpop.f32.mrf.mxu0
  %v1692 = vpop.f32.mrf.mxu0
  %v1693 = vadd.f32 0.0, %v1692
  %v1694 = vpop.f32.mrf.mxu0
  %1695 = vmatprep.mubr.bf16.mxu0 0
  %1696 = vmatmul.mubr.bf16.gmra.mxu0 %v1647
  %v1697 = vpop.f32.mrf.mxu0
  %v1698 = vadd.f32 0.0, %v1697
  %v1699 = vpop.f32.mrf.mxu0
  %v1700 = vpop.f32.mrf.mxu0
  %v1701 = vadd.f32 0.0, %v1700
  %v1702 = vpop.f32.mrf.mxu0
  %1703 = vmatprep.mubr.bf16.mxu0 0
  %1704 = vmatmul.mubr.bf16.gmra.mxu0 %v1650
  %v1705 = vpop.f32.mrf.mxu0
  %v1706 = vadd.f32 0.0, %v1705
  %v1707 = vpop.f32.mrf.mxu0
  %v1708 = vpop.f32.mrf.mxu0
  %v1709 = vadd.f32 0.0, %v1708
  %v1710 = vpop.f32.mrf.mxu0
  %1711 = vmatprep.mubr.bf16.mxu0 0
  %1712 = vmatmul.mubr.bf16.gmra.mxu0 %v1653
  %v1713 = vpop.f32.mrf.mxu0
  %v1714 = vadd.f32 0.0, %v1713
  %v1715 = vpop.f32.mrf.mxu0
  %v1716 = vpop.f32.mrf.mxu0
  %v1717 = vadd.f32 0.0, %v1716
  %v1718 = vpop.f32.mrf.mxu0
  %1719 = vdwg.mxu0
  %v1724 = vunpack.c.l.b16 %v364
  %v1725 = vunpack.c.l.b16 %v365
  %v1726 = vunpack.c.l.b16 %v366
  %v1727 = vunpack.c.l.b16 %v367
  %v1728 = vpack.c.b16 %v1725, %v1724
  %v1729 = vpack.c.b16 %v1727, %v1726
  %1732 = vmatprep.subr.bf16.mxu0 0
  %1733 = vmatpush1.bf16.msra.mxu0 0
  %1734 = vmatprep.subr.bf16.mxu0 0
  %1735 = vmatpush1.bf16.msra.mxu0 0
  %1736 = vmatprep.subr.bf16.mxu0 0
  %1737 = vmatpush1.bf16.msra.mxu0 0
  %1738 = vmatprep.subr.bf16.mxu0 0
  %1739 = vmatpush1.bf16.msra.mxu0 0
  %1740 = vmatprep.subr.bf16.mxu0 0
  %1741 = vmatpush1.bf16.msra.mxu0 0
  %1742 = vmatprep.subr.bf16.mxu0 0
  %1743 = vmatpush1.bf16.msra.mxu0 0
  %1744 = vmatprep.subr.bf16.mxu0 0
  %1745 = vmatpush1.bf16.msra.mxu0 %v1729
  %1746 = vmatprep.subr.bf16.mxu0 0
  %1747 = vmatpush1.bf16.msra.mxu0 %v1728
  %1748 = vmatprep.subr.bf16.mxu0 0
  %1749 = vmatpush2.bf16.msra.mxu0 0
  %1750 = vmatprep.subr.bf16.mxu0 0
  %1751 = vmatpush2.bf16.msra.mxu0 0
  %1752 = vmatprep.subr.bf16.mxu0 0
  %1753 = vmatpush2.bf16.msra.mxu0 0
  %1754 = vmatprep.subr.bf16.mxu0 0
  %1755 = vmatpush2.bf16.msra.mxu0 0
  %1756 = vmatprep.subr.bf16.mxu0 0
  %1757 = vmatpush2.bf16.msra.mxu0 0
  %1758 = vmatprep.subr.bf16.mxu0 0
  %1759 = vmatpush2.bf16.msra.mxu0 0
  %1760 = vmatprep.subr.bf16.mxu0 0
  %1761 = vmatpush2.bf16.msra.mxu0 0
  %1762 = vmatprep.subr.bf16.mxu0 0
  %1763 = vmatpush2.bf16.msra.mxu0 0
  %1764 = vmatprep.mubr.bf16.mxu0 0
  %1765 = vmatmul.mubr.bf16.gmra.mxu0 %v1644
  %v1766 = vpop.f32.mrf.mxu0
  %v1767 = vadd.f32 0.0, %v1766
  %v1768 = vpop.f32.mrf.mxu0
  %v1769 = vpop.f32.mrf.mxu0
  %v1770 = vadd.f32 0.0, %v1769
  %v1771 = vpop.f32.mrf.mxu0
  %1772 = vmatprep.mubr.bf16.mxu0 0
  %1773 = vmatmul.mubr.bf16.gmra.mxu0 %v1647
  %v1774 = vpop.f32.mrf.mxu0
  %v1775 = vadd.f32 0.0, %v1774
  %v1776 = vpop.f32.mrf.mxu0
  %v1777 = vpop.f32.mrf.mxu0
  %v1778 = vadd.f32 0.0, %v1777
  %v1779 = vpop.f32.mrf.mxu0
  %1780 = vmatprep.mubr.bf16.mxu0 0
  %1781 = vmatmul.mubr.bf16.gmra.mxu0 %v1650
  %v1782 = vpop.f32.mrf.mxu0
  %v1783 = vadd.f32 0.0, %v1782
  %v1784 = vpop.f32.mrf.mxu0
  %v1785 = vpop.f32.mrf.mxu0
  %v1786 = vadd.f32 0.0, %v1785
  %v1787 = vpop.f32.mrf.mxu0
  %1788 = vmatprep.mubr.bf16.mxu0 0
  %1789 = vmatmul.mubr.bf16.gmra.mxu0 %v1653
  %v1790 = vpop.f32.mrf.mxu0
  %v1791 = vadd.f32 0.0, %v1790
  %v1792 = vpop.f32.mrf.mxu0
  %v1793 = vpop.f32.mrf.mxu0
  %v1794 = vadd.f32 0.0, %v1793
  %v1795 = vpop.f32.mrf.mxu0
  %1796 = vdwg.mxu0
  %v1797 = vpack.c.bf16 %v1693, %v1690
  %v1798 = vpack.c.bf16 %v1701, %v1698
  %v1799 = vpack.c.bf16 %v1709, %v1706
  %v1800 = vpack.c.bf16 %v1717, %v1714
  %v1801 = vpack.c.bf16 %v1770, %v1767
  %v1802 = vpack.c.bf16 %v1778, %v1775
  %v1803 = vpack.c.bf16 %v1786, %v1783
  %v1804 = vpack.c.bf16 %v1794, %v1791
  %v1821 = vunpack.c.l.b16 %v307
  %v1822 = vunpack.c.l.b16 %v308
  %v1823 = vunpack.c.l.b16 %v309
  %v1824 = vunpack.c.l.b16 %v310
  %v1825 = vunpack.c.l.b16 %v311
  %v1826 = vunpack.c.l.b16 %v312
  %v1827 = vunpack.c.l.b16 %v313
  %v1828 = vunpack.c.l.b16 %v314
  %v1829 = vunpack.c.l.b16 %v315
  %v1830 = vunpack.c.l.b16 %v316
  %v1831 = vunpack.c.l.b16 %v317
  %v1832 = vunpack.c.l.b16 %v318
  %v1833 = vunpack.c.l.b16 %v319
  %v1834 = vunpack.c.l.b16 %v320
  %v1835 = vunpack.c.l.b16 %v321
  %v1836 = vunpack.c.l.b16 %v322
  %v1837 = vpack.c.b16 %v1822, %v1821
  %v1838 = vpack.c.b16 %v1824, %v1823
  %v1839 = vpack.c.b16 %v1826, %v1825
  %v1840 = vpack.c.b16 %v1828, %v1827
  %v1841 = vpack.c.b16 %v1830, %v1829
  %v1842 = vpack.c.b16 %v1832, %v1831
  %v1843 = vpack.c.b16 %v1834, %v1833
  %v1844 = vpack.c.b16 %v1836, %v1835
  %vm1845 = vcmask 523264
  %v1847 = vsel %vm1845, %v1837, 0
  %v1850 = vsel %vm1845, %v1838, 0
  %v1853 = vsel %vm1845, %v1839, 0
  %v1856 = vsel %vm1845, %v1840, 0
  %v1859 = vsel %vm1845, %v1841, 0
  %v1862 = vsel %vm1845, %v1842, 0
  %v1865 = vsel %vm1845, %v1843, 0
  %v1868 = vsel %vm1845, %v1844, 0
  %1870 = vmatprep.subr.bf16.mxu0 0
  %1871 = vmatpush1.bf16.msra.mxu0 0
  %1872 = vmatprep.subr.bf16.mxu0 0
  %1873 = vmatpush1.bf16.msra.mxu0 0
  %1874 = vmatprep.subr.bf16.mxu0 0
  %1875 = vmatpush1.bf16.msra.mxu0 0
  %1876 = vmatprep.subr.bf16.mxu0 0
  %1877 = vmatpush1.bf16.msra.mxu0 0
  %1878 = vmatprep.subr.bf16.mxu0 0
  %1879 = vmatpush1.bf16.msra.mxu0 %v1804
  %1880 = vmatprep.subr.bf16.mxu0 0
  %1881 = vmatpush1.bf16.msra.mxu0 %v1803
  %1882 = vmatprep.subr.bf16.mxu0 0
  %1883 = vmatpush1.bf16.msra.mxu0 %v1802
  %1884 = vmatprep.subr.bf16.mxu0 0
  %1885 = vmatpush1.bf16.msra.mxu0 %v1801
  %1886 = vmatprep.subr.bf16.mxu0 0
  %1887 = vmatpush2.bf16.msra.mxu0 0
  %1888 = vmatprep.subr.bf16.mxu0 0
  %1889 = vmatpush2.bf16.msra.mxu0 0
  %1890 = vmatprep.subr.bf16.mxu0 0
  %1891 = vmatpush2.bf16.msra.mxu0 0
  %1892 = vmatprep.subr.bf16.mxu0 0
  %1893 = vmatpush2.bf16.msra.mxu0 0
  %1894 = vmatprep.subr.bf16.mxu0 0
  %1895 = vmatpush2.bf16.msra.mxu0 0
  %1896 = vmatprep.subr.bf16.mxu0 0
  %1897 = vmatpush2.bf16.msra.mxu0 0
  %1898 = vmatprep.subr.bf16.mxu0 0
  %1899 = vmatpush2.bf16.msra.mxu0 0
  %1900 = vmatprep.subr.bf16.mxu0 0
  %1901 = vmatpush2.bf16.msra.mxu0 0
  %1902 = vmatprep.mubr.bf16.mxu0 0
  %1903 = vmatmul.mubr.bf16.gmra.mxu0 %v1847
  %v1904 = vpop.f32.mrf.mxu0
  %v1905 = vadd.f32 0.0, %v1904
  %v1906 = vpop.f32.mrf.mxu0
  %v1907 = vpop.f32.mrf.mxu0
  %v1908 = vadd.f32 0.0, %v1907
  %v1909 = vpop.f32.mrf.mxu0
  %1910 = vmatprep.mubr.bf16.mxu0 0
  %1911 = vmatmul.mubr.bf16.gmra.mxu0 %v1850
  %v1912 = vpop.f32.mrf.mxu0
  %v1913 = vadd.f32 0.0, %v1912
  %v1914 = vpop.f32.mrf.mxu0
  %v1915 = vpop.f32.mrf.mxu0
  %v1916 = vadd.f32 0.0, %v1915
  %v1917 = vpop.f32.mrf.mxu0
  %1918 = vmatprep.mubr.bf16.mxu0 0
  %1919 = vmatmul.mubr.bf16.gmra.mxu0 %v1853
  %v1920 = vpop.f32.mrf.mxu0
  %v1921 = vadd.f32 0.0, %v1920
  %v1922 = vpop.f32.mrf.mxu0
  %v1923 = vpop.f32.mrf.mxu0
  %v1924 = vadd.f32 0.0, %v1923
  %v1925 = vpop.f32.mrf.mxu0
  %1926 = vmatprep.mubr.bf16.mxu0 0
  %1927 = vmatmul.mubr.bf16.gmra.mxu0 %v1856
  %v1928 = vpop.f32.mrf.mxu0
  %v1929 = vadd.f32 0.0, %v1928
  %v1930 = vpop.f32.mrf.mxu0
  %v1931 = vpop.f32.mrf.mxu0
  %v1932 = vadd.f32 0.0, %v1931
  %v1933 = vpop.f32.mrf.mxu0
  %1934 = vmatprep.mubr.bf16.mxu0 0
  %1935 = vmatmul.mubr.bf16.gmra.mxu0 %v1859
  %v1936 = vpop.f32.mrf.mxu0
  %v1937 = vadd.f32 0.0, %v1936
  %v1938 = vpop.f32.mrf.mxu0
  %v1939 = vpop.f32.mrf.mxu0
  %v1940 = vadd.f32 0.0, %v1939
  %v1941 = vpop.f32.mrf.mxu0
  %1942 = vmatprep.mubr.bf16.mxu0 0
  %1943 = vmatmul.mubr.bf16.gmra.mxu0 %v1862
  %v1944 = vpop.f32.mrf.mxu0
  %v1945 = vadd.f32 0.0, %v1944
  %v1946 = vpop.f32.mrf.mxu0
  %v1947 = vpop.f32.mrf.mxu0
  %v1948 = vadd.f32 0.0, %v1947
  %v1949 = vpop.f32.mrf.mxu0
  %1950 = vmatprep.mubr.bf16.mxu0 0
  %1951 = vmatmul.mubr.bf16.gmra.mxu0 %v1865
  %v1952 = vpop.f32.mrf.mxu0
  %v1953 = vadd.f32 0.0, %v1952
  %v1954 = vpop.f32.mrf.mxu0
  %v1955 = vpop.f32.mrf.mxu0
  %v1956 = vadd.f32 0.0, %v1955
  %v1957 = vpop.f32.mrf.mxu0
  %1958 = vmatprep.mubr.bf16.mxu0 0
  %1959 = vmatmul.mubr.bf16.gmra.mxu0 %v1868
  %v1960 = vpop.f32.mrf.mxu0
  %v1961 = vadd.f32 0.0, %v1960
  %v1962 = vpop.f32.mrf.mxu0
  %v1963 = vpop.f32.mrf.mxu0
  %v1964 = vadd.f32 0.0, %v1963
  %v1965 = vpop.f32.mrf.mxu0
  %1966 = vdwg.mxu0
  %v1983 = vunpack.c.l.b16 %v291
  %v1984 = vunpack.c.l.b16 %v292
  %v1985 = vunpack.c.l.b16 %v293
  %v1986 = vunpack.c.l.b16 %v294
  %v1987 = vunpack.c.l.b16 %v295
  %v1988 = vunpack.c.l.b16 %v296
  %v1989 = vunpack.c.l.b16 %v297
  %v1990 = vunpack.c.l.b16 %v298
  %v1991 = vunpack.c.l.b16 %v299
  %v1992 = vunpack.c.l.b16 %v300
  %v1993 = vunpack.c.l.b16 %v301
  %v1994 = vunpack.c.l.b16 %v302
  %v1995 = vunpack.c.l.b16 %v303
  %v1996 = vunpack.c.l.b16 %v304
  %v1997 = vunpack.c.l.b16 %v305
  %v1998 = vunpack.c.l.b16 %v306
  %v1999 = vpack.c.b16 %v1984, %v1983
  %v2000 = vpack.c.b16 %v1986, %v1985
  %v2001 = vpack.c.b16 %v1988, %v1987
  %v2002 = vpack.c.b16 %v1990, %v1989
  %v2003 = vpack.c.b16 %v1992, %v1991
  %v2004 = vpack.c.b16 %v1994, %v1993
  %v2005 = vpack.c.b16 %v1996, %v1995
  %v2006 = vpack.c.b16 %v1998, %v1997
  %v2008 = vsel %vm1845, %v1999, 0
  %v2011 = vsel %vm1845, %v2000, 0
  %v2014 = vsel %vm1845, %v2001, 0
  %v2017 = vsel %vm1845, %v2002, 0
  %v2020 = vsel %vm1845, %v2003, 0
  %v2023 = vsel %vm1845, %v2004, 0
  %v2026 = vsel %vm1845, %v2005, 0
  %v2029 = vsel %vm1845, %v2006, 0
  %2031 = vmatprep.subr.bf16.mxu0 0
  %2032 = vmatpush1.bf16.msra.mxu0 0
  %2033 = vmatprep.subr.bf16.mxu0 0
  %2034 = vmatpush1.bf16.msra.mxu0 0
  %2035 = vmatprep.subr.bf16.mxu0 0
  %2036 = vmatpush1.bf16.msra.mxu0 0
  %2037 = vmatprep.subr.bf16.mxu0 0
  %2038 = vmatpush1.bf16.msra.mxu0 0
  %2039 = vmatprep.subr.bf16.mxu0 0
  %2040 = vmatpush1.bf16.msra.mxu0 %v1800
  %2041 = vmatprep.subr.bf16.mxu0 0
  %2042 = vmatpush1.bf16.msra.mxu0 %v1799
  %2043 = vmatprep.subr.bf16.mxu0 0
  %2044 = vmatpush1.bf16.msra.mxu0 %v1798
  %2045 = vmatprep.subr.bf16.mxu0 0
  %2046 = vmatpush1.bf16.msra.mxu0 %v1797
  %2047 = vmatprep.subr.bf16.mxu0 0
  %2048 = vmatpush2.bf16.msra.mxu0 0
  %2049 = vmatprep.subr.bf16.mxu0 0
  %2050 = vmatpush2.bf16.msra.mxu0 0
  %2051 = vmatprep.subr.bf16.mxu0 0
  %2052 = vmatpush2.bf16.msra.mxu0 0
  %2053 = vmatprep.subr.bf16.mxu0 0
  %2054 = vmatpush2.bf16.msra.mxu0 0
  %2055 = vmatprep.subr.bf16.mxu0 0
  %2056 = vmatpush2.bf16.msra.mxu0 0
  %2057 = vmatprep.subr.bf16.mxu0 0
  %2058 = vmatpush2.bf16.msra.mxu0 0
  %2059 = vmatprep.subr.bf16.mxu0 0
  %2060 = vmatpush2.bf16.msra.mxu0 0
  %2061 = vmatprep.subr.bf16.mxu0 0
  %2062 = vmatpush2.bf16.msra.mxu0 0
  %2063 = vmatprep.mubr.bf16.mxu0 0
  %2064 = vmatmul.mubr.bf16.gmra.mxu0 %v2008
  %v2065 = vpop.f32.mrf.mxu0
  %v2066 = vadd.f32 %v1905, %v2065
  %v2067 = vpop.f32.mrf.mxu0
  %v2068 = vpop.f32.mrf.mxu0
  %v2069 = vadd.f32 %v1908, %v2068
  %v2070 = vpop.f32.mrf.mxu0
  %2071 = vmatprep.mubr.bf16.mxu0 0
  %2072 = vmatmul.mubr.bf16.gmra.mxu0 %v2011
  %v2073 = vpop.f32.mrf.mxu0
  %v2074 = vadd.f32 %v1913, %v2073
  %v2075 = vpop.f32.mrf.mxu0
  %v2076 = vpop.f32.mrf.mxu0
  %v2077 = vadd.f32 %v1916, %v2076
  %v2078 = vpop.f32.mrf.mxu0
  %2079 = vmatprep.mubr.bf16.mxu0 0
  %2080 = vmatmul.mubr.bf16.gmra.mxu0 %v2014
  %v2081 = vpop.f32.mrf.mxu0
  %v2082 = vadd.f32 %v1921, %v2081
  %v2083 = vpop.f32.mrf.mxu0
  %v2084 = vpop.f32.mrf.mxu0
  %v2085 = vadd.f32 %v1924, %v2084
  %v2086 = vpop.f32.mrf.mxu0
  %2087 = vmatprep.mubr.bf16.mxu0 0
  %2088 = vmatmul.mubr.bf16.gmra.mxu0 %v2017
  %v2089 = vpop.f32.mrf.mxu0
  %v2090 = vadd.f32 %v1929, %v2089
  %v2091 = vpop.f32.mrf.mxu0
  %v2092 = vpop.f32.mrf.mxu0
  %v2093 = vadd.f32 %v1932, %v2092
  %v2094 = vpop.f32.mrf.mxu0
  %2095 = vmatprep.mubr.bf16.mxu0 0
  %2096 = vmatmul.mubr.bf16.gmra.mxu0 %v2020
  %v2097 = vpop.f32.mrf.mxu0
  %v2098 = vadd.f32 %v1937, %v2097
  %v2099 = vpop.f32.mrf.mxu0
  %v2100 = vpop.f32.mrf.mxu0
  %v2101 = vadd.f32 %v1940, %v2100
  %v2102 = vpop.f32.mrf.mxu0
  %2103 = vmatprep.mubr.bf16.mxu0 0
  %2104 = vmatmul.mubr.bf16.gmra.mxu0 %v2023
  %v2105 = vpop.f32.mrf.mxu0
  %v2106 = vadd.f32 %v1945, %v2105
  %v2107 = vpop.f32.mrf.mxu0
  %v2108 = vpop.f32.mrf.mxu0
  %v2109 = vadd.f32 %v1948, %v2108
  %v2110 = vpop.f32.mrf.mxu0
  %2111 = vmatprep.mubr.bf16.mxu0 0
  %2112 = vmatmul.mubr.bf16.gmra.mxu0 %v2026
  %v2113 = vpop.f32.mrf.mxu0
  %v2114 = vadd.f32 %v1953, %v2113
  %v2115 = vpop.f32.mrf.mxu0
  %v2116 = vpop.f32.mrf.mxu0
  %v2117 = vadd.f32 %v1956, %v2116
  %v2118 = vpop.f32.mrf.mxu0
  %2119 = vmatprep.mubr.bf16.mxu0 0
  %2120 = vmatmul.mubr.bf16.gmra.mxu0 %v2029
  %v2121 = vpop.f32.mrf.mxu0
  %v2122 = vadd.f32 %v1961, %v2121
  %v2123 = vpop.f32.mrf.mxu0
  %v2124 = vpop.f32.mrf.mxu0
  %v2125 = vadd.f32 %v1964, %v2124
  %v2126 = vpop.f32.mrf.mxu0
  %2127 = vdwg.mxu0
  %v2128 = vpack.c.bf16 %v1612, %v1611
  %v2129 = vpack.c.bf16 %v1614, %v1613
  %v2130 = vpack.c.bf16 %v1616, %v1615
  %v2131 = vpack.c.bf16 %v1618, %v1617
  %v2132 = vpack.c.bf16 %v1620, %v1619
  %v2133 = vpack.c.bf16 %v1622, %v1621
  %v2134 = vpack.c.bf16 %v1624, %v1623
  %v2135 = vpack.c.bf16 %v1626, %v1625
  %v2140 = vunpack.c.l.b16 %v368
  %v2141 = vunpack.c.l.b16 %v369
  %v2142 = vunpack.c.l.b16 %v370
  %v2143 = vunpack.c.l.b16 %v371
  %v2144 = vpack.c.b16 %v2141, %v2140
  %v2145 = vpack.c.b16 %v2143, %v2142
  %v2149 = vsel %vm591, %v2128, 0
  %v2152 = vsel %vm591, %v2129, 0
  %v2155 = vsel %vm591, %v2130, 0
  %v2158 = vsel %vm591, %v2131, 0
  %v2161 = vsel %vm591, %v2132, 0
  %v2164 = vsel %vm591, %v2133, 0
  %v2167 = vsel %vm591, %v2134, 0
  %v2170 = vsel %vm591, %v2135, 0
  %2172 = vmatprep.subr.bf16.mxu0 0
  %2173 = vmatpush1.bf16.msra.mxu0 0
  %2174 = vmatprep.subr.bf16.mxu0 0
  %2175 = vmatpush1.bf16.msra.mxu0 0
  %2176 = vmatprep.subr.bf16.mxu0 0
  %2177 = vmatpush1.bf16.msra.mxu0 0
  %2178 = vmatprep.subr.bf16.mxu0 0
  %2179 = vmatpush1.bf16.msra.mxu0 0
  %2180 = vmatprep.subr.bf16.mxu0 0
  %2181 = vmatpush1.bf16.msra.mxu0 0
  %2182 = vmatprep.subr.bf16.mxu0 0
  %2183 = vmatpush1.bf16.msra.mxu0 0
  %2184 = vmatprep.subr.bf16.mxu0 0
  %2185 = vmatpush1.bf16.msra.mxu0 %v2145
  %2186 = vmatprep.subr.bf16.mxu0 0
  %2187 = vmatpush1.bf16.msra.mxu0 %v2144
  %2188 = vmatprep.subr.bf16.mxu0 0
  %2189 = vmatpush2.bf16.msra.mxu0 0
  %2190 = vmatprep.subr.bf16.mxu0 0
  %2191 = vmatpush2.bf16.msra.mxu0 0
  %2192 = vmatprep.subr.bf16.mxu0 0
  %2193 = vmatpush2.bf16.msra.mxu0 0
  %2194 = vmatprep.subr.bf16.mxu0 0
  %2195 = vmatpush2.bf16.msra.mxu0 0
  %2196 = vmatprep.subr.bf16.mxu0 0
  %2197 = vmatpush2.bf16.msra.mxu0 0
  %2198 = vmatprep.subr.bf16.mxu0 0
  %2199 = vmatpush2.bf16.msra.mxu0 0
  %2200 = vmatprep.subr.bf16.mxu0 0
  %2201 = vmatpush2.bf16.msra.mxu0 0
  %2202 = vmatprep.subr.bf16.mxu0 0
  %2203 = vmatpush2.bf16.msra.mxu0 0
  %2204 = vmatprep.mubr.bf16.mxu0 0
  %2205 = vmatmul.mubr.bf16.gmra.mxu0 %v2149
  %v2206 = vpop.f32.mrf.mxu0
  %v2207 = vadd.f32 0.0, %v2206
  %v2208 = vpop.f32.mrf.mxu0
  %v2209 = vpop.f32.mrf.mxu0
  %v2210 = vadd.f32 0.0, %v2209
  %v2211 = vpop.f32.mrf.mxu0
  %2212 = vmatprep.mubr.bf16.mxu0 0
  %2213 = vmatmul.mubr.bf16.gmra.mxu0 %v2152
  %v2214 = vpop.f32.mrf.mxu0
  %v2215 = vadd.f32 0.0, %v2214
  %v2216 = vpop.f32.mrf.mxu0
  %v2217 = vpop.f32.mrf.mxu0
  %v2218 = vadd.f32 0.0, %v2217
  %v2219 = vpop.f32.mrf.mxu0
  %2220 = vmatprep.mubr.bf16.mxu0 0
  %2221 = vmatmul.mubr.bf16.gmra.mxu0 %v2155
  %v2222 = vpop.f32.mrf.mxu0
  %v2223 = vadd.f32 0.0, %v2222
  %v2224 = vpop.f32.mrf.mxu0
  %v2225 = vpop.f32.mrf.mxu0
  %v2226 = vadd.f32 0.0, %v2225
  %v2227 = vpop.f32.mrf.mxu0
  %2228 = vmatprep.mubr.bf16.mxu0 0
  %2229 = vmatmul.mubr.bf16.gmra.mxu0 %v2158
  %v2230 = vpop.f32.mrf.mxu0
  %v2231 = vadd.f32 0.0, %v2230
  %v2232 = vpop.f32.mrf.mxu0
  %v2233 = vpop.f32.mrf.mxu0
  %v2234 = vadd.f32 0.0, %v2233
  %v2235 = vpop.f32.mrf.mxu0
  %2236 = vmatprep.mubr.bf16.mxu0 0
  %2237 = vmatmul.mubr.bf16.gmra.mxu0 %v2161
  %v2238 = vpop.f32.mrf.mxu0
  %v2239 = vadd.f32 0.0, %v2238
  %v2240 = vpop.f32.mrf.mxu0
  %v2241 = vpop.f32.mrf.mxu0
  %v2242 = vadd.f32 0.0, %v2241
  %v2243 = vpop.f32.mrf.mxu0
  %2244 = vmatprep.mubr.bf16.mxu0 0
  %2245 = vmatmul.mubr.bf16.gmra.mxu0 %v2164
  %v2246 = vpop.f32.mrf.mxu0
  %v2247 = vadd.f32 0.0, %v2246
  %v2248 = vpop.f32.mrf.mxu0
  %v2249 = vpop.f32.mrf.mxu0
  %v2250 = vadd.f32 0.0, %v2249
  %v2251 = vpop.f32.mrf.mxu0
  %2252 = vmatprep.mubr.bf16.mxu0 0
  %2253 = vmatmul.mubr.bf16.gmra.mxu0 %v2167
  %v2254 = vpop.f32.mrf.mxu0
  %v2255 = vadd.f32 0.0, %v2254
  %v2256 = vpop.f32.mrf.mxu0
  %v2257 = vpop.f32.mrf.mxu0
  %v2258 = vadd.f32 0.0, %v2257
  %v2259 = vpop.f32.mrf.mxu0
  %2260 = vmatprep.mubr.bf16.mxu0 0
  %2261 = vmatmul.mubr.bf16.gmra.mxu0 %v2170
  %v2262 = vpop.f32.mrf.mxu0
  %v2263 = vadd.f32 0.0, %v2262
  %v2264 = vpop.f32.mrf.mxu0
  %v2265 = vpop.f32.mrf.mxu0
  %v2266 = vadd.f32 0.0, %v2265
  %v2267 = vpop.f32.mrf.mxu0
  %2268 = vdwg.mxu0
  %v2269 = vadd.f32 %v2066, %v2207
  %v2270 = vadd.f32 %v2069, %v2210
  %v2271 = vadd.f32 %v2074, %v2215
  %v2272 = vadd.f32 %v2077, %v2218
  %v2273 = vadd.f32 %v2082, %v2223
  %v2274 = vadd.f32 %v2085, %v2226
  %v2275 = vadd.f32 %v2090, %v2231
  %v2276 = vadd.f32 %v2093, %v2234
  %v2277 = vadd.f32 %v2098, %v2239
  %v2278 = vadd.f32 %v2101, %v2242
  %v2279 = vadd.f32 %v2106, %v2247
  %v2280 = vadd.f32 %v2109, %v2250
  %v2281 = vadd.f32 %v2114, %v2255
  %v2282 = vadd.f32 %v2117, %v2258
  %v2283 = vadd.f32 %v2122, %v2263
  %v2284 = vadd.f32 %v2125, %v2266
  %v2286 = vlaneseq
  %v2287 = vshrl.u32 %v2286, 7
  %v2288 = vsub.s32 0, %v2287
  %v2289 = vrot.slane %v372, %v2288
  %v2291 = vadd.f32 %v2269, %v2289
  %v2292 = vadd.f32 %v2270, %v2289
  %v2293 = vadd.f32 %v2271, %v2289
  %v2294 = vadd.f32 %v2272, %v2289
  %v2295 = vadd.f32 %v2273, %v2289
  %v2296 = vadd.f32 %v2274, %v2289
  %v2297 = vadd.f32 %v2275, %v2289
  %v2298 = vadd.f32 %v2276, %v2289
  %v2299 = vadd.f32 %v2277, %v2289
  %v2300 = vadd.f32 %v2278, %v2289
  %v2301 = vadd.f32 %v2279, %v2289
  %v2302 = vadd.f32 %v2280, %v2289
  %v2303 = vadd.f32 %v2281, %v2289
  %v2304 = vadd.f32 %v2282, %v2289
  %v2305 = vadd.f32 %v2283, %v2289
  %v2306 = vadd.f32 %v2284, %v2289
  %v2307 = vmax.f32 %v2291, 0.0
  %v2308 = vmax.f32 %v2292, 0.0
  %v2309 = vmax.f32 %v2293, 0.0
  %v2310 = vmax.f32 %v2294, 0.0
  %v2311 = vmax.f32 %v2295, 0.0
  %v2312 = vmax.f32 %v2296, 0.0
  %v2313 = vmax.f32 %v2297, 0.0
  %v2314 = vmax.f32 %v2298, 0.0
  %v2315 = vmax.f32 %v2299, 0.0
  %v2316 = vmax.f32 %v2300, 0.0
  %v2317 = vmax.f32 %v2301, 0.0
  %v2318 = vmax.f32 %v2302, 0.0
  %v2319 = vmax.f32 %v2303, 0.0
  %v2320 = vmax.f32 %v2304, 0.0
  %v2321 = vmax.f32 %v2305, 0.0
  %v2322 = vmax.f32 %v2306, 0.0
  %v2323 = vpack.c.bf16 %v2308, %v2307
  %v2324 = vpack.c.bf16 %v2310, %v2309
  %v2325 = vpack.c.bf16 %v2312, %v2311
  %v2326 = vpack.c.bf16 %v2314, %v2313
  %v2327 = vpack.c.bf16 %v2316, %v2315
  %v2328 = vpack.c.bf16 %v2318, %v2317
  %v2329 = vpack.c.bf16 %v2320, %v2319
  %v2330 = vpack.c.bf16 %v2322, %v2321
  %v2332 = vlaneseq
  %v2333 = vshrl.u32 %v2332, 7
  %v2334 = vsub.s32 0, %v2333
  %v2335 = vrot.slane %v377, %v2334
  %v2341 = vunpack.c.l.b16 %v373
  %v2342 = vunpack.c.l.b16 %v374
  %v2343 = vunpack.c.l.b16 %v375
  %v2344 = vunpack.c.l.b16 %v376
  %v2345 = vpack.c.b16 %v2342, %v2341
  %v2346 = vpack.c.b16 %v2344, %v2343
  %v2350 = vsel %vm591, %v2323, 0
  %v2353 = vsel %vm591, %v2324, 0
  %v2356 = vsel %vm591, %v2325, 0
  %v2359 = vsel %vm591, %v2326, 0
  %v2362 = vsel %vm591, %v2327, 0
  %v2365 = vsel %vm591, %v2328, 0
  %v2368 = vsel %vm591, %v2329, 0
  %v2371 = vsel %vm591, %v2330, 0
  %2373 = vmatprep.subr.bf16.mxu0 0
  %2374 = vmatpush1.bf16.msra.mxu0 0
  %2375 = vmatprep.subr.bf16.mxu0 0
  %2376 = vmatpush1.bf16.msra.mxu0 0
  %2377 = vmatprep.subr.bf16.mxu0 0
  %2378 = vmatpush1.bf16.msra.mxu0 0
  %2379 = vmatprep.subr.bf16.mxu0 0
  %2380 = vmatpush1.bf16.msra.mxu0 0
  %2381 = vmatprep.subr.bf16.mxu0 0
  %2382 = vmatpush1.bf16.msra.mxu0 0
  %2383 = vmatprep.subr.bf16.mxu0 0
  %2384 = vmatpush1.bf16.msra.mxu0 0
  %2385 = vmatprep.subr.bf16.mxu0 0
  %2386 = vmatpush1.bf16.msra.mxu0 %v2346
  %2387 = vmatprep.subr.bf16.mxu0 0
  %2388 = vmatpush1.bf16.msra.mxu0 %v2345
  %2389 = vmatprep.subr.bf16.mxu0 0
  %2390 = vmatpush2.bf16.msra.mxu0 0
  %2391 = vmatprep.subr.bf16.mxu0 0
  %2392 = vmatpush2.bf16.msra.mxu0 0
  %2393 = vmatprep.subr.bf16.mxu0 0
  %2394 = vmatpush2.bf16.msra.mxu0 0
  %2395 = vmatprep.subr.bf16.mxu0 0
  %2396 = vmatpush2.bf16.msra.mxu0 0
  %2397 = vmatprep.subr.bf16.mxu0 0
  %2398 = vmatpush2.bf16.msra.mxu0 0
  %2399 = vmatprep.subr.bf16.mxu0 0
  %2400 = vmatpush2.bf16.msra.mxu0 0
  %2401 = vmatprep.subr.bf16.mxu0 0
  %2402 = vmatpush2.bf16.msra.mxu0 0
  %2403 = vmatprep.subr.bf16.mxu0 0
  %2404 = vmatpush2.bf16.msra.mxu0 0
  %2405 = vmatprep.mubr.bf16.mxu0 0
  %2406 = vmatmul.mubr.bf16.gmra.mxu0 %v2350
  %v2407 = vpop.f32.mrf.mxu0
  %v2408 = vadd.f32 %v2335, %v2407
  %v2409 = vpop.f32.mrf.mxu0
  %v2410 = vpop.f32.mrf.mxu0
  %v2411 = vadd.f32 %v2335, %v2410
  %v2412 = vpop.f32.mrf.mxu0
  %2413 = vmatprep.mubr.bf16.mxu0 0
  %2414 = vmatmul.mubr.bf16.gmra.mxu0 %v2353
  %v2415 = vpop.f32.mrf.mxu0
  %v2416 = vadd.f32 %v2335, %v2415
  %v2417 = vpop.f32.mrf.mxu0
  %v2418 = vpop.f32.mrf.mxu0
  %v2419 = vadd.f32 %v2335, %v2418
  %v2420 = vpop.f32.mrf.mxu0
  %2421 = vmatprep.mubr.bf16.mxu0 0
  %2422 = vmatmul.mubr.bf16.gmra.mxu0 %v2356
  %v2423 = vpop.f32.mrf.mxu0
  %v2424 = vadd.f32 %v2335, %v2423
  %v2425 = vpop.f32.mrf.mxu0
  %v2426 = vpop.f32.mrf.mxu0
  %v2427 = vadd.f32 %v2335, %v2426
  %v2428 = vpop.f32.mrf.mxu0
  %2429 = vmatprep.mubr.bf16.mxu0 0
  %2430 = vmatmul.mubr.bf16.gmra.mxu0 %v2359
  %v2431 = vpop.f32.mrf.mxu0
  %v2432 = vadd.f32 %v2335, %v2431
  %v2433 = vpop.f32.mrf.mxu0
  %v2434 = vpop.f32.mrf.mxu0
  %v2435 = vadd.f32 %v2335, %v2434
  %v2436 = vpop.f32.mrf.mxu0
  %2437 = vmatprep.mubr.bf16.mxu0 0
  %2438 = vmatmul.mubr.bf16.gmra.mxu0 %v2362
  %v2439 = vpop.f32.mrf.mxu0
  %v2440 = vadd.f32 %v2335, %v2439
  %v2441 = vpop.f32.mrf.mxu0
  %v2442 = vpop.f32.mrf.mxu0
  %v2443 = vadd.f32 %v2335, %v2442
  %v2444 = vpop.f32.mrf.mxu0
  %2445 = vmatprep.mubr.bf16.mxu0 0
  %2446 = vmatmul.mubr.bf16.gmra.mxu0 %v2365
  %v2447 = vpop.f32.mrf.mxu0
  %v2448 = vadd.f32 %v2335, %v2447
  %v2449 = vpop.f32.mrf.mxu0
  %v2450 = vpop.f32.mrf.mxu0
  %v2451 = vadd.f32 %v2335, %v2450
  %v2452 = vpop.f32.mrf.mxu0
  %2453 = vmatprep.mubr.bf16.mxu0 0
  %2454 = vmatmul.mubr.bf16.gmra.mxu0 %v2368
  %v2455 = vpop.f32.mrf.mxu0
  %v2456 = vadd.f32 %v2335, %v2455
  %v2457 = vpop.f32.mrf.mxu0
  %v2458 = vpop.f32.mrf.mxu0
  %v2459 = vadd.f32 %v2335, %v2458
  %v2460 = vpop.f32.mrf.mxu0
  %2461 = vmatprep.mubr.bf16.mxu0 0
  %2462 = vmatmul.mubr.bf16.gmra.mxu0 %v2371
  %v2463 = vpop.f32.mrf.mxu0
  %v2464 = vadd.f32 %v2335, %v2463
  %v2465 = vpop.f32.mrf.mxu0
  %v2466 = vpop.f32.mrf.mxu0
  %v2467 = vadd.f32 %v2335, %v2466
  %v2468 = vpop.f32.mrf.mxu0
  %2469 = vdwg.mxu0
  %v2470 = vmax.f32 %v2408, 0.0
  %v2471 = vmax.f32 %v2411, 0.0
  %v2472 = vmax.f32 %v2416, 0.0
  %v2473 = vmax.f32 %v2419, 0.0
  %v2474 = vmax.f32 %v2424, 0.0
  %v2475 = vmax.f32 %v2427, 0.0
  %v2476 = vmax.f32 %v2432, 0.0
  %v2477 = vmax.f32 %v2435, 0.0
  %v2478 = vmax.f32 %v2440, 0.0
  %v2479 = vmax.f32 %v2443, 0.0
  %v2480 = vmax.f32 %v2448, 0.0
  %v2481 = vmax.f32 %v2451, 0.0
  %v2482 = vmax.f32 %v2456, 0.0
  %v2483 = vmax.f32 %v2459, 0.0
  %v2484 = vmax.f32 %v2464, 0.0
  %v2485 = vmax.f32 %v2467, 0.0
  %v2486 = vpack.c.bf16 %v2471, %v2470
  %v2487 = vpack.c.bf16 %v2473, %v2472
  %v2488 = vpack.c.bf16 %v2475, %v2474
  %v2489 = vpack.c.bf16 %v2477, %v2476
  %v2490 = vpack.c.bf16 %v2479, %v2478
  %v2491 = vpack.c.bf16 %v2481, %v2480
  %v2492 = vpack.c.bf16 %v2483, %v2482
  %v2493 = vpack.c.bf16 %v2485, %v2484
  %v2495 = vlaneseq
  %v2496 = vshrl.u32 %v2495, 7
  %v2497 = vsub.s32 0, %v2496
  %v2498 = vrot.slane %v382, %v2497
  %v2504 = vunpack.c.l.b16 %v378
  %v2505 = vunpack.c.l.b16 %v379
  %v2506 = vunpack.c.l.b16 %v380
  %v2507 = vunpack.c.l.b16 %v381
  %v2508 = vpack.c.b16 %v2505, %v2504
  %v2509 = vpack.c.b16 %v2507, %v2506
  %v2513 = vsel %vm591, %v2486, 0
  %v2516 = vsel %vm591, %v2487, 0
  %v2519 = vsel %vm591, %v2488, 0
  %v2522 = vsel %vm591, %v2489, 0
  %v2525 = vsel %vm591, %v2490, 0
  %v2528 = vsel %vm591, %v2491, 0
  %v2531 = vsel %vm591, %v2492, 0
  %v2534 = vsel %vm591, %v2493, 0
  %2536 = vmatprep.subr.bf16.mxu0 0
  %2537 = vmatpush1.bf16.msra.mxu0 0
  %2538 = vmatprep.subr.bf16.mxu0 0
  %2539 = vmatpush1.bf16.msra.mxu0 0
  %2540 = vmatprep.subr.bf16.mxu0 0
  %2541 = vmatpush1.bf16.msra.mxu0 0
  %2542 = vmatprep.subr.bf16.mxu0 0
  %2543 = vmatpush1.bf16.msra.mxu0 0
  %2544 = vmatprep.subr.bf16.mxu0 0
  %2545 = vmatpush1.bf16.msra.mxu0 0
  %2546 = vmatprep.subr.bf16.mxu0 0
  %2547 = vmatpush1.bf16.msra.mxu0 0
  %2548 = vmatprep.subr.bf16.mxu0 0
  %2549 = vmatpush1.bf16.msra.mxu0 %v2509
  %2550 = vmatprep.subr.bf16.mxu0 0
  %2551 = vmatpush1.bf16.msra.mxu0 %v2508
  %2552 = vmatprep.subr.bf16.mxu0 0
  %2553 = vmatpush2.bf16.msra.mxu0 0
  %2554 = vmatprep.subr.bf16.mxu0 0
  %2555 = vmatpush2.bf16.msra.mxu0 0
  %2556 = vmatprep.subr.bf16.mxu0 0
  %2557 = vmatpush2.bf16.msra.mxu0 0
  %2558 = vmatprep.subr.bf16.mxu0 0
  %2559 = vmatpush2.bf16.msra.mxu0 0
  %2560 = vmatprep.subr.bf16.mxu0 0
  %2561 = vmatpush2.bf16.msra.mxu0 0
  %2562 = vmatprep.subr.bf16.mxu0 0
  %2563 = vmatpush2.bf16.msra.mxu0 0
  %2564 = vmatprep.subr.bf16.mxu0 0
  %2565 = vmatpush2.bf16.msra.mxu0 0
  %2566 = vmatprep.subr.bf16.mxu0 0
  %2567 = vmatpush2.bf16.msra.mxu0 0
  %2568 = vmatprep.mubr.bf16.mxu0 0
  %2569 = vmatmul.mubr.bf16.gmra.mxu0 %v2513
  %v2570 = vpop.f32.mrf.mxu0
  %v2571 = vadd.f32 %v2498, %v2570
  %v2572 = vpop.f32.mrf.mxu0
  %v2573 = vpop.f32.mrf.mxu0
  %v2574 = vadd.f32 %v2498, %v2573
  %v2575 = vpop.f32.mrf.mxu0
  %2576 = vmatprep.mubr.bf16.mxu0 0
  %2577 = vmatmul.mubr.bf16.gmra.mxu0 %v2516
  %v2578 = vpop.f32.mrf.mxu0
  %v2579 = vadd.f32 %v2498, %v2578
  %v2580 = vpop.f32.mrf.mxu0
  %v2581 = vpop.f32.mrf.mxu0
  %v2582 = vadd.f32 %v2498, %v2581
  %v2583 = vpop.f32.mrf.mxu0
  %2584 = vmatprep.mubr.bf16.mxu0 0
  %2585 = vmatmul.mubr.bf16.gmra.mxu0 %v2519
  %v2586 = vpop.f32.mrf.mxu0
  %v2587 = vadd.f32 %v2498, %v2586
  %v2588 = vpop.f32.mrf.mxu0
  %v2589 = vpop.f32.mrf.mxu0
  %v2590 = vadd.f32 %v2498, %v2589
  %v2591 = vpop.f32.mrf.mxu0
  %2592 = vmatprep.mubr.bf16.mxu0 0
  %2593 = vmatmul.mubr.bf16.gmra.mxu0 %v2522
  %v2594 = vpop.f32.mrf.mxu0
  %v2595 = vadd.f32 %v2498, %v2594
  %v2596 = vpop.f32.mrf.mxu0
  %v2597 = vpop.f32.mrf.mxu0
  %v2598 = vadd.f32 %v2498, %v2597
  %v2599 = vpop.f32.mrf.mxu0
  %2600 = vmatprep.mubr.bf16.mxu0 0
  %2601 = vmatmul.mubr.bf16.gmra.mxu0 %v2525
  %v2602 = vpop.f32.mrf.mxu0
  %v2603 = vadd.f32 %v2498, %v2602
  %v2604 = vpop.f32.mrf.mxu0
  %v2605 = vpop.f32.mrf.mxu0
  %v2606 = vadd.f32 %v2498, %v2605
  %v2607 = vpop.f32.mrf.mxu0
  %2608 = vmatprep.mubr.bf16.mxu0 0
  %2609 = vmatmul.mubr.bf16.gmra.mxu0 %v2528
  %v2610 = vpop.f32.mrf.mxu0
  %v2611 = vadd.f32 %v2498, %v2610
  %v2612 = vpop.f32.mrf.mxu0
  %v2613 = vpop.f32.mrf.mxu0
  %v2614 = vadd.f32 %v2498, %v2613
  %v2615 = vpop.f32.mrf.mxu0
  %2616 = vmatprep.mubr.bf16.mxu0 0
  %2617 = vmatmul.mubr.bf16.gmra.mxu0 %v2531
  %v2618 = vpop.f32.mrf.mxu0
  %v2619 = vadd.f32 %v2498, %v2618
  %v2620 = vpop.f32.mrf.mxu0
  %v2621 = vpop.f32.mrf.mxu0
  %v2622 = vadd.f32 %v2498, %v2621
  %v2623 = vpop.f32.mrf.mxu0
  %2624 = vmatprep.mubr.bf16.mxu0 0
  %2625 = vmatmul.mubr.bf16.gmra.mxu0 %v2534
  %v2626 = vpop.f32.mrf.mxu0
  %v2627 = vadd.f32 %v2498, %v2626
  %v2628 = vpop.f32.mrf.mxu0
  %v2629 = vpop.f32.mrf.mxu0
  %v2630 = vadd.f32 %v2498, %v2629
  %v2631 = vpop.f32.mrf.mxu0
  %2632 = vdwg.mxu0
  %v2633 = vsel %vm591, %v2571, 0.0
  %2634 = vadd.xlane.f32.xlu0 %v2633
  %v2635 = vpop.xlane.xlu0 %2634
  %v2636 = vsel %vm591, %v2574, 0.0
  %2637 = vadd.xlane.f32.xlu0 %v2636
  %v2638 = vpop.xlane.xlu0 %2637
  %v2639 = vsel %vm591, %v2579, 0.0
  %2640 = vadd.xlane.f32.xlu0 %v2639
  %v2641 = vpop.xlane.xlu0 %2640
  %v2642 = vsel %vm591, %v2582, 0.0
  %2643 = vadd.xlane.f32.xlu0 %v2642
  %v2644 = vpop.xlane.xlu0 %2643
  %v2645 = vsel %vm591, %v2587, 0.0
  %2646 = vadd.xlane.f32.xlu0 %v2645
  %v2647 = vpop.xlane.xlu0 %2646
  %v2648 = vsel %vm591, %v2590, 0.0
  %2649 = vadd.xlane.f32.xlu0 %v2648
  %v2650 = vpop.xlane.xlu0 %2649
  %v2651 = vsel %vm591, %v2595, 0.0
  %2652 = vadd.xlane.f32.xlu0 %v2651
  %v2653 = vpop.xlane.xlu0 %2652
  %v2654 = vsel %vm591, %v2598, 0.0
  %2655 = vadd.xlane.f32.xlu0 %v2654
  %v2656 = vpop.xlane.xlu0 %2655
  %v2657 = vsel %vm591, %v2603, 0.0
  %2658 = vadd.xlane.f32.xlu0 %v2657
  %v2659 = vpop.xlane.xlu0 %2658
  %v2660 = vsel %vm591, %v2606, 0.0
  %2661 = vadd.xlane.f32.xlu0 %v2660
  %v2662 = vpop.xlane.xlu0 %2661
  %v2663 = vsel %vm591, %v2611, 0.0
  %2664 = vadd.xlane.f32.xlu0 %v2663
  %v2665 = vpop.xlane.xlu0 %2664
  %v2666 = vsel %vm591, %v2614, 0.0
  %2667 = vadd.xlane.f32.xlu0 %v2666
  %v2668 = vpop.xlane.xlu0 %2667
  %v2669 = vsel %vm591, %v2619, 0.0
  %2670 = vadd.xlane.f32.xlu0 %v2669
  %v2671 = vpop.xlane.xlu0 %2670
  %v2672 = vsel %vm591, %v2622, 0.0
  %2673 = vadd.xlane.f32.xlu0 %v2672
  %v2674 = vpop.xlane.xlu0 %2673
  %v2675 = vsel %vm591, %v2627, 0.0
  %2676 = vadd.xlane.f32.xlu0 %v2675
  %v2677 = vpop.xlane.xlu0 %2676
  %v2678 = vsel %vm591, %v2630, 0.0
  %2679 = vadd.xlane.f32.xlu0 %v2678
  %v2680 = vpop.xlane.xlu0 %2679
  %v2681 = vmul.f32 %v2635, %v800
  %v2682 = vmul.f32 %v2638, %v800
  %v2683 = vmul.f32 %v2641, %v800
  %v2684 = vmul.f32 %v2644, %v800
  %v2685 = vmul.f32 %v2647, %v800
  %v2686 = vmul.f32 %v2650, %v800
  %v2687 = vmul.f32 %v2653, %v800
  %v2688 = vmul.f32 %v2656, %v800
  %v2689 = vmul.f32 %v2659, %v800
  %v2690 = vmul.f32 %v2662, %v800
  %v2691 = vmul.f32 %v2665, %v800
  %v2692 = vmul.f32 %v2668, %v800
  %v2693 = vmul.f32 %v2671, %v800
  %v2694 = vmul.f32 %v2674, %v800
  %v2695 = vmul.f32 %v2677, %v800
  %v2696 = vmul.f32 %v2680, %v800
  %v2697 = vsub.f32 %v2571, %v2681
  %v2698 = vsub.f32 %v2574, %v2682
  %v2699 = vsub.f32 %v2579, %v2683
  %v2700 = vsub.f32 %v2582, %v2684
  %v2701 = vsub.f32 %v2587, %v2685
  %v2702 = vsub.f32 %v2590, %v2686
  %v2703 = vsub.f32 %v2595, %v2687
  %v2704 = vsub.f32 %v2598, %v2688
  %v2705 = vsub.f32 %v2603, %v2689
  %v2706 = vsub.f32 %v2606, %v2690
  %v2707 = vsub.f32 %v2611, %v2691
  %v2708 = vsub.f32 %v2614, %v2692
  %v2709 = vsub.f32 %v2619, %v2693
  %v2710 = vsub.f32 %v2622, %v2694
  %v2711 = vsub.f32 %v2627, %v2695
  %v2712 = vsub.f32 %v2630, %v2696
  %v2713 = vmul.f32 %v2697, %v2697
  %v2714 = vmul.f32 %v2698, %v2698
  %v2715 = vmul.f32 %v2699, %v2699
  %v2716 = vmul.f32 %v2700, %v2700
  %v2717 = vmul.f32 %v2701, %v2701
  %v2718 = vmul.f32 %v2702, %v2702
  %v2719 = vmul.f32 %v2703, %v2703
  %v2720 = vmul.f32 %v2704, %v2704
  %v2721 = vmul.f32 %v2705, %v2705
  %v2722 = vmul.f32 %v2706, %v2706
  %v2723 = vmul.f32 %v2707, %v2707
  %v2724 = vmul.f32 %v2708, %v2708
  %v2725 = vmul.f32 %v2709, %v2709
  %v2726 = vmul.f32 %v2710, %v2710
  %v2727 = vmul.f32 %v2711, %v2711
  %v2728 = vmul.f32 %v2712, %v2712
  %v2729 = vsel %vm591, %v2713, 0.0
  %2730 = vadd.xlane.f32.xlu0 %v2729
  %v2731 = vpop.xlane.xlu0 %2730
  %v2732 = vsel %vm591, %v2714, 0.0
  %2733 = vadd.xlane.f32.xlu0 %v2732
  %v2734 = vpop.xlane.xlu0 %2733
  %v2735 = vsel %vm591, %v2715, 0.0
  %2736 = vadd.xlane.f32.xlu0 %v2735
  %v2737 = vpop.xlane.xlu0 %2736
  %v2738 = vsel %vm591, %v2716, 0.0
  %2739 = vadd.xlane.f32.xlu0 %v2738
  %v2740 = vpop.xlane.xlu0 %2739
  %v2741 = vsel %vm591, %v2717, 0.0
  %2742 = vadd.xlane.f32.xlu0 %v2741
  %v2743 = vpop.xlane.xlu0 %2742
  %v2744 = vsel %vm591, %v2718, 0.0
  %2745 = vadd.xlane.f32.xlu0 %v2744
  %v2746 = vpop.xlane.xlu0 %2745
  %v2747 = vsel %vm591, %v2719, 0.0
  %2748 = vadd.xlane.f32.xlu0 %v2747
  %v2749 = vpop.xlane.xlu0 %2748
  %v2750 = vsel %vm591, %v2720, 0.0
  %2751 = vadd.xlane.f32.xlu0 %v2750
  %v2752 = vpop.xlane.xlu0 %2751
  %v2753 = vsel %vm591, %v2721, 0.0
  %2754 = vadd.xlane.f32.xlu0 %v2753
  %v2755 = vpop.xlane.xlu0 %2754
  %v2756 = vsel %vm591, %v2722, 0.0
  %2757 = vadd.xlane.f32.xlu0 %v2756
  %v2758 = vpop.xlane.xlu0 %2757
  %v2759 = vsel %vm591, %v2723, 0.0
  %2760 = vadd.xlane.f32.xlu0 %v2759
  %v2761 = vpop.xlane.xlu0 %2760
  %v2762 = vsel %vm591, %v2724, 0.0
  %2763 = vadd.xlane.f32.xlu0 %v2762
  %v2764 = vpop.xlane.xlu0 %2763
  %v2765 = vsel %vm591, %v2725, 0.0
  %2766 = vadd.xlane.f32.xlu0 %v2765
  %v2767 = vpop.xlane.xlu0 %2766
  %v2768 = vsel %vm591, %v2726, 0.0
  %2769 = vadd.xlane.f32.xlu0 %v2768
  %v2770 = vpop.xlane.xlu0 %2769
  %v2771 = vsel %vm591, %v2727, 0.0
  %2772 = vadd.xlane.f32.xlu0 %v2771
  %v2773 = vpop.xlane.xlu0 %2772
  %v2774 = vsel %vm591, %v2728, 0.0
  %2775 = vadd.xlane.f32.xlu0 %v2774
  %v2776 = vpop.xlane.xlu0 %2775
  %v2777 = vmul.f32 %v2731, %v800
  %v2778 = vmul.f32 %v2734, %v800
  %v2779 = vmul.f32 %v2737, %v800
  %v2780 = vmul.f32 %v2740, %v800
  %v2781 = vmul.f32 %v2743, %v800
  %v2782 = vmul.f32 %v2746, %v800
  %v2783 = vmul.f32 %v2749, %v800
  %v2784 = vmul.f32 %v2752, %v800
  %v2785 = vmul.f32 %v2755, %v800
  %v2786 = vmul.f32 %v2758, %v800
  %v2787 = vmul.f32 %v2761, %v800
  %v2788 = vmul.f32 %v2764, %v800
  %v2789 = vmul.f32 %v2767, %v800
  %v2790 = vmul.f32 %v2770, %v800
  %v2791 = vmul.f32 %v2773, %v800
  %v2792 = vmul.f32 %v2776, %v800
  %v2793 = vadd.f32 %v2777, 1e-05
  %v2794 = vadd.f32 %v2778, 1e-05
  %v2795 = vadd.f32 %v2779, 1e-05
  %v2796 = vadd.f32 %v2780, 1e-05
  %v2797 = vadd.f32 %v2781, 1e-05
  %v2798 = vadd.f32 %v2782, 1e-05
  %v2799 = vadd.f32 %v2783, 1e-05
  %v2800 = vadd.f32 %v2784, 1e-05
  %v2801 = vadd.f32 %v2785, 1e-05
  %v2802 = vadd.f32 %v2786, 1e-05
  %v2803 = vadd.f32 %v2787, 1e-05
  %v2804 = vadd.f32 %v2788, 1e-05
  %v2805 = vadd.f32 %v2789, 1e-05
  %v2806 = vadd.f32 %v2790, 1e-05
  %v2807 = vadd.f32 %v2791, 1e-05
  %v2808 = vadd.f32 %v2792, 1e-05
  %v2809 = vrsqrt.pop %v2793
  %v2810 = vrsqrt.pop %v2794
  %v2811 = vrsqrt.pop %v2795
  %v2812 = vrsqrt.pop %v2796
  %v2813 = vrsqrt.pop %v2797
  %v2814 = vrsqrt.pop %v2798
  %v2815 = vrsqrt.pop %v2799
  %v2816 = vrsqrt.pop %v2800
  %v2817 = vrsqrt.pop %v2801
  %v2818 = vrsqrt.pop %v2802
  %v2819 = vrsqrt.pop %v2803
  %v2820 = vrsqrt.pop %v2804
  %v2821 = vrsqrt.pop %v2805
  %v2822 = vrsqrt.pop %v2806
  %v2823 = vrsqrt.pop %v2807
  %v2824 = vrsqrt.pop %v2808
  %v2825 = vmul.f32 %v2697, %v2809
  %v2826 = vmul.f32 %v2698, %v2810
  %v2827 = vmul.f32 %v2699, %v2811
  %v2828 = vmul.f32 %v2700, %v2812
  %v2829 = vmul.f32 %v2701, %v2813
  %v2830 = vmul.f32 %v2702, %v2814
  %v2831 = vmul.f32 %v2703, %v2815
  %v2832 = vmul.f32 %v2704, %v2816
  %v2833 = vmul.f32 %v2705, %v2817
  %v2834 = vmul.f32 %v2706, %v2818
  %v2835 = vmul.f32 %v2707, %v2819
  %v2836 = vmul.f32 %v2708, %v2820
  %v2837 = vmul.f32 %v2709, %v2821
  %v2838 = vmul.f32 %v2710, %v2822
  %v2839 = vmul.f32 %v2711, %v2823
  %v2840 = vmul.f32 %v2712, %v2824
  %v2842 = vlaneseq
  %v2843 = vshrl.u32 %v2842, 7
  %v2844 = vsub.s32 0, %v2843
  %v2845 = vrot.slane %v383, %v2844
  %v2847 = vmul.f32 %v2825, %v2845
  %v2848 = vmul.f32 %v2826, %v2845
  %v2849 = vmul.f32 %v2827, %v2845
  %v2850 = vmul.f32 %v2828, %v2845
  %v2851 = vmul.f32 %v2829, %v2845
  %v2852 = vmul.f32 %v2830, %v2845
  %v2853 = vmul.f32 %v2831, %v2845
  %v2854 = vmul.f32 %v2832, %v2845
  %v2855 = vmul.f32 %v2833, %v2845
  %v2856 = vmul.f32 %v2834, %v2845
  %v2857 = vmul.f32 %v2835, %v2845
  %v2858 = vmul.f32 %v2836, %v2845
  %v2859 = vmul.f32 %v2837, %v2845
  %v2860 = vmul.f32 %v2838, %v2845
  %v2861 = vmul.f32 %v2839, %v2845
  %v2862 = vmul.f32 %v2840, %v2845
  %v2864 = vlaneseq
  %v2865 = vshrl.u32 %v2864, 7
  %v2866 = vsub.s32 0, %v2865
  %v2867 = vrot.slane %v384, %v2866
  %v2869 = vadd.f32 %v2847, %v2867
  %v2870 = vadd.f32 %v2848, %v2867
  %v2871 = vadd.f32 %v2849, %v2867
  %v2872 = vadd.f32 %v2850, %v2867
  %v2873 = vadd.f32 %v2851, %v2867
  %v2874 = vadd.f32 %v2852, %v2867
  %v2875 = vadd.f32 %v2853, %v2867
  %v2876 = vadd.f32 %v2854, %v2867
  %v2877 = vadd.f32 %v2855, %v2867
  %v2878 = vadd.f32 %v2856, %v2867
  %v2879 = vadd.f32 %v2857, %v2867
  %v2880 = vadd.f32 %v2858, %v2867
  %v2881 = vadd.f32 %v2859, %v2867
  %v2882 = vadd.f32 %v2860, %v2867
  %v2883 = vadd.f32 %v2861, %v2867
  %v2884 = vadd.f32 %v2862, %v2867
  %v2885 = vpack.c.bf16 %v2870, %v2869
  %v2886 = vpack.c.bf16 %v2872, %v2871
  %v2887 = vpack.c.bf16 %v2874, %v2873
  %v2888 = vpack.c.bf16 %v2876, %v2875
  %v2889 = vpack.c.bf16 %v2878, %v2877
  %v2890 = vpack.c.bf16 %v2880, %v2879
  %v2891 = vpack.c.bf16 %v2882, %v2881
  %v2892 = vpack.c.bf16 %v2884, %v2883
  %v2901 = vunpack.c.l.b16 %v323
  %v2902 = vunpack.c.l.b16 %v324
  %v2903 = vunpack.c.l.b16 %v325
  %v2904 = vunpack.c.l.b16 %v326
  %v2905 = vunpack.c.l.b16 %v327
  %v2906 = vunpack.c.l.b16 %v328
  %v2907 = vunpack.c.l.b16 %v329
  %v2908 = vunpack.c.l.b16 %v330
  %v2909 = vpack.c.b16 %v2902, %v2901
  %v2910 = vpack.c.b16 %v2904, %v2903
  %v2911 = vpack.c.b16 %v2906, %v2905
  %v2912 = vpack.c.b16 %v2908, %v2907
  %2917 = vmatprep.subr.bf16.mxu0 0
  %2918 = vmatpush1.bf16.msra.mxu0 %v2892
  %2919 = vmatprep.subr.bf16.mxu0 0
  %2920 = vmatpush1.bf16.msra.mxu0 %v2891
  %2921 = vmatprep.subr.bf16.mxu0 0
  %2922 = vmatpush1.bf16.msra.mxu0 %v2890
  %2923 = vmatprep.subr.bf16.mxu0 0
  %2924 = vmatpush1.bf16.msra.mxu0 %v2889
  %2925 = vmatprep.subr.bf16.mxu0 0
  %2926 = vmatpush1.bf16.msra.mxu0 %v2888
  %2927 = vmatprep.subr.bf16.mxu0 0
  %2928 = vmatpush1.bf16.msra.mxu0 %v2887
  %2929 = vmatprep.subr.bf16.mxu0 0
  %2930 = vmatpush1.bf16.msra.mxu0 %v2886
  %2931 = vmatprep.subr.bf16.mxu0 0
  %2932 = vmatpush1.bf16.msra.mxu0 %v2885
  %2933 = vmatprep.subr.bf16.mxu0 0
  %2934 = vmatpush2.bf16.msra.mxu0 0
  %2935 = vmatprep.subr.bf16.mxu0 0
  %2936 = vmatpush2.bf16.msra.mxu0 0
  %2937 = vmatprep.subr.bf16.mxu0 0
  %2938 = vmatpush2.bf16.msra.mxu0 0
  %2939 = vmatprep.subr.bf16.mxu0 0
  %2940 = vmatpush2.bf16.msra.mxu0 0
  %2941 = vmatprep.subr.bf16.mxu0 0
  %2942 = vmatpush2.bf16.msra.mxu0 0
  %2943 = vmatprep.subr.bf16.mxu0 0
  %2944 = vmatpush2.bf16.msra.mxu0 0
  %2945 = vmatprep.subr.bf16.mxu0 0
  %2946 = vmatpush2.bf16.msra.mxu0 0
  %2947 = vmatprep.subr.bf16.mxu0 0
  %2948 = vmatpush2.bf16.msra.mxu0 0
  %2949 = vmatprep.mubr.bf16.mxu0 0
  %2950 = vmatmul.mubr.bf16.gmra.mxu0 %v2909
  %v2951 = vpop.f32.mrf.mxu0
  %v2952 = vadd.f32 0.0, %v2951
  %v2953 = vpop.f32.mrf.mxu0
  %v2954 = vpop.f32.mrf.mxu0
  %v2955 = vadd.f32 0.0, %v2954
  %v2956 = vpop.f32.mrf.mxu0
  %2957 = vmatprep.mubr.bf16.mxu0 0
  %2958 = vmatmul.mubr.bf16.gmra.mxu0 %v2910
  %v2959 = vpop.f32.mrf.mxu0
  %v2960 = vadd.f32 0.0, %v2959
  %v2961 = vpop.f32.mrf.mxu0
  %v2962 = vpop.f32.mrf.mxu0
  %v2963 = vadd.f32 0.0, %v2962
  %v2964 = vpop.f32.mrf.mxu0
  %2965 = vmatprep.mubr.bf16.mxu0 0
  %2966 = vmatmul.mubr.bf16.gmra.mxu0 %v2911
  %v2967 = vpop.f32.mrf.mxu0
  %v2968 = vadd.f32 0.0, %v2967
  %v2969 = vpop.f32.mrf.mxu0
  %v2970 = vpop.f32.mrf.mxu0
  %v2971 = vadd.f32 0.0, %v2970
  %v2972 = vpop.f32.mrf.mxu0
  %2973 = vmatprep.mubr.bf16.mxu0 0
  %2974 = vmatmul.mubr.bf16.gmra.mxu0 %v2912
  %v2975 = vpop.f32.mrf.mxu0
  %v2976 = vadd.f32 0.0, %v2975
  %v2977 = vpop.f32.mrf.mxu0
  %v2978 = vpop.f32.mrf.mxu0
  %v2979 = vadd.f32 0.0, %v2978
  %v2980 = vpop.f32.mrf.mxu0
  %2981 = vdwg.mxu0
  %v2982 = vpack.c.bf16 %v2955, %v2952
  %v2983 = vpack.c.bf16 %v2963, %v2960
  %v2984 = vpack.c.bf16 %v2971, %v2968
  %v2985 = vpack.c.bf16 %v2979, %v2976
  %v2990 = vunpack.c.l.b16 %v389
  %v2991 = vunpack.c.l.b16 %v390
  %v2992 = vunpack.c.l.b16 %v391
  %v2993 = vunpack.c.l.b16 %v392
  %v2994 = vpack.c.b16 %v2991, %v2990
  %v2995 = vpack.c.b16 %v2993, %v2992
  %2998 = vmatprep.subr.bf16.mxu0 0
  %2999 = vmatpush1.bf16.msra.mxu0 0
  %3000 = vmatprep.subr.bf16.mxu0 0
  %3001 = vmatpush1.bf16.msra.mxu0 0
  %3002 = vmatprep.subr.bf16.mxu0 0
  %3003 = vmatpush1.bf16.msra.mxu0 0
  %3004 = vmatprep.subr.bf16.mxu0 0
  %3005 = vmatpush1.bf16.msra.mxu0 0
  %3006 = vmatprep.subr.bf16.mxu0 0
  %3007 = vmatpush1.bf16.msra.mxu0 0
  %3008 = vmatprep.subr.bf16.mxu0 0
  %3009 = vmatpush1.bf16.msra.mxu0 0
  %3010 = vmatprep.subr.bf16.mxu0 0
  %3011 = vmatpush1.bf16.msra.mxu0 %v2995
  %3012 = vmatprep.subr.bf16.mxu0 0
  %3013 = vmatpush1.bf16.msra.mxu0 %v2994
  %3014 = vmatprep.subr.bf16.mxu0 0
  %3015 = vmatpush2.bf16.msra.mxu0 0
  %3016 = vmatprep.subr.bf16.mxu0 0
  %3017 = vmatpush2.bf16.msra.mxu0 0
  %3018 = vmatprep.subr.bf16.mxu0 0
  %3019 = vmatpush2.bf16.msra.mxu0 0
  %3020 = vmatprep.subr.bf16.mxu0 0
  %3021 = vmatpush2.bf16.msra.mxu0 0
  %3022 = vmatprep.subr.bf16.mxu0 0
  %3023 = vmatpush2.bf16.msra.mxu0 0
  %3024 = vmatprep.subr.bf16.mxu0 0
  %3025 = vmatpush2.bf16.msra.mxu0 0
  %3026 = vmatprep.subr.bf16.mxu0 0
  %3027 = vmatpush2.bf16.msra.mxu0 0
  %3028 = vmatprep.subr.bf16.mxu0 0
  %3029 = vmatpush2.bf16.msra.mxu0 0
  %3030 = vmatprep.mubr.bf16.mxu0 0
  %3031 = vmatmul.mubr.bf16.gmra.mxu0 %v1644
  %v3032 = vpop.f32.mrf.mxu0
  %v3033 = vadd.f32 0.0, %v3032
  %v3034 = vpop.f32.mrf.mxu0
  %v3035 = vpop.f32.mrf.mxu0
  %v3036 = vadd.f32 0.0, %v3035
  %v3037 = vpop.f32.mrf.mxu0
  %3038 = vmatprep.mubr.bf16.mxu0 0
  %3039 = vmatmul.mubr.bf16.gmra.mxu0 %v1647
  %v3040 = vpop.f32.mrf.mxu0
  %v3041 = vadd.f32 0.0, %v3040
  %v3042 = vpop.f32.mrf.mxu0
  %v3043 = vpop.f32.mrf.mxu0
  %v3044 = vadd.f32 0.0, %v3043
  %v3045 = vpop.f32.mrf.mxu0
  %3046 = vmatprep.mubr.bf16.mxu0 0
  %3047 = vmatmul.mubr.bf16.gmra.mxu0 %v1650
  %v3048 = vpop.f32.mrf.mxu0
  %v3049 = vadd.f32 0.0, %v3048
  %v3050 = vpop.f32.mrf.mxu0
  %v3051 = vpop.f32.mrf.mxu0
  %v3052 = vadd.f32 0.0, %v3051
  %v3053 = vpop.f32.mrf.mxu0
  %3054 = vmatprep.mubr.bf16.mxu0 0
  %3055 = vmatmul.mubr.bf16.gmra.mxu0 %v1653
  %v3056 = vpop.f32.mrf.mxu0
  %v3057 = vadd.f32 0.0, %v3056
  %v3058 = vpop.f32.mrf.mxu0
  %v3059 = vpop.f32.mrf.mxu0
  %v3060 = vadd.f32 0.0, %v3059
  %v3061 = vpop.f32.mrf.mxu0
  %3062 = vdwg.mxu0
  %v3067 = vunpack.c.l.b16 %v385
  %v3068 = vunpack.c.l.b16 %v386
  %v3069 = vunpack.c.l.b16 %v387
  %v3070 = vunpack.c.l.b16 %v388
  %v3071 = vpack.c.b16 %v3068, %v3067
  %v3072 = vpack.c.b16 %v3070, %v3069
  %v3076 = vsel %vm591, %v2982, 0
  %v3079 = vsel %vm591, %v2983, 0
  %v3082 = vsel %vm591, %v2984, 0
  %v3085 = vsel %vm591, %v2985, 0
  %3087 = vmatprep.subr.bf16.mxu0 0
  %3088 = vmatpush1.bf16.msra.mxu0 0
  %3089 = vmatprep.subr.bf16.mxu0 0
  %3090 = vmatpush1.bf16.msra.mxu0 0
  %3091 = vmatprep.subr.bf16.mxu0 0
  %3092 = vmatpush1.bf16.msra.mxu0 0
  %3093 = vmatprep.subr.bf16.mxu0 0
  %3094 = vmatpush1.bf16.msra.mxu0 0
  %3095 = vmatprep.subr.bf16.mxu0 0
  %3096 = vmatpush1.bf16.msra.mxu0 0
  %3097 = vmatprep.subr.bf16.mxu0 0
  %3098 = vmatpush1.bf16.msra.mxu0 0
  %3099 = vmatprep.subr.bf16.mxu0 0
  %3100 = vmatpush1.bf16.msra.mxu0 %v3072
  %3101 = vmatprep.subr.bf16.mxu0 0
  %3102 = vmatpush1.bf16.msra.mxu0 %v3071
  %3103 = vmatprep.subr.bf16.mxu0 0
  %3104 = vmatpush2.bf16.msra.mxu0 0
  %3105 = vmatprep.subr.bf16.mxu0 0
  %3106 = vmatpush2.bf16.msra.mxu0 0
  %3107 = vmatprep.subr.bf16.mxu0 0
  %3108 = vmatpush2.bf16.msra.mxu0 0
  %3109 = vmatprep.subr.bf16.mxu0 0
  %3110 = vmatpush2.bf16.msra.mxu0 0
  %3111 = vmatprep.subr.bf16.mxu0 0
  %3112 = vmatpush2.bf16.msra.mxu0 0
  %3113 = vmatprep.subr.bf16.mxu0 0
  %3114 = vmatpush2.bf16.msra.mxu0 0
  %3115 = vmatprep.subr.bf16.mxu0 0
  %3116 = vmatpush2.bf16.msra.mxu0 0
  %3117 = vmatprep.subr.bf16.mxu0 0
  %3118 = vmatpush2.bf16.msra.mxu0 0
  %3119 = vmatprep.mubr.bf16.mxu0 0
  %3120 = vmatmul.mubr.bf16.gmra.mxu0 %v3076
  %v3121 = vpop.f32.mrf.mxu0
  %v3122 = vadd.f32 %v3033, %v3121
  %v3123 = vpop.f32.mrf.mxu0
  %v3124 = vpop.f32.mrf.mxu0
  %v3125 = vadd.f32 %v3036, %v3124
  %v3126 = vpop.f32.mrf.mxu0
  %3127 = vmatprep.mubr.bf16.mxu0 0
  %3128 = vmatmul.mubr.bf16.gmra.mxu0 %v3079
  %v3129 = vpop.f32.mrf.mxu0
  %v3130 = vadd.f32 %v3041, %v3129
  %v3131 = vpop.f32.mrf.mxu0
  %v3132 = vpop.f32.mrf.mxu0
  %v3133 = vadd.f32 %v3044, %v3132
  %v3134 = vpop.f32.mrf.mxu0
  %3135 = vmatprep.mubr.bf16.mxu0 0
  %3136 = vmatmul.mubr.bf16.gmra.mxu0 %v3082
  %v3137 = vpop.f32.mrf.mxu0
  %v3138 = vadd.f32 %v3049, %v3137
  %v3139 = vpop.f32.mrf.mxu0
  %v3140 = vpop.f32.mrf.mxu0
  %v3141 = vadd.f32 %v3052, %v3140
  %v3142 = vpop.f32.mrf.mxu0
  %3143 = vmatprep.mubr.bf16.mxu0 0
  %3144 = vmatmul.mubr.bf16.gmra.mxu0 %v3085
  %v3145 = vpop.f32.mrf.mxu0
  %v3146 = vadd.f32 %v3057, %v3145
  %v3147 = vpop.f32.mrf.mxu0
  %v3148 = vpop.f32.mrf.mxu0
  %v3149 = vadd.f32 %v3060, %v3148
  %v3150 = vpop.f32.mrf.mxu0
  %3151 = vdwg.mxu0
  %v3153 = vlaneseq
  %v3154 = vshrl.u32 %v3153, 7
  %v3155 = vsub.s32 0, %v3154
  %v3156 = vrot.slane %v393, %v3155
  %v3158 = vadd.f32 %v3122, %v3156
  %v3159 = vadd.f32 %v3125, %v3156
  %v3160 = vadd.f32 %v3130, %v3156
  %v3161 = vadd.f32 %v3133, %v3156
  %v3162 = vadd.f32 %v3138, %v3156
  %v3163 = vadd.f32 %v3141, %v3156
  %v3164 = vadd.f32 %v3146, %v3156
  %v3165 = vadd.f32 %v3149, %v3156
  %v3166 = vmax.f32 %v3158, 0.0
  %v3167 = vmax.f32 %v3159, 0.0
  %v3168 = vmax.f32 %v3160, 0.0
  %v3169 = vmax.f32 %v3161, 0.0
  %v3170 = vmax.f32 %v3162, 0.0
  %v3171 = vmax.f32 %v3163, 0.0
  %v3172 = vmax.f32 %v3164, 0.0
  %v3173 = vmax.f32 %v3165, 0.0
  %v3174 = vpack.c.bf16 %v3167, %v3166
  %v3175 = vpack.c.bf16 %v3169, %v3168
  %v3176 = vpack.c.bf16 %v3171, %v3170
  %v3177 = vpack.c.bf16 %v3173, %v3172
  %v3179 = vlaneseq
  %v3180 = vshrl.u32 %v3179, 7
  %v3181 = vsub.s32 0, %v3180
  %v3182 = vrot.slane %v398, %v3181
  %v3188 = vunpack.c.l.b16 %v394
  %v3189 = vunpack.c.l.b16 %v395
  %v3190 = vunpack.c.l.b16 %v396
  %v3191 = vunpack.c.l.b16 %v397
  %v3192 = vpack.c.b16 %v3189, %v3188
  %v3193 = vpack.c.b16 %v3191, %v3190
  %v3197 = vsel %vm591, %v3174, 0
  %v3200 = vsel %vm591, %v3175, 0
  %v3203 = vsel %vm591, %v3176, 0
  %v3206 = vsel %vm591, %v3177, 0
  %3208 = vmatprep.subr.bf16.mxu0 0
  %3209 = vmatpush1.bf16.msra.mxu0 0
  %3210 = vmatprep.subr.bf16.mxu0 0
  %3211 = vmatpush1.bf16.msra.mxu0 0
  %3212 = vmatprep.subr.bf16.mxu0 0
  %3213 = vmatpush1.bf16.msra.mxu0 0
  %3214 = vmatprep.subr.bf16.mxu0 0
  %3215 = vmatpush1.bf16.msra.mxu0 0
  %3216 = vmatprep.subr.bf16.mxu0 0
  %3217 = vmatpush1.bf16.msra.mxu0 0
  %3218 = vmatprep.subr.bf16.mxu0 0
  %3219 = vmatpush1.bf16.msra.mxu0 0
  %3220 = vmatprep.subr.bf16.mxu0 0
  %3221 = vmatpush1.bf16.msra.mxu0 %v3193
  %3222 = vmatprep.subr.bf16.mxu0 0
  %3223 = vmatpush1.bf16.msra.mxu0 %v3192
  %3224 = vmatprep.subr.bf16.mxu0 0
  %3225 = vmatpush2.bf16.msra.mxu0 0
  %3226 = vmatprep.subr.bf16.mxu0 0
  %3227 = vmatpush2.bf16.msra.mxu0 0
  %3228 = vmatprep.subr.bf16.mxu0 0
  %3229 = vmatpush2.bf16.msra.mxu0 0
  %3230 = vmatprep.subr.bf16.mxu0 0
  %3231 = vmatpush2.bf16.msra.mxu0 0
  %3232 = vmatprep.subr.bf16.mxu0 0
  %3233 = vmatpush2.bf16.msra.mxu0 0
  %3234 = vmatprep.subr.bf16.mxu0 0
  %3235 = vmatpush2.bf16.msra.mxu0 0
  %3236 = vmatprep.subr.bf16.mxu0 0
  %3237 = vmatpush2.bf16.msra.mxu0 0
  %3238 = vmatprep.subr.bf16.mxu0 0
  %3239 = vmatpush2.bf16.msra.mxu0 0
  %3240 = vmatprep.mubr.bf16.mxu0 0
  %3241 = vmatmul.mubr.bf16.gmra.mxu0 %v3197
  %v3242 = vpop.f32.mrf.mxu0
  %v3243 = vadd.f32 %v3182, %v3242
  %v3244 = vpop.f32.mrf.mxu0
  %v3245 = vpop.f32.mrf.mxu0
  %v3246 = vadd.f32 %v3182, %v3245
  %v3247 = vpop.f32.mrf.mxu0
  %3248 = vmatprep.mubr.bf16.mxu0 0
  %3249 = vmatmul.mubr.bf16.gmra.mxu0 %v3200
  %v3250 = vpop.f32.mrf.mxu0
  %v3251 = vadd.f32 %v3182, %v3250
  %v3252 = vpop.f32.mrf.mxu0
  %v3253 = vpop.f32.mrf.mxu0
  %v3254 = vadd.f32 %v3182, %v3253
  %v3255 = vpop.f32.mrf.mxu0
  %3256 = vmatprep.mubr.bf16.mxu0 0
  %3257 = vmatmul.mubr.bf16.gmra.mxu0 %v3203
  %v3258 = vpop.f32.mrf.mxu0
  %v3259 = vadd.f32 %v3182, %v3258
  %v3260 = vpop.f32.mrf.mxu0
  %v3261 = vpop.f32.mrf.mxu0
  %v3262 = vadd.f32 %v3182, %v3261
  %v3263 = vpop.f32.mrf.mxu0
  %3264 = vmatprep.mubr.bf16.mxu0 0
  %3265 = vmatmul.mubr.bf16.gmra.mxu0 %v3206
  %v3266 = vpop.f32.mrf.mxu0
  %v3267 = vadd.f32 %v3182, %v3266
  %v3268 = vpop.f32.mrf.mxu0
  %v3269 = vpop.f32.mrf.mxu0
  %v3270 = vadd.f32 %v3182, %v3269
  %v3271 = vpop.f32.mrf.mxu0
  %3272 = vdwg.mxu0
  %v3273 = vmax.f32 %v3243, 0.0
  %v3274 = vmax.f32 %v3246, 0.0
  %v3275 = vmax.f32 %v3251, 0.0
  %v3276 = vmax.f32 %v3254, 0.0
  %v3277 = vmax.f32 %v3259, 0.0
  %v3278 = vmax.f32 %v3262, 0.0
  %v3279 = vmax.f32 %v3267, 0.0
  %v3280 = vmax.f32 %v3270, 0.0
  %v3281 = vpack.c.bf16 %v3274, %v3273
  %v3282 = vpack.c.bf16 %v3276, %v3275
  %v3283 = vpack.c.bf16 %v3278, %v3277
  %v3284 = vpack.c.bf16 %v3280, %v3279
  %v3286 = vlaneseq
  %v3287 = vshrl.u32 %v3286, 7
  %v3288 = vsub.s32 0, %v3287
  %v3289 = vrot.slane %v403, %v3288
  %v3295 = vunpack.c.l.b16 %v399
  %v3296 = vunpack.c.l.b16 %v400
  %v3297 = vunpack.c.l.b16 %v401
  %v3298 = vunpack.c.l.b16 %v402
  %v3299 = vpack.c.b16 %v3296, %v3295
  %v3300 = vpack.c.b16 %v3298, %v3297
  %v3304 = vsel %vm591, %v3281, 0
  %v3307 = vsel %vm591, %v3282, 0
  %v3310 = vsel %vm591, %v3283, 0
  %v3313 = vsel %vm591, %v3284, 0
  %3315 = vmatprep.subr.bf16.mxu0 0
  %3316 = vmatpush1.bf16.msra.mxu0 0
  %3317 = vmatprep.subr.bf16.mxu0 0
  %3318 = vmatpush1.bf16.msra.mxu0 0
  %3319 = vmatprep.subr.bf16.mxu0 0
  %3320 = vmatpush1.bf16.msra.mxu0 0
  %3321 = vmatprep.subr.bf16.mxu0 0
  %3322 = vmatpush1.bf16.msra.mxu0 0
  %3323 = vmatprep.subr.bf16.mxu0 0
  %3324 = vmatpush1.bf16.msra.mxu0 0
  %3325 = vmatprep.subr.bf16.mxu0 0
  %3326 = vmatpush1.bf16.msra.mxu0 0
  %3327 = vmatprep.subr.bf16.mxu0 0
  %3328 = vmatpush1.bf16.msra.mxu0 %v3300
  %3329 = vmatprep.subr.bf16.mxu0 0
  %3330 = vmatpush1.bf16.msra.mxu0 %v3299
  %3331 = vmatprep.subr.bf16.mxu0 0
  %3332 = vmatpush2.bf16.msra.mxu0 0
  %3333 = vmatprep.subr.bf16.mxu0 0
  %3334 = vmatpush2.bf16.msra.mxu0 0
  %3335 = vmatprep.subr.bf16.mxu0 0
  %3336 = vmatpush2.bf16.msra.mxu0 0
  %3337 = vmatprep.subr.bf16.mxu0 0
  %3338 = vmatpush2.bf16.msra.mxu0 0
  %3339 = vmatprep.subr.bf16.mxu0 0
  %3340 = vmatpush2.bf16.msra.mxu0 0
  %3341 = vmatprep.subr.bf16.mxu0 0
  %3342 = vmatpush2.bf16.msra.mxu0 0
  %3343 = vmatprep.subr.bf16.mxu0 0
  %3344 = vmatpush2.bf16.msra.mxu0 0
  %3345 = vmatprep.subr.bf16.mxu0 0
  %3346 = vmatpush2.bf16.msra.mxu0 0
  %3347 = vmatprep.mubr.bf16.mxu0 0
  %3348 = vmatmul.mubr.bf16.gmra.mxu0 %v3304
  %v3349 = vpop.f32.mrf.mxu0
  %v3350 = vadd.f32 %v3289, %v3349
  %v3351 = vpop.f32.mrf.mxu0
  %v3352 = vpop.f32.mrf.mxu0
  %v3353 = vadd.f32 %v3289, %v3352
  %v3354 = vpop.f32.mrf.mxu0
  %3355 = vmatprep.mubr.bf16.mxu0 0
  %3356 = vmatmul.mubr.bf16.gmra.mxu0 %v3307
  %v3357 = vpop.f32.mrf.mxu0
  %v3358 = vadd.f32 %v3289, %v3357
  %v3359 = vpop.f32.mrf.mxu0
  %v3360 = vpop.f32.mrf.mxu0
  %v3361 = vadd.f32 %v3289, %v3360
  %v3362 = vpop.f32.mrf.mxu0
  %3363 = vmatprep.mubr.bf16.mxu0 0
  %3364 = vmatmul.mubr.bf16.gmra.mxu0 %v3310
  %v3365 = vpop.f32.mrf.mxu0
  %v3366 = vadd.f32 %v3289, %v3365
  %v3367 = vpop.f32.mrf.mxu0
  %v3368 = vpop.f32.mrf.mxu0
  %v3369 = vadd.f32 %v3289, %v3368
  %v3370 = vpop.f32.mrf.mxu0
  %3371 = vmatprep.mubr.bf16.mxu0 0
  %3372 = vmatmul.mubr.bf16.gmra.mxu0 %v3313
  %v3373 = vpop.f32.mrf.mxu0
  %v3374 = vadd.f32 %v3289, %v3373
  %v3375 = vpop.f32.mrf.mxu0
  %v3376 = vpop.f32.mrf.mxu0
  %v3377 = vadd.f32 %v3289, %v3376
  %v3378 = vpop.f32.mrf.mxu0
  %3379 = vdwg.mxu0
  %v3380 = vsel %vm591, %v3350, 0.0
  %3381 = vadd.xlane.f32.xlu0 %v3380
  %v3382 = vpop.xlane.xlu0 %3381
  %v3383 = vsel %vm591, %v3353, 0.0
  %3384 = vadd.xlane.f32.xlu0 %v3383
  %v3385 = vpop.xlane.xlu0 %3384
  %v3386 = vsel %vm591, %v3358, 0.0
  %3387 = vadd.xlane.f32.xlu0 %v3386
  %v3388 = vpop.xlane.xlu0 %3387
  %v3389 = vsel %vm591, %v3361, 0.0
  %3390 = vadd.xlane.f32.xlu0 %v3389
  %v3391 = vpop.xlane.xlu0 %3390
  %v3392 = vsel %vm591, %v3366, 0.0
  %3393 = vadd.xlane.f32.xlu0 %v3392
  %v3394 = vpop.xlane.xlu0 %3393
  %v3395 = vsel %vm591, %v3369, 0.0
  %3396 = vadd.xlane.f32.xlu0 %v3395
  %v3397 = vpop.xlane.xlu0 %3396
  %v3398 = vsel %vm591, %v3374, 0.0
  %3399 = vadd.xlane.f32.xlu0 %v3398
  %v3400 = vpop.xlane.xlu0 %3399
  %v3401 = vsel %vm591, %v3377, 0.0
  %3402 = vadd.xlane.f32.xlu0 %v3401
  %v3403 = vpop.xlane.xlu0 %3402
  %v3404 = vmul.f32 %v3382, %v800
  %v3405 = vmul.f32 %v3385, %v800
  %v3406 = vmul.f32 %v3388, %v800
  %v3407 = vmul.f32 %v3391, %v800
  %v3408 = vmul.f32 %v3394, %v800
  %v3409 = vmul.f32 %v3397, %v800
  %v3410 = vmul.f32 %v3400, %v800
  %v3411 = vmul.f32 %v3403, %v800
  %v3412 = vsub.f32 %v3350, %v3404
  %v3413 = vsub.f32 %v3353, %v3405
  %v3414 = vsub.f32 %v3358, %v3406
  %v3415 = vsub.f32 %v3361, %v3407
  %v3416 = vsub.f32 %v3366, %v3408
  %v3417 = vsub.f32 %v3369, %v3409
  %v3418 = vsub.f32 %v3374, %v3410
  %v3419 = vsub.f32 %v3377, %v3411
  %v3420 = vmul.f32 %v3412, %v3412
  %v3421 = vmul.f32 %v3413, %v3413
  %v3422 = vmul.f32 %v3414, %v3414
  %v3423 = vmul.f32 %v3415, %v3415
  %v3424 = vmul.f32 %v3416, %v3416
  %v3425 = vmul.f32 %v3417, %v3417
  %v3426 = vmul.f32 %v3418, %v3418
  %v3427 = vmul.f32 %v3419, %v3419
  %v3428 = vsel %vm591, %v3420, 0.0
  %3429 = vadd.xlane.f32.xlu0 %v3428
  %v3430 = vpop.xlane.xlu0 %3429
  %v3431 = vsel %vm591, %v3421, 0.0
  %3432 = vadd.xlane.f32.xlu0 %v3431
  %v3433 = vpop.xlane.xlu0 %3432
  %v3434 = vsel %vm591, %v3422, 0.0
  %3435 = vadd.xlane.f32.xlu0 %v3434
  %v3436 = vpop.xlane.xlu0 %3435
  %v3437 = vsel %vm591, %v3423, 0.0
  %3438 = vadd.xlane.f32.xlu0 %v3437
  %v3439 = vpop.xlane.xlu0 %3438
  %v3440 = vsel %vm591, %v3424, 0.0
  %3441 = vadd.xlane.f32.xlu0 %v3440
  %v3442 = vpop.xlane.xlu0 %3441
  %v3443 = vsel %vm591, %v3425, 0.0
  %3444 = vadd.xlane.f32.xlu0 %v3443
  %v3445 = vpop.xlane.xlu0 %3444
  %v3446 = vsel %vm591, %v3426, 0.0
  %3447 = vadd.xlane.f32.xlu0 %v3446
  %v3448 = vpop.xlane.xlu0 %3447
  %v3449 = vsel %vm591, %v3427, 0.0
  %3450 = vadd.xlane.f32.xlu0 %v3449
  %v3451 = vpop.xlane.xlu0 %3450
  %v3452 = vmul.f32 %v3430, %v800
  %v3453 = vmul.f32 %v3433, %v800
  %v3454 = vmul.f32 %v3436, %v800
  %v3455 = vmul.f32 %v3439, %v800
  %v3456 = vmul.f32 %v3442, %v800
  %v3457 = vmul.f32 %v3445, %v800
  %v3458 = vmul.f32 %v3448, %v800
  %v3459 = vmul.f32 %v3451, %v800
  %v3460 = vadd.f32 %v3452, 1e-05
  %v3461 = vadd.f32 %v3453, 1e-05
  %v3462 = vadd.f32 %v3454, 1e-05
  %v3463 = vadd.f32 %v3455, 1e-05
  %v3464 = vadd.f32 %v3456, 1e-05
  %v3465 = vadd.f32 %v3457, 1e-05
  %v3466 = vadd.f32 %v3458, 1e-05
  %v3467 = vadd.f32 %v3459, 1e-05
  %v3468 = vrsqrt.pop %v3460
  %v3469 = vrsqrt.pop %v3461
  %v3470 = vrsqrt.pop %v3462
  %v3471 = vrsqrt.pop %v3463
  %v3472 = vrsqrt.pop %v3464
  %v3473 = vrsqrt.pop %v3465
  %v3474 = vrsqrt.pop %v3466
  %v3475 = vrsqrt.pop %v3467
  %v3476 = vmul.f32 %v3412, %v3468
  %v3477 = vmul.f32 %v3413, %v3469
  %v3478 = vmul.f32 %v3414, %v3470
  %v3479 = vmul.f32 %v3415, %v3471
  %v3480 = vmul.f32 %v3416, %v3472
  %v3481 = vmul.f32 %v3417, %v3473
  %v3482 = vmul.f32 %v3418, %v3474
  %v3483 = vmul.f32 %v3419, %v3475
  %v3485 = vlaneseq
  %v3486 = vshrl.u32 %v3485, 7
  %v3487 = vsub.s32 0, %v3486
  %v3488 = vrot.slane %v404, %v3487
  %v3490 = vmul.f32 %v3476, %v3488
  %v3491 = vmul.f32 %v3477, %v3488
  %v3492 = vmul.f32 %v3478, %v3488
  %v3493 = vmul.f32 %v3479, %v3488
  %v3494 = vmul.f32 %v3480, %v3488
  %v3495 = vmul.f32 %v3481, %v3488
  %v3496 = vmul.f32 %v3482, %v3488
  %v3497 = vmul.f32 %v3483, %v3488
  %v3499 = vlaneseq
  %v3500 = vshrl.u32 %v3499, 7
  %v3501 = vsub.s32 0, %v3500
  %v3502 = vrot.slane %v405, %v3501
  %v3504 = vadd.f32 %v3490, %v3502
  %v3505 = vadd.f32 %v3491, %v3502
  %v3506 = vadd.f32 %v3492, %v3502
  %v3507 = vadd.f32 %v3493, %v3502
  %v3508 = vadd.f32 %v3494, %v3502
  %v3509 = vadd.f32 %v3495, %v3502
  %v3510 = vadd.f32 %v3496, %v3502
  %v3511 = vadd.f32 %v3497, %v3502
  %v3512 = vadd.f32 %v3504, %v901
  %v3513 = vadd.f32 %v3505, %v902
  %v3514 = vadd.f32 %v3506, %v903
  %v3515 = vadd.f32 %v3507, %v904
  %v3516 = vadd.f32 %v3508, %v905
  %v3517 = vadd.f32 %v3509, %v906
  %v3518 = vadd.f32 %v3510, %v907
  %v3519 = vadd.f32 %v3511, %v908
  %v3520 = vadd.f32 %v2869, %v1611
  %v3521 = vadd.f32 %v2870, %v1612
  %v3522 = vadd.f32 %v2871, %v1613
  %v3523 = vadd.f32 %v2872, %v1614
  %v3524 = vadd.f32 %v2873, %v1615
  %v3525 = vadd.f32 %v2874, %v1616
  %v3526 = vadd.f32 %v2875, %v1617
  %v3527 = vadd.f32 %v2876, %v1618
  %v3528 = vadd.f32 %v2877, %v1619
  %v3529 = vadd.f32 %v2878, %v1620
  %v3530 = vadd.f32 %v2879, %v1621
  %v3531 = vadd.f32 %v2880, %v1622
  %v3532 = vadd.f32 %v2881, %v1623
  %v3533 = vadd.f32 %v2882, %v1624
  %v3534 = vadd.f32 %v2883, %v1625
  %v3535 = vadd.f32 %v2884, %v1626
  %v3536 = vpack.c.bf16 %v3513, %v3512
  %v3537 = vpack.c.bf16 %v3515, %v3514
  %v3538 = vpack.c.bf16 %v3517, %v3516
  %v3539 = vpack.c.bf16 %v3519, %v3518
  %v3544 = vunpack.c.l.b16 %v406
  %v3545 = vunpack.c.l.b16 %v407
  %v3546 = vunpack.c.l.b16 %v408
  %v3547 = vunpack.c.l.b16 %v409
  %v3548 = vpack.c.b16 %v3545, %v3544
  %v3549 = vpack.c.b16 %v3547, %v3546
  %v3553 = vsel %vm591, %v3536, 0
  %v3556 = vsel %vm591, %v3537, 0
  %v3559 = vsel %vm591, %v3538, 0
  %v3562 = vsel %vm591, %v3539, 0
  %3564 = vmatprep.subr.bf16.mxu0 0
  %3565 = vmatpush1.bf16.msra.mxu0 0
  %3566 = vmatprep.subr.bf16.mxu0 0
  %3567 = vmatpush1.bf16.msra.mxu0 0
  %3568 = vmatprep.subr.bf16.mxu0 0
  %3569 = vmatpush1.bf16.msra.mxu0 0
  %3570 = vmatprep.subr.bf16.mxu0 0
  %3571 = vmatpush1.bf16.msra.mxu0 0
  %3572 = vmatprep.subr.bf16.mxu0 0
  %3573 = vmatpush1.bf16.msra.mxu0 0
  %3574 = vmatprep.subr.bf16.mxu0 0
  %3575 = vmatpush1.bf16.msra.mxu0 0
  %3576 = vmatprep.subr.bf16.mxu0 0
  %3577 = vmatpush1.bf16.msra.mxu0 %v3549
  %3578 = vmatprep.subr.bf16.mxu0 0
  %3579 = vmatpush1.bf16.msra.mxu0 %v3548
  %3580 = vmatprep.subr.bf16.mxu0 0
  %3581 = vmatpush2.bf16.msra.mxu0 0
  %3582 = vmatprep.subr.bf16.mxu0 0
  %3583 = vmatpush2.bf16.msra.mxu0 0
  %3584 = vmatprep.subr.bf16.mxu0 0
  %3585 = vmatpush2.bf16.msra.mxu0 0
  %3586 = vmatprep.subr.bf16.mxu0 0
  %3587 = vmatpush2.bf16.msra.mxu0 0
  %3588 = vmatprep.subr.bf16.mxu0 0
  %3589 = vmatpush2.bf16.msra.mxu0 0
  %3590 = vmatprep.subr.bf16.mxu0 0
  %3591 = vmatpush2.bf16.msra.mxu0 0
  %3592 = vmatprep.subr.bf16.mxu0 0
  %3593 = vmatpush2.bf16.msra.mxu0 0
  %3594 = vmatprep.subr.bf16.mxu0 0
  %3595 = vmatpush2.bf16.msra.mxu0 0
  %3596 = vmatprep.mubr.bf16.mxu0 0
  %3597 = vmatmul.mubr.bf16.gmra.mxu0 %v3553
  %v3598 = vpop.f32.mrf.mxu0
  %v3599 = vadd.f32 0.0, %v3598
  %v3600 = vpop.f32.mrf.mxu0
  %v3601 = vpop.f32.mrf.mxu0
  %v3602 = vadd.f32 0.0, %v3601
  %v3603 = vpop.f32.mrf.mxu0
  %3604 = vmatprep.mubr.bf16.mxu0 0
  %3605 = vmatmul.mubr.bf16.gmra.mxu0 %v3556
  %v3606 = vpop.f32.mrf.mxu0
  %v3607 = vadd.f32 0.0, %v3606
  %v3608 = vpop.f32.mrf.mxu0
  %v3609 = vpop.f32.mrf.mxu0
  %v3610 = vadd.f32 0.0, %v3609
  %v3611 = vpop.f32.mrf.mxu0
  %3612 = vmatprep.mubr.bf16.mxu0 0
  %3613 = vmatmul.mubr.bf16.gmra.mxu0 %v3559
  %v3614 = vpop.f32.mrf.mxu0
  %v3615 = vadd.f32 0.0, %v3614
  %v3616 = vpop.f32.mrf.mxu0
  %v3617 = vpop.f32.mrf.mxu0
  %v3618 = vadd.f32 0.0, %v3617
  %v3619 = vpop.f32.mrf.mxu0
  %3620 = vmatprep.mubr.bf16.mxu0 0
  %3621 = vmatmul.mubr.bf16.gmra.mxu0 %v3562
  %v3622 = vpop.f32.mrf.mxu0
  %v3623 = vadd.f32 0.0, %v3622
  %v3624 = vpop.f32.mrf.mxu0
  %v3625 = vpop.f32.mrf.mxu0
  %v3626 = vadd.f32 0.0, %v3625
  %v3627 = vpop.f32.mrf.mxu0
  %3628 = vdwg.mxu0
  %v3633 = vunpack.c.l.b16 %v410
  %v3634 = vunpack.c.l.b16 %v411
  %v3635 = vunpack.c.l.b16 %v412
  %v3636 = vunpack.c.l.b16 %v413
  %v3637 = vpack.c.b16 %v3634, %v3633
  %v3638 = vpack.c.b16 %v3636, %v3635
  %3641 = vmatprep.subr.bf16.mxu0 0
  %3642 = vmatpush1.bf16.msra.mxu0 0
  %3643 = vmatprep.subr.bf16.mxu0 0
  %3644 = vmatpush1.bf16.msra.mxu0 0
  %3645 = vmatprep.subr.bf16.mxu0 0
  %3646 = vmatpush1.bf16.msra.mxu0 0
  %3647 = vmatprep.subr.bf16.mxu0 0
  %3648 = vmatpush1.bf16.msra.mxu0 0
  %3649 = vmatprep.subr.bf16.mxu0 0
  %3650 = vmatpush1.bf16.msra.mxu0 0
  %3651 = vmatprep.subr.bf16.mxu0 0
  %3652 = vmatpush1.bf16.msra.mxu0 0
  %3653 = vmatprep.subr.bf16.mxu0 0
  %3654 = vmatpush1.bf16.msra.mxu0 %v3638
  %3655 = vmatprep.subr.bf16.mxu0 0
  %3656 = vmatpush1.bf16.msra.mxu0 %v3637
  %3657 = vmatprep.subr.bf16.mxu0 0
  %3658 = vmatpush2.bf16.msra.mxu0 0
  %3659 = vmatprep.subr.bf16.mxu0 0
  %3660 = vmatpush2.bf16.msra.mxu0 0
  %3661 = vmatprep.subr.bf16.mxu0 0
  %3662 = vmatpush2.bf16.msra.mxu0 0
  %3663 = vmatprep.subr.bf16.mxu0 0
  %3664 = vmatpush2.bf16.msra.mxu0 0
  %3665 = vmatprep.subr.bf16.mxu0 0
  %3666 = vmatpush2.bf16.msra.mxu0 0
  %3667 = vmatprep.subr.bf16.mxu0 0
  %3668 = vmatpush2.bf16.msra.mxu0 0
  %3669 = vmatprep.subr.bf16.mxu0 0
  %3670 = vmatpush2.bf16.msra.mxu0 0
  %3671 = vmatprep.subr.bf16.mxu0 0
  %3672 = vmatpush2.bf16.msra.mxu0 0
  %3673 = vmatprep.mubr.bf16.mxu0 0
  %3674 = vmatmul.mubr.bf16.gmra.mxu0 %v3553
  %v3675 = vpop.f32.mrf.mxu0
  %v3676 = vadd.f32 0.0, %v3675
  %v3677 = vpop.f32.mrf.mxu0
  %v3678 = vpop.f32.mrf.mxu0
  %v3679 = vadd.f32 0.0, %v3678
  %v3680 = vpop.f32.mrf.mxu0
  %3681 = vmatprep.mubr.bf16.mxu0 0
  %3682 = vmatmul.mubr.bf16.gmra.mxu0 %v3556
  %v3683 = vpop.f32.mrf.mxu0
  %v3684 = vadd.f32 0.0, %v3683
  %v3685 = vpop.f32.mrf.mxu0
  %v3686 = vpop.f32.mrf.mxu0
  %v3687 = vadd.f32 0.0, %v3686
  %v3688 = vpop.f32.mrf.mxu0
  %3689 = vmatprep.mubr.bf16.mxu0 0
  %3690 = vmatmul.mubr.bf16.gmra.mxu0 %v3559
  %v3691 = vpop.f32.mrf.mxu0
  %v3692 = vadd.f32 0.0, %v3691
  %v3693 = vpop.f32.mrf.mxu0
  %v3694 = vpop.f32.mrf.mxu0
  %v3695 = vadd.f32 0.0, %v3694
  %v3696 = vpop.f32.mrf.mxu0
  %3697 = vmatprep.mubr.bf16.mxu0 0
  %3698 = vmatmul.mubr.bf16.gmra.mxu0 %v3562
  %v3699 = vpop.f32.mrf.mxu0
  %v3700 = vadd.f32 0.0, %v3699
  %v3701 = vpop.f32.mrf.mxu0
  %v3702 = vpop.f32.mrf.mxu0
  %v3703 = vadd.f32 0.0, %v3702
  %v3704 = vpop.f32.mrf.mxu0
  %3705 = vdwg.mxu0
  %v3706 = vpack.c.bf16 %v3602, %v3599
  %v3707 = vpack.c.bf16 %v3610, %v3607
  %v3708 = vpack.c.bf16 %v3618, %v3615
  %v3709 = vpack.c.bf16 %v3626, %v3623
  %v3710 = vpack.c.bf16 %v3679, %v3676
  %v3711 = vpack.c.bf16 %v3687, %v3684
  %v3712 = vpack.c.bf16 %v3695, %v3692
  %v3713 = vpack.c.bf16 %v3703, %v3700
  %3714 = vmatprep.subr.bf16.mxu0 0
  %3715 = vmatpush1.bf16.msra.mxu0 0
  %3716 = vmatprep.subr.bf16.mxu0 0
  %3717 = vmatpush1.bf16.msra.mxu0 0
  %3718 = vmatprep.subr.bf16.mxu0 0
  %3719 = vmatpush1.bf16.msra.mxu0 0
  %3720 = vmatprep.subr.bf16.mxu0 0
  %3721 = vmatpush1.bf16.msra.mxu0 0
  %3722 = vmatprep.subr.bf16.mxu0 0
  %3723 = vmatpush1.bf16.msra.mxu0 %v3713
  %3724 = vmatprep.subr.bf16.mxu0 0
  %3725 = vmatpush1.bf16.msra.mxu0 %v3712
  %3726 = vmatprep.subr.bf16.mxu0 0
  %3727 = vmatpush1.bf16.msra.mxu0 %v3711
  %3728 = vmatprep.subr.bf16.mxu0 0
  %3729 = vmatpush1.bf16.msra.mxu0 %v3710
  %3730 = vmatprep.subr.bf16.mxu0 0
  %3731 = vmatpush2.bf16.msra.mxu0 0
  %3732 = vmatprep.subr.bf16.mxu0 0
  %3733 = vmatpush2.bf16.msra.mxu0 0
  %3734 = vmatprep.subr.bf16.mxu0 0
  %3735 = vmatpush2.bf16.msra.mxu0 0
  %3736 = vmatprep.subr.bf16.mxu0 0
  %3737 = vmatpush2.bf16.msra.mxu0 0
  %3738 = vmatprep.subr.bf16.mxu0 0
  %3739 = vmatpush2.bf16.msra.mxu0 0
  %3740 = vmatprep.subr.bf16.mxu0 0
  %3741 = vmatpush2.bf16.msra.mxu0 0
  %3742 = vmatprep.subr.bf16.mxu0 0
  %3743 = vmatpush2.bf16.msra.mxu0 0
  %3744 = vmatprep.subr.bf16.mxu0 0
  %3745 = vmatpush2.bf16.msra.mxu0 0
  %3746 = vmatprep.mubr.bf16.mxu0 0
  %3747 = vmatmul.mubr.bf16.gmra.mxu0 %v1847
  %v3748 = vpop.f32.mrf.mxu0
  %v3749 = vadd.f32 0.0, %v3748
  %v3750 = vpop.f32.mrf.mxu0
  %v3751 = vpop.f32.mrf.mxu0
  %v3752 = vadd.f32 0.0, %v3751
  %v3753 = vpop.f32.mrf.mxu0
  %3754 = vmatprep.mubr.bf16.mxu0 0
  %3755 = vmatmul.mubr.bf16.gmra.mxu0 %v1850
  %v3756 = vpop.f32.mrf.mxu0
  %v3757 = vadd.f32 0.0, %v3756
  %v3758 = vpop.f32.mrf.mxu0
  %v3759 = vpop.f32.mrf.mxu0
  %v3760 = vadd.f32 0.0, %v3759
  %v3761 = vpop.f32.mrf.mxu0
  %3762 = vmatprep.mubr.bf16.mxu0 0
  %3763 = vmatmul.mubr.bf16.gmra.mxu0 %v1853
  %v3764 = vpop.f32.mrf.mxu0
  %v3765 = vadd.f32 0.0, %v3764
  %v3766 = vpop.f32.mrf.mxu0
  %v3767 = vpop.f32.mrf.mxu0
  %v3768 = vadd.f32 0.0, %v3767
  %v3769 = vpop.f32.mrf.mxu0
  %3770 = vmatprep.mubr.bf16.mxu0 0
  %3771 = vmatmul.mubr.bf16.gmra.mxu0 %v1856
  %v3772 = vpop.f32.mrf.mxu0
  %v3773 = vadd.f32 0.0, %v3772
  %v3774 = vpop.f32.mrf.mxu0
  %v3775 = vpop.f32.mrf.mxu0
  %v3776 = vadd.f32 0.0, %v3775
  %v3777 = vpop.f32.mrf.mxu0
  %3778 = vmatprep.mubr.bf16.mxu0 0
  %3779 = vmatmul.mubr.bf16.gmra.mxu0 %v1859
  %v3780 = vpop.f32.mrf.mxu0
  %v3781 = vadd.f32 0.0, %v3780
  %v3782 = vpop.f32.mrf.mxu0
  %v3783 = vpop.f32.mrf.mxu0
  %v3784 = vadd.f32 0.0, %v3783
  %v3785 = vpop.f32.mrf.mxu0
  %3786 = vmatprep.mubr.bf16.mxu0 0
  %3787 = vmatmul.mubr.bf16.gmra.mxu0 %v1862
  %v3788 = vpop.f32.mrf.mxu0
  %v3789 = vadd.f32 0.0, %v3788
  %v3790 = vpop.f32.mrf.mxu0
  %v3791 = vpop.f32.mrf.mxu0
  %v3792 = vadd.f32 0.0, %v3791
  %v3793 = vpop.f32.mrf.mxu0
  %3794 = vmatprep.mubr.bf16.mxu0 0
  %3795 = vmatmul.mubr.bf16.gmra.mxu0 %v1865
  %v3796 = vpop.f32.mrf.mxu0
  %v3797 = vadd.f32 0.0, %v3796
  %v3798 = vpop.f32.mrf.mxu0
  %v3799 = vpop.f32.mrf.mxu0
  %v3800 = vadd.f32 0.0, %v3799
  %v3801 = vpop.f32.mrf.mxu0
  %3802 = vmatprep.mubr.bf16.mxu0 0
  %3803 = vmatmul.mubr.bf16.gmra.mxu0 %v1868
  %v3804 = vpop.f32.mrf.mxu0
  %v3805 = vadd.f32 0.0, %v3804
  %v3806 = vpop.f32.mrf.mxu0
  %v3807 = vpop.f32.mrf.mxu0
  %v3808 = vadd.f32 0.0, %v3807
  %v3809 = vpop.f32.mrf.mxu0
  %3810 = vdwg.mxu0
  %3811 = vmatprep.subr.bf16.mxu0 0
  %3812 = vmatpush1.bf16.msra.mxu0 0
  %3813 = vmatprep.subr.bf16.mxu0 0
  %3814 = vmatpush1.bf16.msra.mxu0 0
  %3815 = vmatprep.subr.bf16.mxu0 0
  %3816 = vmatpush1.bf16.msra.mxu0 0
  %3817 = vmatprep.subr.bf16.mxu0 0
  %3818 = vmatpush1.bf16.msra.mxu0 0
  %3819 = vmatprep.subr.bf16.mxu0 0
  %3820 = vmatpush1.bf16.msra.mxu0 %v3709
  %3821 = vmatprep.subr.bf16.mxu0 0
  %3822 = vmatpush1.bf16.msra.mxu0 %v3708
  %3823 = vmatprep.subr.bf16.mxu0 0
  %3824 = vmatpush1.bf16.msra.mxu0 %v3707
  %3825 = vmatprep.subr.bf16.mxu0 0
  %3826 = vmatpush1.bf16.msra.mxu0 %v3706
  %3827 = vmatprep.subr.bf16.mxu0 0
  %3828 = vmatpush2.bf16.msra.mxu0 0
  %3829 = vmatprep.subr.bf16.mxu0 0
  %3830 = vmatpush2.bf16.msra.mxu0 0
  %3831 = vmatprep.subr.bf16.mxu0 0
  %3832 = vmatpush2.bf16.msra.mxu0 0
  %3833 = vmatprep.subr.bf16.mxu0 0
  %3834 = vmatpush2.bf16.msra.mxu0 0
  %3835 = vmatprep.subr.bf16.mxu0 0
  %3836 = vmatpush2.bf16.msra.mxu0 0
  %3837 = vmatprep.subr.bf16.mxu0 0
  %3838 = vmatpush2.bf16.msra.mxu0 0
  %3839 = vmatprep.subr.bf16.mxu0 0
  %3840 = vmatpush2.bf16.msra.mxu0 0
  %3841 = vmatprep.subr.bf16.mxu0 0
  %3842 = vmatpush2.bf16.msra.mxu0 0
  %3843 = vmatprep.mubr.bf16.mxu0 0
  %3844 = vmatmul.mubr.bf16.gmra.mxu0 %v2008
  %v3845 = vpop.f32.mrf.mxu0
  %v3846 = vadd.f32 %v3749, %v3845
  %v3847 = vpop.f32.mrf.mxu0
  %v3848 = vpop.f32.mrf.mxu0
  %v3849 = vadd.f32 %v3752, %v3848
  %v3850 = vpop.f32.mrf.mxu0
  %3851 = vmatprep.mubr.bf16.mxu0 0
  %3852 = vmatmul.mubr.bf16.gmra.mxu0 %v2011
  %v3853 = vpop.f32.mrf.mxu0
  %v3854 = vadd.f32 %v3757, %v3853
  %v3855 = vpop.f32.mrf.mxu0
  %v3856 = vpop.f32.mrf.mxu0
  %v3857 = vadd.f32 %v3760, %v3856
  %v3858 = vpop.f32.mrf.mxu0
  %3859 = vmatprep.mubr.bf16.mxu0 0
  %3860 = vmatmul.mubr.bf16.gmra.mxu0 %v2014
  %v3861 = vpop.f32.mrf.mxu0
  %v3862 = vadd.f32 %v3765, %v3861
  %v3863 = vpop.f32.mrf.mxu0
  %v3864 = vpop.f32.mrf.mxu0
  %v3865 = vadd.f32 %v3768, %v3864
  %v3866 = vpop.f32.mrf.mxu0
  %3867 = vmatprep.mubr.bf16.mxu0 0
  %3868 = vmatmul.mubr.bf16.gmra.mxu0 %v2017
  %v3869 = vpop.f32.mrf.mxu0
  %v3870 = vadd.f32 %v3773, %v3869
  %v3871 = vpop.f32.mrf.mxu0
  %v3872 = vpop.f32.mrf.mxu0
  %v3873 = vadd.f32 %v3776, %v3872
  %v3874 = vpop.f32.mrf.mxu0
  %3875 = vmatprep.mubr.bf16.mxu0 0
  %3876 = vmatmul.mubr.bf16.gmra.mxu0 %v2020
  %v3877 = vpop.f32.mrf.mxu0
  %v3878 = vadd.f32 %v3781, %v3877
  %v3879 = vpop.f32.mrf.mxu0
  %v3880 = vpop.f32.mrf.mxu0
  %v3881 = vadd.f32 %v3784, %v3880
  %v3882 = vpop.f32.mrf.mxu0
  %3883 = vmatprep.mubr.bf16.mxu0 0
  %3884 = vmatmul.mubr.bf16.gmra.mxu0 %v2023
  %v3885 = vpop.f32.mrf.mxu0
  %v3886 = vadd.f32 %v3789, %v3885
  %v3887 = vpop.f32.mrf.mxu0
  %v3888 = vpop.f32.mrf.mxu0
  %v3889 = vadd.f32 %v3792, %v3888
  %v3890 = vpop.f32.mrf.mxu0
  %3891 = vmatprep.mubr.bf16.mxu0 0
  %3892 = vmatmul.mubr.bf16.gmra.mxu0 %v2026
  %v3893 = vpop.f32.mrf.mxu0
  %v3894 = vadd.f32 %v3797, %v3893
  %v3895 = vpop.f32.mrf.mxu0
  %v3896 = vpop.f32.mrf.mxu0
  %v3897 = vadd.f32 %v3800, %v3896
  %v3898 = vpop.f32.mrf.mxu0
  %3899 = vmatprep.mubr.bf16.mxu0 0
  %3900 = vmatmul.mubr.bf16.gmra.mxu0 %v2029
  %v3901 = vpop.f32.mrf.mxu0
  %v3902 = vadd.f32 %v3805, %v3901
  %v3903 = vpop.f32.mrf.mxu0
  %v3904 = vpop.f32.mrf.mxu0
  %v3905 = vadd.f32 %v3808, %v3904
  %v3906 = vpop.f32.mrf.mxu0
  %3907 = vdwg.mxu0
  %v3908 = vpack.c.bf16 %v3521, %v3520
  %v3909 = vpack.c.bf16 %v3523, %v3522
  %v3910 = vpack.c.bf16 %v3525, %v3524
  %v3911 = vpack.c.bf16 %v3527, %v3526
  %v3912 = vpack.c.bf16 %v3529, %v3528
  %v3913 = vpack.c.bf16 %v3531, %v3530
  %v3914 = vpack.c.bf16 %v3533, %v3532
  %v3915 = vpack.c.bf16 %v3535, %v3534
  %v3920 = vunpack.c.l.b16 %v414
  %v3921 = vunpack.c.l.b16 %v415
  %v3922 = vunpack.c.l.b16 %v416
  %v3923 = vunpack.c.l.b16 %v417
  %v3924 = vpack.c.b16 %v3921, %v3920
  %v3925 = vpack.c.b16 %v3923, %v3922
  %v3929 = vsel %vm591, %v3908, 0
  %v3932 = vsel %vm591, %v3909, 0
  %v3935 = vsel %vm591, %v3910, 0
  %v3938 = vsel %vm591, %v3911, 0
  %v3941 = vsel %vm591, %v3912, 0
  %v3944 = vsel %vm591, %v3913, 0
  %v3947 = vsel %vm591, %v3914, 0
  %v3950 = vsel %vm591, %v3915, 0
  %3952 = vmatprep.subr.bf16.mxu0 0
  %3953 = vmatpush1.bf16.msra.mxu0 0
  %3954 = vmatprep.subr.bf16.mxu0 0
  %3955 = vmatpush1.bf16.msra.mxu0 0
  %3956 = vmatprep.subr.bf16.mxu0 0
  %3957 = vmatpush1.bf16.msra.mxu0 0
  %3958 = vmatprep.subr.bf16.mxu0 0
  %3959 = vmatpush1.bf16.msra.mxu0 0
  %3960 = vmatprep.subr.bf16.mxu0 0
  %3961 = vmatpush1.bf16.msra.mxu0 0
  %3962 = vmatprep.subr.bf16.mxu0 0
  %3963 = vmatpush1.bf16.msra.mxu0 0
  %3964 = vmatprep.subr.bf16.mxu0 0
  %3965 = vmatpush1.bf16.msra.mxu0 %v3925
  %3966 = vmatprep.subr.bf16.mxu0 0
  %3967 = vmatpush1.bf16.msra.mxu0 %v3924
  %3968 = vmatprep.subr.bf16.mxu0 0
  %3969 = vmatpush2.bf16.msra.mxu0 0
  %3970 = vmatprep.subr.bf16.mxu0 0
  %3971 = vmatpush2.bf16.msra.mxu0 0
  %3972 = vmatprep.subr.bf16.mxu0 0
  %3973 = vmatpush2.bf16.msra.mxu0 0
  %3974 = vmatprep.subr.bf16.mxu0 0
  %3975 = vmatpush2.bf16.msra.mxu0 0
  %3976 = vmatprep.subr.bf16.mxu0 0
  %3977 = vmatpush2.bf16.msra.mxu0 0
  %3978 = vmatprep.subr.bf16.mxu0 0
  %3979 = vmatpush2.bf16.msra.mxu0 0
  %3980 = vmatprep.subr.bf16.mxu0 0
  %3981 = vmatpush2.bf16.msra.mxu0 0
  %3982 = vmatprep.subr.bf16.mxu0 0
  %3983 = vmatpush2.bf16.msra.mxu0 0
  %3984 = vmatprep.mubr.bf16.mxu0 0
  %3985 = vmatmul.mubr.bf16.gmra.mxu0 %v3929
  %v3986 = vpop.f32.mrf.mxu0
  %v3987 = vadd.f32 0.0, %v3986
  %v3988 = vpop.f32.mrf.mxu0
  %v3989 = vpop.f32.mrf.mxu0
  %v3990 = vadd.f32 0.0, %v3989
  %v3991 = vpop.f32.mrf.mxu0
  %3992 = vmatprep.mubr.bf16.mxu0 0
  %3993 = vmatmul.mubr.bf16.gmra.mxu0 %v3932
  %v3994 = vpop.f32.mrf.mxu0
  %v3995 = vadd.f32 0.0, %v3994
  %v3996 = vpop.f32.mrf.mxu0
  %v3997 = vpop.f32.mrf.mxu0
  %v3998 = vadd.f32 0.0, %v3997
  %v3999 = vpop.f32.mrf.mxu0
  %4000 = vmatprep.mubr.bf16.mxu0 0
  %4001 = vmatmul.mubr.bf16.gmra.mxu0 %v3935
  %v4002 = vpop.f32.mrf.mxu0
  %v4003 = vadd.f32 0.0, %v4002
  %v4004 = vpop.f32.mrf.mxu0
  %v4005 = vpop.f32.mrf.mxu0
  %v4006 = vadd.f32 0.0, %v4005
  %v4007 = vpop.f32.mrf.mxu0
  %4008 = vmatprep.mubr.bf16.mxu0 0
  %4009 = vmatmul.mubr.bf16.gmra.mxu0 %v3938
  %v4010 = vpop.f32.mrf.mxu0
  %v4011 = vadd.f32 0.0, %v4010
  %v4012 = vpop.f32.mrf.mxu0
  %v4013 = vpop.f32.mrf.mxu0
  %v4014 = vadd.f32 0.0, %v4013
  %v4015 = vpop.f32.mrf.mxu0
  %4016 = vmatprep.mubr.bf16.mxu0 0
  %4017 = vmatmul.mubr.bf16.gmra.mxu0 %v3941
  %v4018 = vpop.f32.mrf.mxu0
  %v4019 = vadd.f32 0.0, %v4018
  %v4020 = vpop.f32.mrf.mxu0
  %v4021 = vpop.f32.mrf.mxu0
  %v4022 = vadd.f32 0.0, %v4021
  %v4023 = vpop.f32.mrf.mxu0
  %4024 = vmatprep.mubr.bf16.mxu0 0
  %4025 = vmatmul.mubr.bf16.gmra.mxu0 %v3944
  %v4026 = vpop.f32.mrf.mxu0
  %v4027 = vadd.f32 0.0, %v4026
  %v4028 = vpop.f32.mrf.mxu0
  %v4029 = vpop.f32.mrf.mxu0
  %v4030 = vadd.f32 0.0, %v4029
  %v4031 = vpop.f32.mrf.mxu0
  %4032 = vmatprep.mubr.bf16.mxu0 0
  %4033 = vmatmul.mubr.bf16.gmra.mxu0 %v3947
  %v4034 = vpop.f32.mrf.mxu0
  %v4035 = vadd.f32 0.0, %v4034
  %v4036 = vpop.f32.mrf.mxu0
  %v4037 = vpop.f32.mrf.mxu0
  %v4038 = vadd.f32 0.0, %v4037
  %v4039 = vpop.f32.mrf.mxu0
  %4040 = vmatprep.mubr.bf16.mxu0 0
  %4041 = vmatmul.mubr.bf16.gmra.mxu0 %v3950
  %v4042 = vpop.f32.mrf.mxu0
  %v4043 = vadd.f32 0.0, %v4042
  %v4044 = vpop.f32.mrf.mxu0
  %v4045 = vpop.f32.mrf.mxu0
  %v4046 = vadd.f32 0.0, %v4045
  %v4047 = vpop.f32.mrf.mxu0
  %4048 = vdwg.mxu0
  %v4049 = vadd.f32 %v3846, %v3987
  %v4050 = vadd.f32 %v3849, %v3990
  %v4051 = vadd.f32 %v3854, %v3995
  %v4052 = vadd.f32 %v3857, %v3998
  %v4053 = vadd.f32 %v3862, %v4003
  %v4054 = vadd.f32 %v3865, %v4006
  %v4055 = vadd.f32 %v3870, %v4011
  %v4056 = vadd.f32 %v3873, %v4014
  %v4057 = vadd.f32 %v3878, %v4019
  %v4058 = vadd.f32 %v3881, %v4022
  %v4059 = vadd.f32 %v3886, %v4027
  %v4060 = vadd.f32 %v3889, %v4030
  %v4061 = vadd.f32 %v3894, %v4035
  %v4062 = vadd.f32 %v3897, %v4038
  %v4063 = vadd.f32 %v3902, %v4043
  %v4064 = vadd.f32 %v3905, %v4046
  %v4066 = vlaneseq
  %v4067 = vshrl.u32 %v4066, 7
  %v4068 = vsub.s32 0, %v4067
  %v4069 = vrot.slane %v418, %v4068
  %v4071 = vadd.f32 %v4049, %v4069
  %v4072 = vadd.f32 %v4050, %v4069
  %v4073 = vadd.f32 %v4051, %v4069
  %v4074 = vadd.f32 %v4052, %v4069
  %v4075 = vadd.f32 %v4053, %v4069
  %v4076 = vadd.f32 %v4054, %v4069
  %v4077 = vadd.f32 %v4055, %v4069
  %v4078 = vadd.f32 %v4056, %v4069
  %v4079 = vadd.f32 %v4057, %v4069
  %v4080 = vadd.f32 %v4058, %v4069
  %v4081 = vadd.f32 %v4059, %v4069
  %v4082 = vadd.f32 %v4060, %v4069
  %v4083 = vadd.f32 %v4061, %v4069
  %v4084 = vadd.f32 %v4062, %v4069
  %v4085 = vadd.f32 %v4063, %v4069
  %v4086 = vadd.f32 %v4064, %v4069
  %v4087 = vmax.f32 %v4071, 0.0
  %v4088 = vmax.f32 %v4072, 0.0
  %v4089 = vmax.f32 %v4073, 0.0
  %v4090 = vmax.f32 %v4074, 0.0
  %v4091 = vmax.f32 %v4075, 0.0
  %v4092 = vmax.f32 %v4076, 0.0
  %v4093 = vmax.f32 %v4077, 0.0
  %v4094 = vmax.f32 %v4078, 0.0
  %v4095 = vmax.f32 %v4079, 0.0
  %v4096 = vmax.f32 %v4080, 0.0
  %v4097 = vmax.f32 %v4081, 0.0
  %v4098 = vmax.f32 %v4082, 0.0
  %v4099 = vmax.f32 %v4083, 0.0
  %v4100 = vmax.f32 %v4084, 0.0
  %v4101 = vmax.f32 %v4085, 0.0
  %v4102 = vmax.f32 %v4086, 0.0
  %v4103 = vpack.c.bf16 %v4088, %v4087
  %v4104 = vpack.c.bf16 %v4090, %v4089
  %v4105 = vpack.c.bf16 %v4092, %v4091
  %v4106 = vpack.c.bf16 %v4094, %v4093
  %v4107 = vpack.c.bf16 %v4096, %v4095
  %v4108 = vpack.c.bf16 %v4098, %v4097
  %v4109 = vpack.c.bf16 %v4100, %v4099
  %v4110 = vpack.c.bf16 %v4102, %v4101
  %v4112 = vlaneseq
  %v4113 = vshrl.u32 %v4112, 7
  %v4114 = vsub.s32 0, %v4113
  %v4115 = vrot.slane %v423, %v4114
  %v4121 = vunpack.c.l.b16 %v419
  %v4122 = vunpack.c.l.b16 %v420
  %v4123 = vunpack.c.l.b16 %v421
  %v4124 = vunpack.c.l.b16 %v422
  %v4125 = vpack.c.b16 %v4122, %v4121
  %v4126 = vpack.c.b16 %v4124, %v4123
  %v4130 = vsel %vm591, %v4103, 0
  %v4133 = vsel %vm591, %v4104, 0
  %v4136 = vsel %vm591, %v4105, 0
  %v4139 = vsel %vm591, %v4106, 0
  %v4142 = vsel %vm591, %v4107, 0
  %v4145 = vsel %vm591, %v4108, 0
  %v4148 = vsel %vm591, %v4109, 0
  %v4151 = vsel %vm591, %v4110, 0
  %4153 = vmatprep.subr.bf16.mxu0 0
  %4154 = vmatpush1.bf16.msra.mxu0 0
  %4155 = vmatprep.subr.bf16.mxu0 0
  %4156 = vmatpush1.bf16.msra.mxu0 0
  %4157 = vmatprep.subr.bf16.mxu0 0
  %4158 = vmatpush1.bf16.msra.mxu0 0
  %4159 = vmatprep.subr.bf16.mxu0 0
  %4160 = vmatpush1.bf16.msra.mxu0 0
  %4161 = vmatprep.subr.bf16.mxu0 0
  %4162 = vmatpush1.bf16.msra.mxu0 0
  %4163 = vmatprep.subr.bf16.mxu0 0
  %4164 = vmatpush1.bf16.msra.mxu0 0
  %4165 = vmatprep.subr.bf16.mxu0 0
  %4166 = vmatpush1.bf16.msra.mxu0 %v4126
  %4167 = vmatprep.subr.bf16.mxu0 0
  %4168 = vmatpush1.bf16.msra.mxu0 %v4125
  %4169 = vmatprep.subr.bf16.mxu0 0
  %4170 = vmatpush2.bf16.msra.mxu0 0
  %4171 = vmatprep.subr.bf16.mxu0 0
  %4172 = vmatpush2.bf16.msra.mxu0 0
  %4173 = vmatprep.subr.bf16.mxu0 0
  %4174 = vmatpush2.bf16.msra.mxu0 0
  %4175 = vmatprep.subr.bf16.mxu0 0
  %4176 = vmatpush2.bf16.msra.mxu0 0
  %4177 = vmatprep.subr.bf16.mxu0 0
  %4178 = vmatpush2.bf16.msra.mxu0 0
  %4179 = vmatprep.subr.bf16.mxu0 0
  %4180 = vmatpush2.bf16.msra.mxu0 0
  %4181 = vmatprep.subr.bf16.mxu0 0
  %4182 = vmatpush2.bf16.msra.mxu0 0
  %4183 = vmatprep.subr.bf16.mxu0 0
  %4184 = vmatpush2.bf16.msra.mxu0 0
  %4185 = vmatprep.mubr.bf16.mxu0 0
  %4186 = vmatmul.mubr.bf16.gmra.mxu0 %v4130
  %v4187 = vpop.f32.mrf.mxu0
  %v4188 = vadd.f32 %v4115, %v4187
  %v4189 = vpop.f32.mrf.mxu0
  %v4190 = vpop.f32.mrf.mxu0
  %v4191 = vadd.f32 %v4115, %v4190
  %v4192 = vpop.f32.mrf.mxu0
  %4193 = vmatprep.mubr.bf16.mxu0 0
  %4194 = vmatmul.mubr.bf16.gmra.mxu0 %v4133
  %v4195 = vpop.f32.mrf.mxu0
  %v4196 = vadd.f32 %v4115, %v4195
  %v4197 = vpop.f32.mrf.mxu0
  %v4198 = vpop.f32.mrf.mxu0
  %v4199 = vadd.f32 %v4115, %v4198
  %v4200 = vpop.f32.mrf.mxu0
  %4201 = vmatprep.mubr.bf16.mxu0 0
  %4202 = vmatmul.mubr.bf16.gmra.mxu0 %v4136
  %v4203 = vpop.f32.mrf.mxu0
  %v4204 = vadd.f32 %v4115, %v4203
  %v4205 = vpop.f32.mrf.mxu0
  %v4206 = vpop.f32.mrf.mxu0
  %v4207 = vadd.f32 %v4115, %v4206
  %v4208 = vpop.f32.mrf.mxu0
  %4209 = vmatprep.mubr.bf16.mxu0 0
  %4210 = vmatmul.mubr.bf16.gmra.mxu0 %v4139
  %v4211 = vpop.f32.mrf.mxu0
  %v4212 = vadd.f32 %v4115, %v4211
  %v4213 = vpop.f32.mrf.mxu0
  %v4214 = vpop.f32.mrf.mxu0
  %v4215 = vadd.f32 %v4115, %v4214
  %v4216 = vpop.f32.mrf.mxu0
  %4217 = vmatprep.mubr.bf16.mxu0 0
  %4218 = vmatmul.mubr.bf16.gmra.mxu0 %v4142
  %v4219 = vpop.f32.mrf.mxu0
  %v4220 = vadd.f32 %v4115, %v4219
  %v4221 = vpop.f32.mrf.mxu0
  %v4222 = vpop.f32.mrf.mxu0
  %v4223 = vadd.f32 %v4115, %v4222
  %v4224 = vpop.f32.mrf.mxu0
  %4225 = vmatprep.mubr.bf16.mxu0 0
  %4226 = vmatmul.mubr.bf16.gmra.mxu0 %v4145
  %v4227 = vpop.f32.mrf.mxu0
  %v4228 = vadd.f32 %v4115, %v4227
  %v4229 = vpop.f32.mrf.mxu0
  %v4230 = vpop.f32.mrf.mxu0
  %v4231 = vadd.f32 %v4115, %v4230
  %v4232 = vpop.f32.mrf.mxu0
  %4233 = vmatprep.mubr.bf16.mxu0 0
  %4234 = vmatmul.mubr.bf16.gmra.mxu0 %v4148
  %v4235 = vpop.f32.mrf.mxu0
  %v4236 = vadd.f32 %v4115, %v4235
  %v4237 = vpop.f32.mrf.mxu0
  %v4238 = vpop.f32.mrf.mxu0
  %v4239 = vadd.f32 %v4115, %v4238
  %v4240 = vpop.f32.mrf.mxu0
  %4241 = vmatprep.mubr.bf16.mxu0 0
  %4242 = vmatmul.mubr.bf16.gmra.mxu0 %v4151
  %v4243 = vpop.f32.mrf.mxu0
  %v4244 = vadd.f32 %v4115, %v4243
  %v4245 = vpop.f32.mrf.mxu0
  %v4246 = vpop.f32.mrf.mxu0
  %v4247 = vadd.f32 %v4115, %v4246
  %v4248 = vpop.f32.mrf.mxu0
  %4249 = vdwg.mxu0
  %v4250 = vmax.f32 %v4188, 0.0
  %v4251 = vmax.f32 %v4191, 0.0
  %v4252 = vmax.f32 %v4196, 0.0
  %v4253 = vmax.f32 %v4199, 0.0
  %v4254 = vmax.f32 %v4204, 0.0
  %v4255 = vmax.f32 %v4207, 0.0
  %v4256 = vmax.f32 %v4212, 0.0
  %v4257 = vmax.f32 %v4215, 0.0
  %v4258 = vmax.f32 %v4220, 0.0
  %v4259 = vmax.f32 %v4223, 0.0
  %v4260 = vmax.f32 %v4228, 0.0
  %v4261 = vmax.f32 %v4231, 0.0
  %v4262 = vmax.f32 %v4236, 0.0
  %v4263 = vmax.f32 %v4239, 0.0
  %v4264 = vmax.f32 %v4244, 0.0
  %v4265 = vmax.f32 %v4247, 0.0
  %v4266 = vpack.c.bf16 %v4251, %v4250
  %v4267 = vpack.c.bf16 %v4253, %v4252
  %v4268 = vpack.c.bf16 %v4255, %v4254
  %v4269 = vpack.c.bf16 %v4257, %v4256
  %v4270 = vpack.c.bf16 %v4259, %v4258
  %v4271 = vpack.c.bf16 %v4261, %v4260
  %v4272 = vpack.c.bf16 %v4263, %v4262
  %v4273 = vpack.c.bf16 %v4265, %v4264
  %v4275 = vlaneseq
  %v4276 = vshrl.u32 %v4275, 7
  %v4277 = vsub.s32 0, %v4276
  %v4278 = vrot.slane %v428, %v4277
  %v4284 = vunpack.c.l.b16 %v424
  %v4285 = vunpack.c.l.b16 %v425
  %v4286 = vunpack.c.l.b16 %v426
  %v4287 = vunpack.c.l.b16 %v427
  %v4288 = vpack.c.b16 %v4285, %v4284
  %v4289 = vpack.c.b16 %v4287, %v4286
  %v4293 = vsel %vm591, %v4266, 0
  %v4296 = vsel %vm591, %v4267, 0
  %v4299 = vsel %vm591, %v4268, 0
  %v4302 = vsel %vm591, %v4269, 0
  %v4305 = vsel %vm591, %v4270, 0
  %v4308 = vsel %vm591, %v4271, 0
  %v4311 = vsel %vm591, %v4272, 0
  %v4314 = vsel %vm591, %v4273, 0
  %4316 = vmatprep.subr.bf16.mxu0 0
  %4317 = vmatpush1.bf16.msra.mxu0 0
  %4318 = vmatprep.subr.bf16.mxu0 0
  %4319 = vmatpush1.bf16.msra.mxu0 0
  %4320 = vmatprep.subr.bf16.mxu0 0
  %4321 = vmatpush1.bf16.msra.mxu0 0
  %4322 = vmatprep.subr.bf16.mxu0 0
  %4323 = vmatpush1.bf16.msra.mxu0 0
  %4324 = vmatprep.subr.bf16.mxu0 0
  %4325 = vmatpush1.bf16.msra.mxu0 0
  %4326 = vmatprep.subr.bf16.mxu0 0
  %4327 = vmatpush1.bf16.msra.mxu0 0
  %4328 = vmatprep.subr.bf16.mxu0 0
  %4329 = vmatpush1.bf16.msra.mxu0 %v4289
  %4330 = vmatprep.subr.bf16.mxu0 0
  %4331 = vmatpush1.bf16.msra.mxu0 %v4288
  %4332 = vmatprep.subr.bf16.mxu0 0
  %4333 = vmatpush2.bf16.msra.mxu0 0
  %4334 = vmatprep.subr.bf16.mxu0 0
  %4335 = vmatpush2.bf16.msra.mxu0 0
  %4336 = vmatprep.subr.bf16.mxu0 0
  %4337 = vmatpush2.bf16.msra.mxu0 0
  %4338 = vmatprep.subr.bf16.mxu0 0
  %4339 = vmatpush2.bf16.msra.mxu0 0
  %4340 = vmatprep.subr.bf16.mxu0 0
  %4341 = vmatpush2.bf16.msra.mxu0 0
  %4342 = vmatprep.subr.bf16.mxu0 0
  %4343 = vmatpush2.bf16.msra.mxu0 0
  %4344 = vmatprep.subr.bf16.mxu0 0
  %4345 = vmatpush2.bf16.msra.mxu0 0
  %4346 = vmatprep.subr.bf16.mxu0 0
  %4347 = vmatpush2.bf16.msra.mxu0 0
  %4348 = vmatprep.mubr.bf16.mxu0 0
  %4349 = vmatmul.mubr.bf16.gmra.mxu0 %v4293
  %v4350 = vpop.f32.mrf.mxu0
  %v4351 = vadd.f32 %v4278, %v4350
  %v4352 = vpop.f32.mrf.mxu0
  %v4353 = vpop.f32.mrf.mxu0
  %v4354 = vadd.f32 %v4278, %v4353
  %v4355 = vpop.f32.mrf.mxu0
  %4356 = vmatprep.mubr.bf16.mxu0 0
  %4357 = vmatmul.mubr.bf16.gmra.mxu0 %v4296
  %v4358 = vpop.f32.mrf.mxu0
  %v4359 = vadd.f32 %v4278, %v4358
  %v4360 = vpop.f32.mrf.mxu0
  %v4361 = vpop.f32.mrf.mxu0
  %v4362 = vadd.f32 %v4278, %v4361
  %v4363 = vpop.f32.mrf.mxu0
  %4364 = vmatprep.mubr.bf16.mxu0 0
  %4365 = vmatmul.mubr.bf16.gmra.mxu0 %v4299
  %v4366 = vpop.f32.mrf.mxu0
  %v4367 = vadd.f32 %v4278, %v4366
  %v4368 = vpop.f32.mrf.mxu0
  %v4369 = vpop.f32.mrf.mxu0
  %v4370 = vadd.f32 %v4278, %v4369
  %v4371 = vpop.f32.mrf.mxu0
  %4372 = vmatprep.mubr.bf16.mxu0 0
  %4373 = vmatmul.mubr.bf16.gmra.mxu0 %v4302
  %v4374 = vpop.f32.mrf.mxu0
  %v4375 = vadd.f32 %v4278, %v4374
  %v4376 = vpop.f32.mrf.mxu0
  %v4377 = vpop.f32.mrf.mxu0
  %v4378 = vadd.f32 %v4278, %v4377
  %v4379 = vpop.f32.mrf.mxu0
  %4380 = vmatprep.mubr.bf16.mxu0 0
  %4381 = vmatmul.mubr.bf16.gmra.mxu0 %v4305
  %v4382 = vpop.f32.mrf.mxu0
  %v4383 = vadd.f32 %v4278, %v4382
  %v4384 = vpop.f32.mrf.mxu0
  %v4385 = vpop.f32.mrf.mxu0
  %v4386 = vadd.f32 %v4278, %v4385
  %v4387 = vpop.f32.mrf.mxu0
  %4388 = vmatprep.mubr.bf16.mxu0 0
  %4389 = vmatmul.mubr.bf16.gmra.mxu0 %v4308
  %v4390 = vpop.f32.mrf.mxu0
  %v4391 = vadd.f32 %v4278, %v4390
  %v4392 = vpop.f32.mrf.mxu0
  %v4393 = vpop.f32.mrf.mxu0
  %v4394 = vadd.f32 %v4278, %v4393
  %v4395 = vpop.f32.mrf.mxu0
  %4396 = vmatprep.mubr.bf16.mxu0 0
  %4397 = vmatmul.mubr.bf16.gmra.mxu0 %v4311
  %v4398 = vpop.f32.mrf.mxu0
  %v4399 = vadd.f32 %v4278, %v4398
  %v4400 = vpop.f32.mrf.mxu0
  %v4401 = vpop.f32.mrf.mxu0
  %v4402 = vadd.f32 %v4278, %v4401
  %v4403 = vpop.f32.mrf.mxu0
  %4404 = vmatprep.mubr.bf16.mxu0 0
  %4405 = vmatmul.mubr.bf16.gmra.mxu0 %v4314
  %v4406 = vpop.f32.mrf.mxu0
  %v4407 = vadd.f32 %v4278, %v4406
  %v4408 = vpop.f32.mrf.mxu0
  %v4409 = vpop.f32.mrf.mxu0
  %v4410 = vadd.f32 %v4278, %v4409
  %v4411 = vpop.f32.mrf.mxu0
  %4412 = vdwg.mxu0
  %v4413 = vsel %vm591, %v4351, 0.0
  %4414 = vadd.xlane.f32.xlu0 %v4413
  %v4415 = vpop.xlane.xlu0 %4414
  %v4416 = vsel %vm591, %v4354, 0.0
  %4417 = vadd.xlane.f32.xlu0 %v4416
  %v4418 = vpop.xlane.xlu0 %4417
  %v4419 = vsel %vm591, %v4359, 0.0
  %4420 = vadd.xlane.f32.xlu0 %v4419
  %v4421 = vpop.xlane.xlu0 %4420
  %v4422 = vsel %vm591, %v4362, 0.0
  %4423 = vadd.xlane.f32.xlu0 %v4422
  %v4424 = vpop.xlane.xlu0 %4423
  %v4425 = vsel %vm591, %v4367, 0.0
  %4426 = vadd.xlane.f32.xlu0 %v4425
  %v4427 = vpop.xlane.xlu0 %4426
  %v4428 = vsel %vm591, %v4370, 0.0
  %4429 = vadd.xlane.f32.xlu0 %v4428
  %v4430 = vpop.xlane.xlu0 %4429
  %v4431 = vsel %vm591, %v4375, 0.0
  %4432 = vadd.xlane.f32.xlu0 %v4431
  %v4433 = vpop.xlane.xlu0 %4432
  %v4434 = vsel %vm591, %v4378, 0.0
  %4435 = vadd.xlane.f32.xlu0 %v4434
  %v4436 = vpop.xlane.xlu0 %4435
  %v4437 = vsel %vm591, %v4383, 0.0
  %4438 = vadd.xlane.f32.xlu0 %v4437
  %v4439 = vpop.xlane.xlu0 %4438
  %v4440 = vsel %vm591, %v4386, 0.0
  %4441 = vadd.xlane.f32.xlu0 %v4440
  %v4442 = vpop.xlane.xlu0 %4441
  %v4443 = vsel %vm591, %v4391, 0.0
  %4444 = vadd.xlane.f32.xlu0 %v4443
  %v4445 = vpop.xlane.xlu0 %4444
  %v4446 = vsel %vm591, %v4394, 0.0
  %4447 = vadd.xlane.f32.xlu0 %v4446
  %v4448 = vpop.xlane.xlu0 %4447
  %v4449 = vsel %vm591, %v4399, 0.0
  %4450 = vadd.xlane.f32.xlu0 %v4449
  %v4451 = vpop.xlane.xlu0 %4450
  %v4452 = vsel %vm591, %v4402, 0.0
  %4453 = vadd.xlane.f32.xlu0 %v4452
  %v4454 = vpop.xlane.xlu0 %4453
  %v4455 = vsel %vm591, %v4407, 0.0
  %4456 = vadd.xlane.f32.xlu0 %v4455
  %v4457 = vpop.xlane.xlu0 %4456
  %v4458 = vsel %vm591, %v4410, 0.0
  %4459 = vadd.xlane.f32.xlu0 %v4458
  %v4460 = vpop.xlane.xlu0 %4459
  %v4461 = vmul.f32 %v4415, %v800
  %v4462 = vmul.f32 %v4418, %v800
  %v4463 = vmul.f32 %v4421, %v800
  %v4464 = vmul.f32 %v4424, %v800
  %v4465 = vmul.f32 %v4427, %v800
  %v4466 = vmul.f32 %v4430, %v800
  %v4467 = vmul.f32 %v4433, %v800
  %v4468 = vmul.f32 %v4436, %v800
  %v4469 = vmul.f32 %v4439, %v800
  %v4470 = vmul.f32 %v4442, %v800
  %v4471 = vmul.f32 %v4445, %v800
  %v4472 = vmul.f32 %v4448, %v800
  %v4473 = vmul.f32 %v4451, %v800
  %v4474 = vmul.f32 %v4454, %v800
  %v4475 = vmul.f32 %v4457, %v800
  %v4476 = vmul.f32 %v4460, %v800
  %v4477 = vsub.f32 %v4351, %v4461
  %v4478 = vsub.f32 %v4354, %v4462
  %v4479 = vsub.f32 %v4359, %v4463
  %v4480 = vsub.f32 %v4362, %v4464
  %v4481 = vsub.f32 %v4367, %v4465
  %v4482 = vsub.f32 %v4370, %v4466
  %v4483 = vsub.f32 %v4375, %v4467
  %v4484 = vsub.f32 %v4378, %v4468
  %v4485 = vsub.f32 %v4383, %v4469
  %v4486 = vsub.f32 %v4386, %v4470
  %v4487 = vsub.f32 %v4391, %v4471
  %v4488 = vsub.f32 %v4394, %v4472
  %v4489 = vsub.f32 %v4399, %v4473
  %v4490 = vsub.f32 %v4402, %v4474
  %v4491 = vsub.f32 %v4407, %v4475
  %v4492 = vsub.f32 %v4410, %v4476
  %v4493 = vmul.f32 %v4477, %v4477
  %v4494 = vmul.f32 %v4478, %v4478
  %v4495 = vmul.f32 %v4479, %v4479
  %v4496 = vmul.f32 %v4480, %v4480
  %v4497 = vmul.f32 %v4481, %v4481
  %v4498 = vmul.f32 %v4482, %v4482
  %v4499 = vmul.f32 %v4483, %v4483
  %v4500 = vmul.f32 %v4484, %v4484
  %v4501 = vmul.f32 %v4485, %v4485
  %v4502 = vmul.f32 %v4486, %v4486
  %v4503 = vmul.f32 %v4487, %v4487
  %v4504 = vmul.f32 %v4488, %v4488
  %v4505 = vmul.f32 %v4489, %v4489
  %v4506 = vmul.f32 %v4490, %v4490
  %v4507 = vmul.f32 %v4491, %v4491
  %v4508 = vmul.f32 %v4492, %v4492
  %v4509 = vsel %vm591, %v4493, 0.0
  %4510 = vadd.xlane.f32.xlu0 %v4509
  %v4511 = vpop.xlane.xlu0 %4510
  %v4512 = vsel %vm591, %v4494, 0.0
  %4513 = vadd.xlane.f32.xlu0 %v4512
  %v4514 = vpop.xlane.xlu0 %4513
  %v4515 = vsel %vm591, %v4495, 0.0
  %4516 = vadd.xlane.f32.xlu0 %v4515
  %v4517 = vpop.xlane.xlu0 %4516
  %v4518 = vsel %vm591, %v4496, 0.0
  %4519 = vadd.xlane.f32.xlu0 %v4518
  %v4520 = vpop.xlane.xlu0 %4519
  %v4521 = vsel %vm591, %v4497, 0.0
  %4522 = vadd.xlane.f32.xlu0 %v4521
  %v4523 = vpop.xlane.xlu0 %4522
  %v4524 = vsel %vm591, %v4498, 0.0
  %4525 = vadd.xlane.f32.xlu0 %v4524
  %v4526 = vpop.xlane.xlu0 %4525
  %v4527 = vsel %vm591, %v4499, 0.0
  %4528 = vadd.xlane.f32.xlu0 %v4527
  %v4529 = vpop.xlane.xlu0 %4528
  %v4530 = vsel %vm591, %v4500, 0.0
  %4531 = vadd.xlane.f32.xlu0 %v4530
  %v4532 = vpop.xlane.xlu0 %4531
  %v4533 = vsel %vm591, %v4501, 0.0
  %4534 = vadd.xlane.f32.xlu0 %v4533
  %v4535 = vpop.xlane.xlu0 %4534
  %v4536 = vsel %vm591, %v4502, 0.0
  %4537 = vadd.xlane.f32.xlu0 %v4536
  %v4538 = vpop.xlane.xlu0 %4537
  %v4539 = vsel %vm591, %v4503, 0.0
  %4540 = vadd.xlane.f32.xlu0 %v4539
  %v4541 = vpop.xlane.xlu0 %4540
  %v4542 = vsel %vm591, %v4504, 0.0
  %4543 = vadd.xlane.f32.xlu0 %v4542
  %v4544 = vpop.xlane.xlu0 %4543
  %v4545 = vsel %vm591, %v4505, 0.0
  %4546 = vadd.xlane.f32.xlu0 %v4545
  %v4547 = vpop.xlane.xlu0 %4546
  %v4548 = vsel %vm591, %v4506, 0.0
  %4549 = vadd.xlane.f32.xlu0 %v4548
  %v4550 = vpop.xlane.xlu0 %4549
  %v4551 = vsel %vm591, %v4507, 0.0
  %4552 = vadd.xlane.f32.xlu0 %v4551
  %v4553 = vpop.xlane.xlu0 %4552
  %v4554 = vsel %vm591, %v4508, 0.0
  %4555 = vadd.xlane.f32.xlu0 %v4554
  %v4556 = vpop.xlane.xlu0 %4555
  %v4557 = vmul.f32 %v4511, %v800
  %v4558 = vmul.f32 %v4514, %v800
  %v4559 = vmul.f32 %v4517, %v800
  %v4560 = vmul.f32 %v4520, %v800
  %v4561 = vmul.f32 %v4523, %v800
  %v4562 = vmul.f32 %v4526, %v800
  %v4563 = vmul.f32 %v4529, %v800
  %v4564 = vmul.f32 %v4532, %v800
  %v4565 = vmul.f32 %v4535, %v800
  %v4566 = vmul.f32 %v4538, %v800
  %v4567 = vmul.f32 %v4541, %v800
  %v4568 = vmul.f32 %v4544, %v800
  %v4569 = vmul.f32 %v4547, %v800
  %v4570 = vmul.f32 %v4550, %v800
  %v4571 = vmul.f32 %v4553, %v800
  %v4572 = vmul.f32 %v4556, %v800
  %v4573 = vadd.f32 %v4557, 1e-05
  %v4574 = vadd.f32 %v4558, 1e-05
  %v4575 = vadd.f32 %v4559, 1e-05
  %v4576 = vadd.f32 %v4560, 1e-05
  %v4577 = vadd.f32 %v4561, 1e-05
  %v4578 = vadd.f32 %v4562, 1e-05
  %v4579 = vadd.f32 %v4563, 1e-05
  %v4580 = vadd.f32 %v4564, 1e-05
  %v4581 = vadd.f32 %v4565, 1e-05
  %v4582 = vadd.f32 %v4566, 1e-05
  %v4583 = vadd.f32 %v4567, 1e-05
  %v4584 = vadd.f32 %v4568, 1e-05
  %v4585 = vadd.f32 %v4569, 1e-05
  %v4586 = vadd.f32 %v4570, 1e-05
  %v4587 = vadd.f32 %v4571, 1e-05
  %v4588 = vadd.f32 %v4572, 1e-05
  %v4589 = vrsqrt.pop %v4573
  %v4590 = vrsqrt.pop %v4574
  %v4591 = vrsqrt.pop %v4575
  %v4592 = vrsqrt.pop %v4576
  %v4593 = vrsqrt.pop %v4577
  %v4594 = vrsqrt.pop %v4578
  %v4595 = vrsqrt.pop %v4579
  %v4596 = vrsqrt.pop %v4580
  %v4597 = vrsqrt.pop %v4581
  %v4598 = vrsqrt.pop %v4582
  %v4599 = vrsqrt.pop %v4583
  %v4600 = vrsqrt.pop %v4584
  %v4601 = vrsqrt.pop %v4585
  %v4602 = vrsqrt.pop %v4586
  %v4603 = vrsqrt.pop %v4587
  %v4604 = vrsqrt.pop %v4588
  %v4605 = vmul.f32 %v4477, %v4589
  %v4606 = vmul.f32 %v4478, %v4590
  %v4607 = vmul.f32 %v4479, %v4591
  %v4608 = vmul.f32 %v4480, %v4592
  %v4609 = vmul.f32 %v4481, %v4593
  %v4610 = vmul.f32 %v4482, %v4594
  %v4611 = vmul.f32 %v4483, %v4595
  %v4612 = vmul.f32 %v4484, %v4596
  %v4613 = vmul.f32 %v4485, %v4597
  %v4614 = vmul.f32 %v4486, %v4598
  %v4615 = vmul.f32 %v4487, %v4599
  %v4616 = vmul.f32 %v4488, %v4600
  %v4617 = vmul.f32 %v4489, %v4601
  %v4618 = vmul.f32 %v4490, %v4602
  %v4619 = vmul.f32 %v4491, %v4603
  %v4620 = vmul.f32 %v4492, %v4604
  %v4622 = vlaneseq
  %v4623 = vshrl.u32 %v4622, 7
  %v4624 = vsub.s32 0, %v4623
  %v4625 = vrot.slane %v429, %v4624
  %v4627 = vmul.f32 %v4605, %v4625
  %v4628 = vmul.f32 %v4606, %v4625
  %v4629 = vmul.f32 %v4607, %v4625
  %v4630 = vmul.f32 %v4608, %v4625
  %v4631 = vmul.f32 %v4609, %v4625
  %v4632 = vmul.f32 %v4610, %v4625
  %v4633 = vmul.f32 %v4611, %v4625
  %v4634 = vmul.f32 %v4612, %v4625
  %v4635 = vmul.f32 %v4613, %v4625
  %v4636 = vmul.f32 %v4614, %v4625
  %v4637 = vmul.f32 %v4615, %v4625
  %v4638 = vmul.f32 %v4616, %v4625
  %v4639 = vmul.f32 %v4617, %v4625
  %v4640 = vmul.f32 %v4618, %v4625
  %v4641 = vmul.f32 %v4619, %v4625
  %v4642 = vmul.f32 %v4620, %v4625
  %v4644 = vlaneseq
  %v4645 = vshrl.u32 %v4644, 7
  %v4646 = vsub.s32 0, %v4645
  %v4647 = vrot.slane %v430, %v4646
  %v4649 = vadd.f32 %v4627, %v4647
  %v4650 = vadd.f32 %v4628, %v4647
  %v4651 = vadd.f32 %v4629, %v4647
  %v4652 = vadd.f32 %v4630, %v4647
  %v4653 = vadd.f32 %v4631, %v4647
  %v4654 = vadd.f32 %v4632, %v4647
  %v4655 = vadd.f32 %v4633, %v4647
  %v4656 = vadd.f32 %v4634, %v4647
  %v4657 = vadd.f32 %v4635, %v4647
  %v4658 = vadd.f32 %v4636, %v4647
  %v4659 = vadd.f32 %v4637, %v4647
  %v4660 = vadd.f32 %v4638, %v4647
  %v4661 = vadd.f32 %v4639, %v4647
  %v4662 = vadd.f32 %v4640, %v4647
  %v4663 = vadd.f32 %v4641, %v4647
  %v4664 = vadd.f32 %v4642, %v4647
  %v4665 = vpack.c.bf16 %v4650, %v4649
  %v4666 = vpack.c.bf16 %v4652, %v4651
  %v4667 = vpack.c.bf16 %v4654, %v4653
  %v4668 = vpack.c.bf16 %v4656, %v4655
  %v4669 = vpack.c.bf16 %v4658, %v4657
  %v4670 = vpack.c.bf16 %v4660, %v4659
  %v4671 = vpack.c.bf16 %v4662, %v4661
  %v4672 = vpack.c.bf16 %v4664, %v4663
  %4673 = vmatprep.subr.bf16.mxu0 0
  %4674 = vmatpush1.bf16.msra.mxu0 %v4672
  %4675 = vmatprep.subr.bf16.mxu0 0
  %4676 = vmatpush1.bf16.msra.mxu0 %v4671
  %4677 = vmatprep.subr.bf16.mxu0 0
  %4678 = vmatpush1.bf16.msra.mxu0 %v4670
  %4679 = vmatprep.subr.bf16.mxu0 0
  %4680 = vmatpush1.bf16.msra.mxu0 %v4669
  %4681 = vmatprep.subr.bf16.mxu0 0
  %4682 = vmatpush1.bf16.msra.mxu0 %v4668
  %4683 = vmatprep.subr.bf16.mxu0 0
  %4684 = vmatpush1.bf16.msra.mxu0 %v4667
  %4685 = vmatprep.subr.bf16.mxu0 0
  %4686 = vmatpush1.bf16.msra.mxu0 %v4666
  %4687 = vmatprep.subr.bf16.mxu0 0
  %4688 = vmatpush1.bf16.msra.mxu0 %v4665
  %4689 = vmatprep.subr.bf16.mxu0 0
  %4690 = vmatpush2.bf16.msra.mxu0 0
  %4691 = vmatprep.subr.bf16.mxu0 0
  %4692 = vmatpush2.bf16.msra.mxu0 0
  %4693 = vmatprep.subr.bf16.mxu0 0
  %4694 = vmatpush2.bf16.msra.mxu0 0
  %4695 = vmatprep.subr.bf16.mxu0 0
  %4696 = vmatpush2.bf16.msra.mxu0 0
  %4697 = vmatprep.subr.bf16.mxu0 0
  %4698 = vmatpush2.bf16.msra.mxu0 0
  %4699 = vmatprep.subr.bf16.mxu0 0
  %4700 = vmatpush2.bf16.msra.mxu0 0
  %4701 = vmatprep.subr.bf16.mxu0 0
  %4702 = vmatpush2.bf16.msra.mxu0 0
  %4703 = vmatprep.subr.bf16.mxu0 0
  %4704 = vmatpush2.bf16.msra.mxu0 0
  %4705 = vmatprep.mubr.bf16.mxu0 0
  %4706 = vmatmul.mubr.bf16.gmra.mxu0 %v2909
  %v4707 = vpop.f32.mrf.mxu0
  %v4708 = vadd.f32 0.0, %v4707
  %v4709 = vpop.f32.mrf.mxu0
  %v4710 = vpop.f32.mrf.mxu0
  %v4711 = vadd.f32 0.0, %v4710
  %v4712 = vpop.f32.mrf.mxu0
  %4713 = vmatprep.mubr.bf16.mxu0 0
  %4714 = vmatmul.mubr.bf16.gmra.mxu0 %v2910
  %v4715 = vpop.f32.mrf.mxu0
  %v4716 = vadd.f32 0.0, %v4715
  %v4717 = vpop.f32.mrf.mxu0
  %v4718 = vpop.f32.mrf.mxu0
  %v4719 = vadd.f32 0.0, %v4718
  %v4720 = vpop.f32.mrf.mxu0
  %4721 = vmatprep.mubr.bf16.mxu0 0
  %4722 = vmatmul.mubr.bf16.gmra.mxu0 %v2911
  %v4723 = vpop.f32.mrf.mxu0
  %v4724 = vadd.f32 0.0, %v4723
  %v4725 = vpop.f32.mrf.mxu0
  %v4726 = vpop.f32.mrf.mxu0
  %v4727 = vadd.f32 0.0, %v4726
  %v4728 = vpop.f32.mrf.mxu0
  %4729 = vmatprep.mubr.bf16.mxu0 0
  %4730 = vmatmul.mubr.bf16.gmra.mxu0 %v2912
  %v4731 = vpop.f32.mrf.mxu0
  %v4732 = vadd.f32 0.0, %v4731
  %v4733 = vpop.f32.mrf.mxu0
  %v4734 = vpop.f32.mrf.mxu0
  %v4735 = vadd.f32 0.0, %v4734
  %v4736 = vpop.f32.mrf.mxu0
  %4737 = vdwg.mxu0
  %v4738 = vpack.c.bf16 %v4711, %v4708
  %v4739 = vpack.c.bf16 %v4719, %v4716
  %v4740 = vpack.c.bf16 %v4727, %v4724
  %v4741 = vpack.c.bf16 %v4735, %v4732
  %v4746 = vunpack.c.l.b16 %v435
  %v4747 = vunpack.c.l.b16 %v436
  %v4748 = vunpack.c.l.b16 %v437
  %v4749 = vunpack.c.l.b16 %v438
  %v4750 = vpack.c.b16 %v4747, %v4746
  %v4751 = vpack.c.b16 %v4749, %v4748
  %4754 = vmatprep.subr.bf16.mxu0 0
  %4755 = vmatpush1.bf16.msra.mxu0 0
  %4756 = vmatprep.subr.bf16.mxu0 0
  %4757 = vmatpush1.bf16.msra.mxu0 0
  %4758 = vmatprep.subr.bf16.mxu0 0
  %4759 = vmatpush1.bf16.msra.mxu0 0
  %4760 = vmatprep.subr.bf16.mxu0 0
  %4761 = vmatpush1.bf16.msra.mxu0 0
  %4762 = vmatprep.subr.bf16.mxu0 0
  %4763 = vmatpush1.bf16.msra.mxu0 0
  %4764 = vmatprep.subr.bf16.mxu0 0
  %4765 = vmatpush1.bf16.msra.mxu0 0
  %4766 = vmatprep.subr.bf16.mxu0 0
  %4767 = vmatpush1.bf16.msra.mxu0 %v4751
  %4768 = vmatprep.subr.bf16.mxu0 0
  %4769 = vmatpush1.bf16.msra.mxu0 %v4750
  %4770 = vmatprep.subr.bf16.mxu0 0
  %4771 = vmatpush2.bf16.msra.mxu0 0
  %4772 = vmatprep.subr.bf16.mxu0 0
  %4773 = vmatpush2.bf16.msra.mxu0 0
  %4774 = vmatprep.subr.bf16.mxu0 0
  %4775 = vmatpush2.bf16.msra.mxu0 0
  %4776 = vmatprep.subr.bf16.mxu0 0
  %4777 = vmatpush2.bf16.msra.mxu0 0
  %4778 = vmatprep.subr.bf16.mxu0 0
  %4779 = vmatpush2.bf16.msra.mxu0 0
  %4780 = vmatprep.subr.bf16.mxu0 0
  %4781 = vmatpush2.bf16.msra.mxu0 0
  %4782 = vmatprep.subr.bf16.mxu0 0
  %4783 = vmatpush2.bf16.msra.mxu0 0
  %4784 = vmatprep.subr.bf16.mxu0 0
  %4785 = vmatpush2.bf16.msra.mxu0 0
  %4786 = vmatprep.mubr.bf16.mxu0 0
  %4787 = vmatmul.mubr.bf16.gmra.mxu0 %v3553
  %v4788 = vpop.f32.mrf.mxu0
  %v4789 = vadd.f32 0.0, %v4788
  %v4790 = vpop.f32.mrf.mxu0
  %v4791 = vpop.f32.mrf.mxu0
  %v4792 = vadd.f32 0.0, %v4791
  %v4793 = vpop.f32.mrf.mxu0
  %4794 = vmatprep.mubr.bf16.mxu0 0
  %4795 = vmatmul.mubr.bf16.gmra.mxu0 %v3556
  %v4796 = vpop.f32.mrf.mxu0
  %v4797 = vadd.f32 0.0, %v4796
  %v4798 = vpop.f32.mrf.mxu0
  %v4799 = vpop.f32.mrf.mxu0
  %v4800 = vadd.f32 0.0, %v4799
  %v4801 = vpop.f32.mrf.mxu0
  %4802 = vmatprep.mubr.bf16.mxu0 0
  %4803 = vmatmul.mubr.bf16.gmra.mxu0 %v3559
  %v4804 = vpop.f32.mrf.mxu0
  %v4805 = vadd.f32 0.0, %v4804
  %v4806 = vpop.f32.mrf.mxu0
  %v4807 = vpop.f32.mrf.mxu0
  %v4808 = vadd.f32 0.0, %v4807
  %v4809 = vpop.f32.mrf.mxu0
  %4810 = vmatprep.mubr.bf16.mxu0 0
  %4811 = vmatmul.mubr.bf16.gmra.mxu0 %v3562
  %v4812 = vpop.f32.mrf.mxu0
  %v4813 = vadd.f32 0.0, %v4812
  %v4814 = vpop.f32.mrf.mxu0
  %v4815 = vpop.f32.mrf.mxu0
  %v4816 = vadd.f32 0.0, %v4815
  %v4817 = vpop.f32.mrf.mxu0
  %4818 = vdwg.mxu0
  %v4823 = vunpack.c.l.b16 %v431
  %v4824 = vunpack.c.l.b16 %v432
  %v4825 = vunpack.c.l.b16 %v433
  %v4826 = vunpack.c.l.b16 %v434
  %v4827 = vpack.c.b16 %v4824, %v4823
  %v4828 = vpack.c.b16 %v4826, %v4825
  %v4832 = vsel %vm591, %v4738, 0
  %v4835 = vsel %vm591, %v4739, 0
  %v4838 = vsel %vm591, %v4740, 0
  %v4841 = vsel %vm591, %v4741, 0
  %4843 = vmatprep.subr.bf16.mxu0 0
  %4844 = vmatpush1.bf16.msra.mxu0 0
  %4845 = vmatprep.subr.bf16.mxu0 0
  %4846 = vmatpush1.bf16.msra.mxu0 0
  %4847 = vmatprep.subr.bf16.mxu0 0
  %4848 = vmatpush1.bf16.msra.mxu0 0
  %4849 = vmatprep.subr.bf16.mxu0 0
  %4850 = vmatpush1.bf16.msra.mxu0 0
  %4851 = vmatprep.subr.bf16.mxu0 0
  %4852 = vmatpush1.bf16.msra.mxu0 0
  %4853 = vmatprep.subr.bf16.mxu0 0
  %4854 = vmatpush1.bf16.msra.mxu0 0
  %4855 = vmatprep.subr.bf16.mxu0 0
  %4856 = vmatpush1.bf16.msra.mxu0 %v4828
  %4857 = vmatprep.subr.bf16.mxu0 0
  %4858 = vmatpush1.bf16.msra.mxu0 %v4827
  %4859 = vmatprep.subr.bf16.mxu0 0
  %4860 = vmatpush2.bf16.msra.mxu0 0
  %4861 = vmatprep.subr.bf16.mxu0 0
  %4862 = vmatpush2.bf16.msra.mxu0 0
  %4863 = vmatprep.subr.bf16.mxu0 0
  %4864 = vmatpush2.bf16.msra.mxu0 0
  %4865 = vmatprep.subr.bf16.mxu0 0
  %4866 = vmatpush2.bf16.msra.mxu0 0
  %4867 = vmatprep.subr.bf16.mxu0 0
  %4868 = vmatpush2.bf16.msra.mxu0 0
  %4869 = vmatprep.subr.bf16.mxu0 0
  %4870 = vmatpush2.bf16.msra.mxu0 0
  %4871 = vmatprep.subr.bf16.mxu0 0
  %4872 = vmatpush2.bf16.msra.mxu0 0
  %4873 = vmatprep.subr.bf16.mxu0 0
  %4874 = vmatpush2.bf16.msra.mxu0 0
  %4875 = vmatprep.mubr.bf16.mxu0 0
  %4876 = vmatmul.mubr.bf16.gmra.mxu0 %v4832
  %v4877 = vpop.f32.mrf.mxu0
  %v4878 = vadd.f32 %v4789, %v4877
  %v4879 = vpop.f32.mrf.mxu0
  %v4880 = vpop.f32.mrf.mxu0
  %v4881 = vadd.f32 %v4792, %v4880
  %v4882 = vpop.f32.mrf.mxu0
  %4883 = vmatprep.mubr.bf16.mxu0 0
  %4884 = vmatmul.mubr.bf16.gmra.mxu0 %v4835
  %v4885 = vpop.f32.mrf.mxu0
  %v4886 = vadd.f32 %v4797, %v4885
  %v4887 = vpop.f32.mrf.mxu0
  %v4888 = vpop.f32.mrf.mxu0
  %v4889 = vadd.f32 %v4800, %v4888
  %v4890 = vpop.f32.mrf.mxu0
  %4891 = vmatprep.mubr.bf16.mxu0 0
  %4892 = vmatmul.mubr.bf16.gmra.mxu0 %v4838
  %v4893 = vpop.f32.mrf.mxu0
  %v4894 = vadd.f32 %v4805, %v4893
  %v4895 = vpop.f32.mrf.mxu0
  %v4896 = vpop.f32.mrf.mxu0
  %v4897 = vadd.f32 %v4808, %v4896
  %v4898 = vpop.f32.mrf.mxu0
  %4899 = vmatprep.mubr.bf16.mxu0 0
  %4900 = vmatmul.mubr.bf16.gmra.mxu0 %v4841
  %v4901 = vpop.f32.mrf.mxu0
  %v4902 = vadd.f32 %v4813, %v4901
  %v4903 = vpop.f32.mrf.mxu0
  %v4904 = vpop.f32.mrf.mxu0
  %v4905 = vadd.f32 %v4816, %v4904
  %v4906 = vpop.f32.mrf.mxu0
  %4907 = vdwg.mxu0
  %v4909 = vlaneseq
  %v4910 = vshrl.u32 %v4909, 7
  %v4911 = vsub.s32 0, %v4910
  %v4912 = vrot.slane %v439, %v4911
  %v4914 = vadd.f32 %v4878, %v4912
  %v4915 = vadd.f32 %v4881, %v4912
  %v4916 = vadd.f32 %v4886, %v4912
  %v4917 = vadd.f32 %v4889, %v4912
  %v4918 = vadd.f32 %v4894, %v4912
  %v4919 = vadd.f32 %v4897, %v4912
  %v4920 = vadd.f32 %v4902, %v4912
  %v4921 = vadd.f32 %v4905, %v4912
  %v4922 = vmax.f32 %v4914, 0.0
  %v4923 = vmax.f32 %v4915, 0.0
  %v4924 = vmax.f32 %v4916, 0.0
  %v4925 = vmax.f32 %v4917, 0.0
  %v4926 = vmax.f32 %v4918, 0.0
  %v4927 = vmax.f32 %v4919, 0.0
  %v4928 = vmax.f32 %v4920, 0.0
  %v4929 = vmax.f32 %v4921, 0.0
  %v4930 = vpack.c.bf16 %v4923, %v4922
  %v4931 = vpack.c.bf16 %v4925, %v4924
  %v4932 = vpack.c.bf16 %v4927, %v4926
  %v4933 = vpack.c.bf16 %v4929, %v4928
  %v4935 = vlaneseq
  %v4936 = vshrl.u32 %v4935, 7
  %v4937 = vsub.s32 0, %v4936
  %v4938 = vrot.slane %v444, %v4937
  %v4944 = vunpack.c.l.b16 %v440
  %v4945 = vunpack.c.l.b16 %v441
  %v4946 = vunpack.c.l.b16 %v442
  %v4947 = vunpack.c.l.b16 %v443
  %v4948 = vpack.c.b16 %v4945, %v4944
  %v4949 = vpack.c.b16 %v4947, %v4946
  %v4953 = vsel %vm591, %v4930, 0
  %v4956 = vsel %vm591, %v4931, 0
  %v4959 = vsel %vm591, %v4932, 0
  %v4962 = vsel %vm591, %v4933, 0
  %4964 = vmatprep.subr.bf16.mxu0 0
  %4965 = vmatpush1.bf16.msra.mxu0 0
  %4966 = vmatprep.subr.bf16.mxu0 0
  %4967 = vmatpush1.bf16.msra.mxu0 0
  %4968 = vmatprep.subr.bf16.mxu0 0
  %4969 = vmatpush1.bf16.msra.mxu0 0
  %4970 = vmatprep.subr.bf16.mxu0 0
  %4971 = vmatpush1.bf16.msra.mxu0 0
  %4972 = vmatprep.subr.bf16.mxu0 0
  %4973 = vmatpush1.bf16.msra.mxu0 0
  %4974 = vmatprep.subr.bf16.mxu0 0
  %4975 = vmatpush1.bf16.msra.mxu0 0
  %4976 = vmatprep.subr.bf16.mxu0 0
  %4977 = vmatpush1.bf16.msra.mxu0 %v4949
  %4978 = vmatprep.subr.bf16.mxu0 0
  %4979 = vmatpush1.bf16.msra.mxu0 %v4948
  %4980 = vmatprep.subr.bf16.mxu0 0
  %4981 = vmatpush2.bf16.msra.mxu0 0
  %4982 = vmatprep.subr.bf16.mxu0 0
  %4983 = vmatpush2.bf16.msra.mxu0 0
  %4984 = vmatprep.subr.bf16.mxu0 0
  %4985 = vmatpush2.bf16.msra.mxu0 0
  %4986 = vmatprep.subr.bf16.mxu0 0
  %4987 = vmatpush2.bf16.msra.mxu0 0
  %4988 = vmatprep.subr.bf16.mxu0 0
  %4989 = vmatpush2.bf16.msra.mxu0 0
  %4990 = vmatprep.subr.bf16.mxu0 0
  %4991 = vmatpush2.bf16.msra.mxu0 0
  %4992 = vmatprep.subr.bf16.mxu0 0
  %4993 = vmatpush2.bf16.msra.mxu0 0
  %4994 = vmatprep.subr.bf16.mxu0 0
  %4995 = vmatpush2.bf16.msra.mxu0 0
  %4996 = vmatprep.mubr.bf16.mxu0 0
  %4997 = vmatmul.mubr.bf16.gmra.mxu0 %v4953
  %v4998 = vpop.f32.mrf.mxu0
  %v4999 = vadd.f32 %v4938, %v4998
  %v5000 = vpop.f32.mrf.mxu0
  %v5001 = vpop.f32.mrf.mxu0
  %v5002 = vadd.f32 %v4938, %v5001
  %v5003 = vpop.f32.mrf.mxu0
  %5004 = vmatprep.mubr.bf16.mxu0 0
  %5005 = vmatmul.mubr.bf16.gmra.mxu0 %v4956
  %v5006 = vpop.f32.mrf.mxu0
  %v5007 = vadd.f32 %v4938, %v5006
  %v5008 = vpop.f32.mrf.mxu0
  %v5009 = vpop.f32.mrf.mxu0
  %v5010 = vadd.f32 %v4938, %v5009
  %v5011 = vpop.f32.mrf.mxu0
  %5012 = vmatprep.mubr.bf16.mxu0 0
  %5013 = vmatmul.mubr.bf16.gmra.mxu0 %v4959
  %v5014 = vpop.f32.mrf.mxu0
  %v5015 = vadd.f32 %v4938, %v5014
  %v5016 = vpop.f32.mrf.mxu0
  %v5017 = vpop.f32.mrf.mxu0
  %v5018 = vadd.f32 %v4938, %v5017
  %v5019 = vpop.f32.mrf.mxu0
  %5020 = vmatprep.mubr.bf16.mxu0 0
  %5021 = vmatmul.mubr.bf16.gmra.mxu0 %v4962
  %v5022 = vpop.f32.mrf.mxu0
  %v5023 = vadd.f32 %v4938, %v5022
  %v5024 = vpop.f32.mrf.mxu0
  %v5025 = vpop.f32.mrf.mxu0
  %v5026 = vadd.f32 %v4938, %v5025
  %v5027 = vpop.f32.mrf.mxu0
  %5028 = vdwg.mxu0
  %v5029 = vmax.f32 %v4999, 0.0
  %v5030 = vmax.f32 %v5002, 0.0
  %v5031 = vmax.f32 %v5007, 0.0
  %v5032 = vmax.f32 %v5010, 0.0
  %v5033 = vmax.f32 %v5015, 0.0
  %v5034 = vmax.f32 %v5018, 0.0
  %v5035 = vmax.f32 %v5023, 0.0
  %v5036 = vmax.f32 %v5026, 0.0
  %v5037 = vpack.c.bf16 %v5030, %v5029
  %v5038 = vpack.c.bf16 %v5032, %v5031
  %v5039 = vpack.c.bf16 %v5034, %v5033
  %v5040 = vpack.c.bf16 %v5036, %v5035
  %v5042 = vlaneseq
  %v5043 = vshrl.u32 %v5042, 7
  %v5044 = vsub.s32 0, %v5043
  %v5045 = vrot.slane %v449, %v5044
  %v5051 = vunpack.c.l.b16 %v445
  %v5052 = vunpack.c.l.b16 %v446
  %v5053 = vunpack.c.l.b16 %v447
  %v5054 = vunpack.c.l.b16 %v448
  %v5055 = vpack.c.b16 %v5052, %v5051
  %v5056 = vpack.c.b16 %v5054, %v5053
  %v5060 = vsel %vm591, %v5037, 0
  %v5063 = vsel %vm591, %v5038, 0
  %v5066 = vsel %vm591, %v5039, 0
  %v5069 = vsel %vm591, %v5040, 0
  %5071 = vmatprep.subr.bf16.mxu0 0
  %5072 = vmatpush1.bf16.msra.mxu0 0
  %5073 = vmatprep.subr.bf16.mxu0 0
  %5074 = vmatpush1.bf16.msra.mxu0 0
  %5075 = vmatprep.subr.bf16.mxu0 0
  %5076 = vmatpush1.bf16.msra.mxu0 0
  %5077 = vmatprep.subr.bf16.mxu0 0
  %5078 = vmatpush1.bf16.msra.mxu0 0
  %5079 = vmatprep.subr.bf16.mxu0 0
  %5080 = vmatpush1.bf16.msra.mxu0 0
  %5081 = vmatprep.subr.bf16.mxu0 0
  %5082 = vmatpush1.bf16.msra.mxu0 0
  %5083 = vmatprep.subr.bf16.mxu0 0
  %5084 = vmatpush1.bf16.msra.mxu0 %v5056
  %5085 = vmatprep.subr.bf16.mxu0 0
  %5086 = vmatpush1.bf16.msra.mxu0 %v5055
  %5087 = vmatprep.subr.bf16.mxu0 0
  %5088 = vmatpush2.bf16.msra.mxu0 0
  %5089 = vmatprep.subr.bf16.mxu0 0
  %5090 = vmatpush2.bf16.msra.mxu0 0
  %5091 = vmatprep.subr.bf16.mxu0 0
  %5092 = vmatpush2.bf16.msra.mxu0 0
  %5093 = vmatprep.subr.bf16.mxu0 0
  %5094 = vmatpush2.bf16.msra.mxu0 0
  %5095 = vmatprep.subr.bf16.mxu0 0
  %5096 = vmatpush2.bf16.msra.mxu0 0
  %5097 = vmatprep.subr.bf16.mxu0 0
  %5098 = vmatpush2.bf16.msra.mxu0 0
  %5099 = vmatprep.subr.bf16.mxu0 0
  %5100 = vmatpush2.bf16.msra.mxu0 0
  %5101 = vmatprep.subr.bf16.mxu0 0
  %5102 = vmatpush2.bf16.msra.mxu0 0
  %5103 = vmatprep.mubr.bf16.mxu0 0
  %5104 = vmatmul.mubr.bf16.gmra.mxu0 %v5060
  %v5105 = vpop.f32.mrf.mxu0
  %v5106 = vadd.f32 %v5045, %v5105
  %v5107 = vpop.f32.mrf.mxu0
  %v5108 = vpop.f32.mrf.mxu0
  %v5109 = vadd.f32 %v5045, %v5108
  %v5110 = vpop.f32.mrf.mxu0
  %5111 = vmatprep.mubr.bf16.mxu0 0
  %5112 = vmatmul.mubr.bf16.gmra.mxu0 %v5063
  %v5113 = vpop.f32.mrf.mxu0
  %v5114 = vadd.f32 %v5045, %v5113
  %v5115 = vpop.f32.mrf.mxu0
  %v5116 = vpop.f32.mrf.mxu0
  %v5117 = vadd.f32 %v5045, %v5116
  %v5118 = vpop.f32.mrf.mxu0
  %5119 = vmatprep.mubr.bf16.mxu0 0
  %5120 = vmatmul.mubr.bf16.gmra.mxu0 %v5066
  %v5121 = vpop.f32.mrf.mxu0
  %v5122 = vadd.f32 %v5045, %v5121
  %v5123 = vpop.f32.mrf.mxu0
  %v5124 = vpop.f32.mrf.mxu0
  %v5125 = vadd.f32 %v5045, %v5124
  %v5126 = vpop.f32.mrf.mxu0
  %5127 = vmatprep.mubr.bf16.mxu0 0
  %5128 = vmatmul.mubr.bf16.gmra.mxu0 %v5069
  %v5129 = vpop.f32.mrf.mxu0
  %v5130 = vadd.f32 %v5045, %v5129
  %v5131 = vpop.f32.mrf.mxu0
  %v5132 = vpop.f32.mrf.mxu0
  %v5133 = vadd.f32 %v5045, %v5132
  %v5134 = vpop.f32.mrf.mxu0
  %5135 = vdwg.mxu0
  %v5136 = vsel %vm591, %v5106, 0.0
  %5137 = vadd.xlane.f32.xlu0 %v5136
  %v5138 = vpop.xlane.xlu0 %5137
  %v5139 = vsel %vm591, %v5109, 0.0
  %5140 = vadd.xlane.f32.xlu0 %v5139
  %v5141 = vpop.xlane.xlu0 %5140
  %v5142 = vsel %vm591, %v5114, 0.0
  %5143 = vadd.xlane.f32.xlu0 %v5142
  %v5144 = vpop.xlane.xlu0 %5143
  %v5145 = vsel %vm591, %v5117, 0.0
  %5146 = vadd.xlane.f32.xlu0 %v5145
  %v5147 = vpop.xlane.xlu0 %5146
  %v5148 = vsel %vm591, %v5122, 0.0
  %5149 = vadd.xlane.f32.xlu0 %v5148
  %v5150 = vpop.xlane.xlu0 %5149
  %v5151 = vsel %vm591, %v5125, 0.0
  %5152 = vadd.xlane.f32.xlu0 %v5151
  %v5153 = vpop.xlane.xlu0 %5152
  %v5154 = vsel %vm591, %v5130, 0.0
  %5155 = vadd.xlane.f32.xlu0 %v5154
  %v5156 = vpop.xlane.xlu0 %5155
  %v5157 = vsel %vm591, %v5133, 0.0
  %5158 = vadd.xlane.f32.xlu0 %v5157
  %v5159 = vpop.xlane.xlu0 %5158
  %v5160 = vmul.f32 %v5138, %v800
  %v5161 = vmul.f32 %v5141, %v800
  %v5162 = vmul.f32 %v5144, %v800
  %v5163 = vmul.f32 %v5147, %v800
  %v5164 = vmul.f32 %v5150, %v800
  %v5165 = vmul.f32 %v5153, %v800
  %v5166 = vmul.f32 %v5156, %v800
  %v5167 = vmul.f32 %v5159, %v800
  %v5168 = vsub.f32 %v5106, %v5160
  %v5169 = vsub.f32 %v5109, %v5161
  %v5170 = vsub.f32 %v5114, %v5162
  %v5171 = vsub.f32 %v5117, %v5163
  %v5172 = vsub.f32 %v5122, %v5164
  %v5173 = vsub.f32 %v5125, %v5165
  %v5174 = vsub.f32 %v5130, %v5166
  %v5175 = vsub.f32 %v5133, %v5167
  %v5176 = vmul.f32 %v5168, %v5168
  %v5177 = vmul.f32 %v5169, %v5169
  %v5178 = vmul.f32 %v5170, %v5170
  %v5179 = vmul.f32 %v5171, %v5171
  %v5180 = vmul.f32 %v5172, %v5172
  %v5181 = vmul.f32 %v5173, %v5173
  %v5182 = vmul.f32 %v5174, %v5174
  %v5183 = vmul.f32 %v5175, %v5175
  %v5184 = vsel %vm591, %v5176, 0.0
  %5185 = vadd.xlane.f32.xlu0 %v5184
  %v5186 = vpop.xlane.xlu0 %5185
  %v5187 = vsel %vm591, %v5177, 0.0
  %5188 = vadd.xlane.f32.xlu0 %v5187
  %v5189 = vpop.xlane.xlu0 %5188
  %v5190 = vsel %vm591, %v5178, 0.0
  %5191 = vadd.xlane.f32.xlu0 %v5190
  %v5192 = vpop.xlane.xlu0 %5191
  %v5193 = vsel %vm591, %v5179, 0.0
  %5194 = vadd.xlane.f32.xlu0 %v5193
  %v5195 = vpop.xlane.xlu0 %5194
  %v5196 = vsel %vm591, %v5180, 0.0
  %5197 = vadd.xlane.f32.xlu0 %v5196
  %v5198 = vpop.xlane.xlu0 %5197
  %v5199 = vsel %vm591, %v5181, 0.0
  %5200 = vadd.xlane.f32.xlu0 %v5199
  %v5201 = vpop.xlane.xlu0 %5200
  %v5202 = vsel %vm591, %v5182, 0.0
  %5203 = vadd.xlane.f32.xlu0 %v5202
  %v5204 = vpop.xlane.xlu0 %5203
  %v5205 = vsel %vm591, %v5183, 0.0
  %5206 = vadd.xlane.f32.xlu0 %v5205
  %v5207 = vpop.xlane.xlu0 %5206
  %v5208 = vmul.f32 %v5186, %v800
  %v5209 = vmul.f32 %v5189, %v800
  %v5210 = vmul.f32 %v5192, %v800
  %v5211 = vmul.f32 %v5195, %v800
  %v5212 = vmul.f32 %v5198, %v800
  %v5213 = vmul.f32 %v5201, %v800
  %v5214 = vmul.f32 %v5204, %v800
  %v5215 = vmul.f32 %v5207, %v800
  %v5216 = vadd.f32 %v5208, 1e-05
  %v5217 = vadd.f32 %v5209, 1e-05
  %v5218 = vadd.f32 %v5210, 1e-05
  %v5219 = vadd.f32 %v5211, 1e-05
  %v5220 = vadd.f32 %v5212, 1e-05
  %v5221 = vadd.f32 %v5213, 1e-05
  %v5222 = vadd.f32 %v5214, 1e-05
  %v5223 = vadd.f32 %v5215, 1e-05
  %v5224 = vrsqrt.pop %v5216
  %v5225 = vrsqrt.pop %v5217
  %v5226 = vrsqrt.pop %v5218
  %v5227 = vrsqrt.pop %v5219
  %v5228 = vrsqrt.pop %v5220
  %v5229 = vrsqrt.pop %v5221
  %v5230 = vrsqrt.pop %v5222
  %v5231 = vrsqrt.pop %v5223
  %v5232 = vmul.f32 %v5168, %v5224
  %v5233 = vmul.f32 %v5169, %v5225
  %v5234 = vmul.f32 %v5170, %v5226
  %v5235 = vmul.f32 %v5171, %v5227
  %v5236 = vmul.f32 %v5172, %v5228
  %v5237 = vmul.f32 %v5173, %v5229
  %v5238 = vmul.f32 %v5174, %v5230
  %v5239 = vmul.f32 %v5175, %v5231
  %v5241 = vlaneseq
  %v5242 = vshrl.u32 %v5241, 7
  %v5243 = vsub.s32 0, %v5242
  %v5244 = vrot.slane %v450, %v5243
  %v5246 = vmul.f32 %v5232, %v5244
  %v5247 = vmul.f32 %v5233, %v5244
  %v5248 = vmul.f32 %v5234, %v5244
  %v5249 = vmul.f32 %v5235, %v5244
  %v5250 = vmul.f32 %v5236, %v5244
  %v5251 = vmul.f32 %v5237, %v5244
  %v5252 = vmul.f32 %v5238, %v5244
  %v5253 = vmul.f32 %v5239, %v5244
  %v5255 = vlaneseq
  %v5256 = vshrl.u32 %v5255, 7
  %v5257 = vsub.s32 0, %v5256
  %v5258 = vrot.slane %v451, %v5257
  %v5260 = vadd.f32 %v5246, %v5258
  %v5261 = vadd.f32 %v5247, %v5258
  %v5262 = vadd.f32 %v5248, %v5258
  %v5263 = vadd.f32 %v5249, %v5258
  %v5264 = vadd.f32 %v5250, %v5258
  %v5265 = vadd.f32 %v5251, %v5258
  %v5266 = vadd.f32 %v5252, %v5258
  %v5267 = vadd.f32 %v5253, %v5258
  %v5268 = vadd.f32 %v5260, %v3512
  %v5269 = vadd.f32 %v5261, %v3513
  %v5270 = vadd.f32 %v5262, %v3514
  %v5271 = vadd.f32 %v5263, %v3515
  %v5272 = vadd.f32 %v5264, %v3516
  %v5273 = vadd.f32 %v5265, %v3517
  %v5274 = vadd.f32 %v5266, %v3518
  %v5275 = vadd.f32 %v5267, %v3519
  %v5276 = vpack.c.bf16 %v5269, %v5268
  %v5277 = vpack.c.bf16 %v5271, %v5270
  %v5278 = vpack.c.bf16 %v5273, %v5272
  %v5279 = vpack.c.bf16 %v5275, %v5274
  %v5281 = vlaneseq
  %v5282 = vshrl.u32 %v5281, 7
  %v5283 = vsub.s32 0, %v5282
  %v5284 = vrot.slane %v456, %v5283
  %v5290 = vunpack.c.l.b16 %v452
  %v5291 = vunpack.c.l.b16 %v453
  %v5292 = vunpack.c.l.b16 %v454
  %v5293 = vunpack.c.l.b16 %v455
  %v5294 = vpack.c.b16 %v5291, %v5290
  %v5295 = vpack.c.b16 %v5293, %v5292
  %v5299 = vsel %vm591, %v5276, 0
  %v5302 = vsel %vm591, %v5277, 0
  %v5305 = vsel %vm591, %v5278, 0
  %v5308 = vsel %vm591, %v5279, 0
  %5310 = vmatprep.subr.bf16.mxu0 0
  %5311 = vmatpush1.bf16.msra.mxu0 0
  %5312 = vmatprep.subr.bf16.mxu0 0
  %5313 = vmatpush1.bf16.msra.mxu0 0
  %5314 = vmatprep.subr.bf16.mxu0 0
  %5315 = vmatpush1.bf16.msra.mxu0 0
  %5316 = vmatprep.subr.bf16.mxu0 0
  %5317 = vmatpush1.bf16.msra.mxu0 0
  %5318 = vmatprep.subr.bf16.mxu0 0
  %5319 = vmatpush1.bf16.msra.mxu0 0
  %5320 = vmatprep.subr.bf16.mxu0 0
  %5321 = vmatpush1.bf16.msra.mxu0 0
  %5322 = vmatprep.subr.bf16.mxu0 0
  %5323 = vmatpush1.bf16.msra.mxu0 %v5295
  %5324 = vmatprep.subr.bf16.mxu0 0
  %5325 = vmatpush1.bf16.msra.mxu0 %v5294
  %5326 = vmatprep.subr.bf16.mxu0 0
  %5327 = vmatpush2.bf16.msra.mxu0 0
  %5328 = vmatprep.subr.bf16.mxu0 0
  %5329 = vmatpush2.bf16.msra.mxu0 0
  %5330 = vmatprep.subr.bf16.mxu0 0
  %5331 = vmatpush2.bf16.msra.mxu0 0
  %5332 = vmatprep.subr.bf16.mxu0 0
  %5333 = vmatpush2.bf16.msra.mxu0 0
  %5334 = vmatprep.subr.bf16.mxu0 0
  %5335 = vmatpush2.bf16.msra.mxu0 0
  %5336 = vmatprep.subr.bf16.mxu0 0
  %5337 = vmatpush2.bf16.msra.mxu0 0
  %5338 = vmatprep.subr.bf16.mxu0 0
  %5339 = vmatpush2.bf16.msra.mxu0 0
  %5340 = vmatprep.subr.bf16.mxu0 0
  %5341 = vmatpush2.bf16.msra.mxu0 0
  %5342 = vmatprep.mubr.bf16.mxu0 0
  %5343 = vmatmul.mubr.bf16.gmra.mxu0 %v5299
  %v5344 = vpop.f32.mrf.mxu0
  %v5345 = vadd.f32 %v5284, %v5344
  %v5346 = vpop.f32.mrf.mxu0
  %v5347 = vpop.f32.mrf.mxu0
  %v5348 = vadd.f32 %v5284, %v5347
  %v5349 = vpop.f32.mrf.mxu0
  %5350 = vmatprep.mubr.bf16.mxu0 0
  %5351 = vmatmul.mubr.bf16.gmra.mxu0 %v5302
  %v5352 = vpop.f32.mrf.mxu0
  %v5353 = vadd.f32 %v5284, %v5352
  %v5354 = vpop.f32.mrf.mxu0
  %v5355 = vpop.f32.mrf.mxu0
  %v5356 = vadd.f32 %v5284, %v5355
  %v5357 = vpop.f32.mrf.mxu0
  %5358 = vmatprep.mubr.bf16.mxu0 0
  %5359 = vmatmul.mubr.bf16.gmra.mxu0 %v5305
  %v5360 = vpop.f32.mrf.mxu0
  %v5361 = vadd.f32 %v5284, %v5360
  %v5362 = vpop.f32.mrf.mxu0
  %v5363 = vpop.f32.mrf.mxu0
  %v5364 = vadd.f32 %v5284, %v5363
  %v5365 = vpop.f32.mrf.mxu0
  %5366 = vmatprep.mubr.bf16.mxu0 0
  %5367 = vmatmul.mubr.bf16.gmra.mxu0 %v5308
  %v5368 = vpop.f32.mrf.mxu0
  %v5369 = vadd.f32 %v5284, %v5368
  %v5370 = vpop.f32.mrf.mxu0
  %v5371 = vpop.f32.mrf.mxu0
  %v5372 = vadd.f32 %v5284, %v5371
  %v5373 = vpop.f32.mrf.mxu0
  %5374 = vdwg.mxu0
  %v5375 = vmax.f32 %v5345, 0.0
  %v5376 = vmax.f32 %v5348, 0.0
  %v5377 = vmax.f32 %v5353, 0.0
  %v5378 = vmax.f32 %v5356, 0.0
  %v5379 = vmax.f32 %v5361, 0.0
  %v5380 = vmax.f32 %v5364, 0.0
  %v5381 = vmax.f32 %v5369, 0.0
  %v5382 = vmax.f32 %v5372, 0.0
  %v5383 = vpack.c.bf16 %v5376, %v5375
  %v5384 = vpack.c.bf16 %v5378, %v5377
  %v5385 = vpack.c.bf16 %v5380, %v5379
  %v5386 = vpack.c.bf16 %v5382, %v5381
  %v5388 = vlaneseq
  %v5389 = vshrl.u32 %v5388, 7
  %v5390 = vsub.s32 0, %v5389
  %v5391 = vrot.slane %v461, %v5390
  %v5397 = vunpack.c.l.b16 %v457
  %v5398 = vunpack.c.l.b16 %v458
  %v5399 = vunpack.c.l.b16 %v459
  %v5400 = vunpack.c.l.b16 %v460
  %v5401 = vpack.c.b16 %v5398, %v5397
  %v5402 = vpack.c.b16 %v5400, %v5399
  %v5406 = vsel %vm591, %v5383, 0
  %v5409 = vsel %vm591, %v5384, 0
  %v5412 = vsel %vm591, %v5385, 0
  %v5415 = vsel %vm591, %v5386, 0
  %5417 = vmatprep.subr.bf16.mxu0 0
  %5418 = vmatpush1.bf16.msra.mxu0 0
  %5419 = vmatprep.subr.bf16.mxu0 0
  %5420 = vmatpush1.bf16.msra.mxu0 0
  %5421 = vmatprep.subr.bf16.mxu0 0
  %5422 = vmatpush1.bf16.msra.mxu0 0
  %5423 = vmatprep.subr.bf16.mxu0 0
  %5424 = vmatpush1.bf16.msra.mxu0 0
  %5425 = vmatprep.subr.bf16.mxu0 0
  %5426 = vmatpush1.bf16.msra.mxu0 0
  %5427 = vmatprep.subr.bf16.mxu0 0
  %5428 = vmatpush1.bf16.msra.mxu0 0
  %5429 = vmatprep.subr.bf16.mxu0 0
  %5430 = vmatpush1.bf16.msra.mxu0 %v5402
  %5431 = vmatprep.subr.bf16.mxu0 0
  %5432 = vmatpush1.bf16.msra.mxu0 %v5401
  %5433 = vmatprep.subr.bf16.mxu0 0
  %5434 = vmatpush2.bf16.msra.mxu0 0
  %5435 = vmatprep.subr.bf16.mxu0 0
  %5436 = vmatpush2.bf16.msra.mxu0 0
  %5437 = vmatprep.subr.bf16.mxu0 0
  %5438 = vmatpush2.bf16.msra.mxu0 0
  %5439 = vmatprep.subr.bf16.mxu0 0
  %5440 = vmatpush2.bf16.msra.mxu0 0
  %5441 = vmatprep.subr.bf16.mxu0 0
  %5442 = vmatpush2.bf16.msra.mxu0 0
  %5443 = vmatprep.subr.bf16.mxu0 0
  %5444 = vmatpush2.bf16.msra.mxu0 0
  %5445 = vmatprep.subr.bf16.mxu0 0
  %5446 = vmatpush2.bf16.msra.mxu0 0
  %5447 = vmatprep.subr.bf16.mxu0 0
  %5448 = vmatpush2.bf16.msra.mxu0 0
  %5449 = vmatprep.mubr.bf16.mxu0 0
  %5450 = vmatmul.mubr.bf16.gmra.mxu0 %v5406
  %v5451 = vpop.f32.mrf.mxu0
  %v5452 = vadd.f32 %v5391, %v5451
  %v5453 = vpop.f32.mrf.mxu0
  %v5454 = vpop.f32.mrf.mxu0
  %v5455 = vadd.f32 %v5391, %v5454
  %v5456 = vpop.f32.mrf.mxu0
  %5457 = vmatprep.mubr.bf16.mxu0 0
  %5458 = vmatmul.mubr.bf16.gmra.mxu0 %v5409
  %v5459 = vpop.f32.mrf.mxu0
  %v5460 = vadd.f32 %v5391, %v5459
  %v5461 = vpop.f32.mrf.mxu0
  %v5462 = vpop.f32.mrf.mxu0
  %v5463 = vadd.f32 %v5391, %v5462
  %v5464 = vpop.f32.mrf.mxu0
  %5465 = vmatprep.mubr.bf16.mxu0 0
  %5466 = vmatmul.mubr.bf16.gmra.mxu0 %v5412
  %v5467 = vpop.f32.mrf.mxu0
  %v5468 = vadd.f32 %v5391, %v5467
  %v5469 = vpop.f32.mrf.mxu0
  %v5470 = vpop.f32.mrf.mxu0
  %v5471 = vadd.f32 %v5391, %v5470
  %v5472 = vpop.f32.mrf.mxu0
  %5473 = vmatprep.mubr.bf16.mxu0 0
  %5474 = vmatmul.mubr.bf16.gmra.mxu0 %v5415
  %v5475 = vpop.f32.mrf.mxu0
  %v5476 = vadd.f32 %v5391, %v5475
  %v5477 = vpop.f32.mrf.mxu0
  %v5478 = vpop.f32.mrf.mxu0
  %v5479 = vadd.f32 %v5391, %v5478
  %v5480 = vpop.f32.mrf.mxu0
  %5481 = vdwg.mxu0
  %v5482 = vmax.f32 %v5452, 0.0
  %v5483 = vmax.f32 %v5455, 0.0
  %v5484 = vmax.f32 %v5460, 0.0
  %v5485 = vmax.f32 %v5463, 0.0
  %v5486 = vmax.f32 %v5468, 0.0
  %v5487 = vmax.f32 %v5471, 0.0
  %v5488 = vmax.f32 %v5476, 0.0
  %v5489 = vmax.f32 %v5479, 0.0
  %v5490 = vpack.c.bf16 %v5483, %v5482
  %v5491 = vpack.c.bf16 %v5485, %v5484
  %v5492 = vpack.c.bf16 %v5487, %v5486
  %v5493 = vpack.c.bf16 %v5489, %v5488
  %v5495 = vlaneseq
  %v5496 = vshrl.u32 %v5495, 7
  %v5497 = vsub.s32 0, %v5496
  %v5498 = vrot.slane %v466, %v5497
  %v5504 = vunpack.c.l.b16 %v462
  %v5505 = vunpack.c.l.b16 %v463
  %v5506 = vunpack.c.l.b16 %v464
  %v5507 = vunpack.c.l.b16 %v465
  %v5508 = vpack.c.b16 %v5505, %v5504
  %v5509 = vpack.c.b16 %v5507, %v5506
  %v5513 = vsel %vm591, %v5490, 0
  %v5516 = vsel %vm591, %v5491, 0
  %v5519 = vsel %vm591, %v5492, 0
  %v5522 = vsel %vm591, %v5493, 0
  %5524 = vmatprep.subr.bf16.mxu0 0
  %5525 = vmatpush1.bf16.msra.mxu0 0
  %5526 = vmatprep.subr.bf16.mxu0 0
  %5527 = vmatpush1.bf16.msra.mxu0 0
  %5528 = vmatprep.subr.bf16.mxu0 0
  %5529 = vmatpush1.bf16.msra.mxu0 0
  %5530 = vmatprep.subr.bf16.mxu0 0
  %5531 = vmatpush1.bf16.msra.mxu0 0
  %5532 = vmatprep.subr.bf16.mxu0 0
  %5533 = vmatpush1.bf16.msra.mxu0 0
  %5534 = vmatprep.subr.bf16.mxu0 0
  %5535 = vmatpush1.bf16.msra.mxu0 0
  %5536 = vmatprep.subr.bf16.mxu0 0
  %5537 = vmatpush1.bf16.msra.mxu0 %v5509
  %5538 = vmatprep.subr.bf16.mxu0 0
  %5539 = vmatpush1.bf16.msra.mxu0 %v5508
  %5540 = vmatprep.subr.bf16.mxu0 0
  %5541 = vmatpush2.bf16.msra.mxu0 0
  %5542 = vmatprep.subr.bf16.mxu0 0
  %5543 = vmatpush2.bf16.msra.mxu0 0
  %5544 = vmatprep.subr.bf16.mxu0 0
  %5545 = vmatpush2.bf16.msra.mxu0 0
  %5546 = vmatprep.subr.bf16.mxu0 0
  %5547 = vmatpush2.bf16.msra.mxu0 0
  %5548 = vmatprep.subr.bf16.mxu0 0
  %5549 = vmatpush2.bf16.msra.mxu0 0
  %5550 = vmatprep.subr.bf16.mxu0 0
  %5551 = vmatpush2.bf16.msra.mxu0 0
  %5552 = vmatprep.subr.bf16.mxu0 0
  %5553 = vmatpush2.bf16.msra.mxu0 0
  %5554 = vmatprep.subr.bf16.mxu0 0
  %5555 = vmatpush2.bf16.msra.mxu0 0
  %5556 = vmatprep.mubr.bf16.mxu0 0
  %5557 = vmatmul.mubr.bf16.gmra.mxu0 %v5513
  %v5558 = vpop.f32.mrf.mxu0
  %v5559 = vadd.f32 %v5498, %v5558
  %v5560 = vpop.f32.mrf.mxu0
  %v5561 = vpop.f32.mrf.mxu0
  %v5562 = vadd.f32 %v5498, %v5561
  %v5563 = vpop.f32.mrf.mxu0
  %5564 = vmatprep.mubr.bf16.mxu0 0
  %5565 = vmatmul.mubr.bf16.gmra.mxu0 %v5516
  %v5566 = vpop.f32.mrf.mxu0
  %v5567 = vadd.f32 %v5498, %v5566
  %v5568 = vpop.f32.mrf.mxu0
  %v5569 = vpop.f32.mrf.mxu0
  %v5570 = vadd.f32 %v5498, %v5569
  %v5571 = vpop.f32.mrf.mxu0
  %5572 = vmatprep.mubr.bf16.mxu0 0
  %5573 = vmatmul.mubr.bf16.gmra.mxu0 %v5519
  %v5574 = vpop.f32.mrf.mxu0
  %v5575 = vadd.f32 %v5498, %v5574
  %v5576 = vpop.f32.mrf.mxu0
  %v5577 = vpop.f32.mrf.mxu0
  %v5578 = vadd.f32 %v5498, %v5577
  %v5579 = vpop.f32.mrf.mxu0
  %5580 = vmatprep.mubr.bf16.mxu0 0
  %5581 = vmatmul.mubr.bf16.gmra.mxu0 %v5522
  %v5582 = vpop.f32.mrf.mxu0
  %v5583 = vadd.f32 %v5498, %v5582
  %v5584 = vpop.f32.mrf.mxu0
  %v5585 = vpop.f32.mrf.mxu0
  %v5586 = vadd.f32 %v5498, %v5585
  %v5587 = vpop.f32.mrf.mxu0
  %5588 = vdwg.mxu0
  %vm5589 = vcmask 48128
  %5590 = vst.msk [vmem:[%s131] sm:$0xff] %vm5589, %v5559
  %5591 = vst.msk [vmem:[%s131 + $0x8] sm:$0xff] %vm5589, %v5562
  %5592 = vst.msk [vmem:[%s131 + $0x10] sm:$0xff] %vm5589, %v5567
  %5593 = vst.msk [vmem:[%s131 + $0x18] sm:$0xff] %vm5589, %v5570
  %5594 = vst.msk [vmem:[%s131 + $0x20] sm:$0xff] %vm5589, %v5575
  %5595 = vst.msk [vmem:[%s131 + $0x28] sm:$0xff] %vm5589, %v5578
  %5596 = vst.msk [vmem:[%s131 + $0x30] sm:$0xff] %vm5589, %v5583
  %5597 = vst.msk [vmem:[%s131 + $0x38] sm:$0xff] %vm5589, %v5586
  // Predicated region
  $region262: #{encode_process_decode.1} parent=0 // pred_check
    _
  $region263: #{encode_process_decode.1} parent=0 // pred_check_branch
    %5599 = sbr.rel (0) target = $region265
  $region264: #{encode_process_decode.1} parent=0 // pred_region
    _
  $region265: #{encode_process_decode.1} parent=0 // pred_fallthru
    _
  // Predicated region
  $region266: #{encode_process_decode.1} parent=0 // pred_check
    _
  $region267: #{encode_process_decode.1} parent=0 // pred_check_branch
    %5601 = sbr.rel (0) target = $region269
  $region268: #{encode_process_decode.1} parent=0 // pred_region
    _
  $region269: #{encode_process_decode.1} parent=0 // pred_fallthru
    _

</llo_original>
